<compile_context>
chip_gen: v5e
topology: v5e:2x2
jax: 0.10.0
libtpu: 0.0.40
codegen_flags: <defaults>
</compile_context>

<pallas_src>
import functools
import numpy as np
import jax
import jax.numpy as jnp
from jax.experimental import pallas as pl
from jax.experimental.pallas import tpu as pltpu


def _ru(x, m):
    return (x + m - 1) // m * m


# ----------------------------------------------------------------------------
# Pallas kernels
# ----------------------------------------------------------------------------
def _gcn_layer_kernel(a_ref, h_ref, w_ref, b_ref, o_ref, *, relu):
    """One Kipf-GCN layer for a row tile: out = act(A_hat[tile] @ H @ W + b).

    A_hat row tiles stream through the grid (pipelined DMA); H, W, b have a
    constant index_map and stay resident in VMEM.  (A @ H) @ W is used (same
    result as A @ (H W)); with Din <= Dout it is the cheaper association and
    avoids recomputing H @ W per row tile.
    """
    ah = jnp.dot(a_ref[...], h_ref[...], preferred_element_type=jnp.float32)
    out = jnp.dot(ah, w_ref[...], preferred_element_type=jnp.float32) + b_ref[...]
    if relu:
        out = jnp.maximum(out, 0.0)
    o_ref[...] = out


def _att_score_kernel(hf_ref, lf_ref, wT_ref, ao_ref, ac_ref, s_ref):
    """Fused attention: S[m, n] = a_coar.LReLU(W coar_m) + a_orig.LReLU(W orig_n).

    s_o contracts the hidden dims directly with an NT dot_general (MXU-native
    transposed RHS) -- no XLU transpose of the (Rn, H) tile.  Output is a
    lane-dense (Mc, Rn) score matrix.
    """
    wT = wT_ref[...]
    po = jnp.dot(hf_ref[...], wT, preferred_element_type=jnp.float32)   # (Rn, H)
    po = jnp.where(po >= 0.0, po, 0.2 * po)                             # LeakyReLU(0.2)
    pc = jnp.dot(lf_ref[...], wT, preferred_element_type=jnp.float32)   # (Mc, H)
    pc = jnp.where(pc >= 0.0, pc, 0.2 * pc)
    s_c = jnp.sum(pc * ac_ref[...], axis=-1, keepdims=True)             # (Mc, 1)
    s_o = jax.lax.dot_general(ao_ref[...], po, (((1,), (1,)), ((), ())),
                              preferred_element_type=jnp.float32)       # (1, Rn)
    s_ref[...] = s_c + s_o                                              # (Mc, Rn)


def _pool_chain_kernel(adj_ref, feat_ref, assign_ref, pa_ref, ra_ref, pf_ref):
    """Per-graph pooling chain (one grid step = one graph; J collapsed):

       pa = assign^T A assign                 (diag zeroed)
       ra = assign_nor pa assign_nor^T        (diag zeroed)
       pf = assign^T feat

    A single in-kernel transpose of `assign` is reused for pa and pf; the ra
    product contracts the last dims via dot_general (transposed RHS), so no
    separate (Mp, Rn) HBM operand is needed.
    """
    adj = adj_ref[0]                     # (Rn, Rn)
    assign = assign_ref[0]               # (Rn, Mp)
    assign_t = assign.T                  # one XLU transpose, reused twice

    t = jnp.dot(adj, assign, preferred_element_type=jnp.float32)        # (Rn, Mp)
    pa = jnp.dot(assign_t, t, preferred_element_type=jnp.float32)       # (Mp, Mp)
    r = jax.lax.broadcasted_iota(jnp.int32, pa.shape, 0)
    c = jax.lax.broadcasted_iota(jnp.int32, pa.shape, 1)
    pa = jnp.where(r == c, 0.0, pa)
    pa_ref[0] = pa

    colsum = jnp.sum(assign, axis=0, keepdims=True)                     # (1, Mp)
    # reciprocal of the 1-row denominator, then multiply: avoids the (Rn, Mp)
    # VPU divide (zero columns are padding only; ~1 ulp vs. a true divide).
    inv = 1.0 / jnp.where(colsum > 0.0, colsum, 1.0)
    a_nor = assign * inv
    t2 = jnp.dot(a_nor, pa, preferred_element_type=jnp.float32)         # (Rn, Mp)
    ra = jax.lax.dot_general(t2, a_nor, (((1,), (1,)), ((), ())),
                             preferred_element_type=jnp.float32)        # (Rn, Rn)
    r2 = jax.lax.broadcasted_iota(jnp.int32, ra.shape, 0)
    c2 = jax.lax.broadcasted_iota(jnp.int32, ra.shape, 1)
    ra_ref[0] = jnp.where(r2 == c2, 0.0, ra)

    pf_ref[0] = jnp.dot(assign_t, feat_ref[0], preferred_element_type=jnp.float32)


# ----------------------------------------------------------------------------
# Pallas wrappers
# ----------------------------------------------------------------------------
def gcn_layer_pallas(a_pad, h, W, b, *, relu, tm=128):
    Rp = a_pad.shape[0]
    Din = h.shape[1]
    Dout = W.shape[1]
    tm = min(tm, Rp)
    grid = (Rp // tm,)
    # A-tile double buffered + resident h/W/b + output double buffer, 2x slack.
    est = 4 * (2 * tm * Rp + Rp * Din + Din * Dout + 8 * Dout + 2 * tm * Dout)
    vmem_limit = int(min(max(2 * est, 16 << 20), 56 << 20))   # safe on v5e..v7x
    return pl.pallas_call(
        functools.partial(_gcn_layer_kernel, relu=relu),
        grid=grid,
        in_specs=[
            pl.BlockSpec((tm, Rp), lambda i: (i, 0)),      # streamed A_hat row tile
            pl.BlockSpec((Rp, Din), lambda i: (0, 0)),     # resident
            pl.BlockSpec((Din, Dout), lambda i: (0, 0)),   # resident
            pl.BlockSpec((1, Dout), lambda i: (0, 0)),     # resident
        ],
        out_specs=pl.BlockSpec((tm, Dout), lambda i: (i, 0)),
        out_shape=jax.ShapeDtypeStruct((Rp, Dout), jnp.float32),
        compiler_params=pltpu.CompilerParams(
            dimension_semantics=("parallel",),
            vmem_limit_bytes=vmem_limit),
    )(a_pad, h, W, b)


def gcn_apply(adj, feats, layers_pad, *, tm=128):
    """GCN stack (one row-tiled pallas_call per layer).  Returns (Rp, Hp).

    Rows >= n contain bias/ReLU-propagated values (A_hat's zero padded columns
    keep rows < n exact); callers must only read rows [0, n).
    """
    n = adj.shape[0]
    a = adj + jnp.eye(n, dtype=jnp.float32)
    d_inv_sqrt = 1.0 / jnp.sqrt(jnp.sum(a, axis=1))
    a_hat = a * d_inv_sqrt[:, None] * d_inv_sqrt[None, :]
    Rp = _ru(n, 128)
    Din0 = layers_pad[0][0].shape[0]
    a_pad = jnp.zeros((Rp, Rp), jnp.float32).at[:n, :n].set(a_hat)
    h = jnp.zeros((Rp, Din0), jnp.float32).at[:n, :feats.shape[1]].set(feats)
    L = len(layers_pad)
    for l, (W, b) in enumerate(layers_pad):
        h = gcn_layer_pallas(a_pad, h, W, b, relu=(l < L - 1), tm=tm)
    return h


def attention_scores_pallas(h_pad, lmfeat_pad, att_wT, a_orig, a_coar):
    return pl.pallas_call(
        _att_score_kernel,
        out_shape=jax.ShapeDtypeStruct(
            (lmfeat_pad.shape[0], h_pad.shape[0]), jnp.float32),
    )(h_pad, lmfeat_pad, att_wT, a_orig, a_coar)


def pool_chain_pallas(adj_pad, feat_pad, assign_pad):
    """Pooling chain batched over graphs.  grid=(G,), parallel axis."""
    G, Rn, _ = adj_pad.shape
    Hp = feat_pad.shape[2]
    Mp = assign_pad.shape[2]
    est = 4 * 2 * (2 * Rn * Rn + Rn * Hp + Rn * Mp + Mp * Mp + Mp * Hp)
    vmem_limit = int(min(max(2 * est, 16 << 20), 56 << 20))
    # TODO(synk): for graphs with many thousands of nodes the (Rn, Rn) adj
    # block should itself be K-tiled; whole-graph blocks are fine at this scale.
    return pl.pallas_call(
        _pool_chain_kernel,
        grid=(G,),
        in_specs=[
            pl.BlockSpec((1, Rn, Rn), lambda g: (g, 0, 0)),
            pl.BlockSpec((1, Rn, Hp), lambda g: (g, 0, 0)),
            pl.BlockSpec((1, Rn, Mp), lambda g: (g, 0, 0)),
        ],
        out_specs=(
            pl.BlockSpec((1, Mp, Mp), lambda g: (g, 0, 0)),
            pl.BlockSpec((1, Rn, Rn), lambda g: (g, 0, 0)),
            pl.BlockSpec((1, Mp, Hp), lambda g: (g, 0, 0)),
        ),
        out_shape=(
            jax.ShapeDtypeStruct((G, Mp, Mp), jnp.float32),
            jax.ShapeDtypeStruct((G, Rn, Rn), jnp.float32),
            jax.ShapeDtypeStruct((G, Mp, Hp), jnp.float32),
        ),
        compiler_params=pltpu.CompilerParams(
            dimension_semantics=("parallel",),   # real per-graph work per TC on v7x
            vmem_limit_bytes=vmem_limit),
    )(adj_pad, feat_pad, assign_pad)


# ----------------------------------------------------------------------------
# Model pieces (glue in plain JAX inside one jit; hot path through Pallas)
# ----------------------------------------------------------------------------
def batched_lap_eigvals(mats):
    """Normalized-Laplacian eigenvalues (descending), batched over dim 0.

    Zero-degree (padded) rows get dnh = 0, so the padded block of the Laplacian
    is exactly the identity; its unit eigenvalues appear identically in BOTH
    members of a distance pair and cancel in the sorted-L1 spectral distance.
    """
    n = mats.shape[-1]
    deg = jnp.sum(mats, axis=1)                    # symmetric mats: row==col sums
    deg_safe = jnp.where(deg > 0.0, deg, 1.0)
    dnh = jnp.where(deg > 0.0, 1.0 / jnp.sqrt(deg_safe), 0.0)
    lap = (jnp.eye(n, dtype=jnp.float32)[None]
           - dnh[:, :, None] * mats * dnh[:, None, :])
    lap = (lap + jnp.swapaxes(lap, 1, 2)) / 2.0
    # TODO(synk): torch.linalg.eigvalsh has no Pallas equivalent; use XLA's
    # batched eigvalsh (one call over all [adj, ra] pairs per pooling layer).
    u = jnp.linalg.eigvalsh(lap)                   # ascending
    return u[:, ::-1]                              # descending


def sdpool_forward(p, lmfeat_pad, h_pad, n_total, adj_blocks, node_counts, M, H):
    Hp = h_pad.shape[1]
    Mp = _ru(M, 128)

    # ---- attention / assignment, ONE landmark evaluation (J collapsed): all
    # landmark adjacencies share the fully-connected nonzero structure (their
    # uniform(0,1) elements are a.s. nonzero), GCN weights and eye() inputs are
    # shared -> identical features / scores / assignments / spectral distances
    # across j, and torch's strict `<` argmin keeps j = 0.
    # TODO(synk): if a landmark element could be exactly zero the structures
    # would differ per landmark; not representable with this static dense path.
    S_pad = attention_scores_pallas(h_pad, lmfeat_pad,
                                    p["att_wT"], p["a_orig"], p["a_coar"])
    S = S_pad[:M, :n_total]
    # torch: e = alpha(...).reshape(-1, M)  (row-major scramble, kept faithfully)
    e_flat = S.reshape(-1).reshape(n_total, M)
    e = jax.nn.softmax(jax.nn.sigmoid(e_flat), axis=1)    # plain jnp: XLA fuses

    offsets = np.cumsum([0] + list(node_counts)).tolist()
    elig = [gi for gi, n_i in enumerate(node_counts) if n_i >= M]

    G = len(node_counts)
    pooled_adjs = [None] * G
    pooled_feats = [None] * G
    batch_sp = [None] * G

    # small graphs pass through un-pooled (torch branch graph.num_nodes() < M)
    for gi, n_i in enumerate(node_counts):
        if n_i < M:
            adj = adj_blocks[gi]
            pooled_adjs[gi] = adj - jnp.diag(jnp.diag(adj))
            pooled_feats[gi] = h_pad[offsets[gi]:offsets[gi] + n_i, :H]
            batch_sp[gi] = jnp.float32(0.0)

    if elig:
        # ---- batched pooling chain: one pallas_call over all eligible graphs
        nmax = max(node_counts[gi] for gi in elig)
        Rn = _ru(nmax, 128)
        adjs, feats, assigns = [], [], []
        for gi in elig:
            n_i = node_counts[gi]
            off = offsets[gi]
            adjs.append(jnp.zeros((Rn, Rn), jnp.float32)
                        .at[:n_i, :n_i].set(adj_blocks[gi]))
            feats.append(jnp.zeros((Rn, Hp), jnp.float32)
                         .at[:n_i, :].set(h_pad[off:off + n_i, :]))
            assigns.append(jnp.zeros((Rn, Mp), jnp.float32)
                           .at[:n_i, :M].set(e[off:off + n_i, :]))
        adj_b = jnp.stack(adjs)
        feat_b = jnp.stack(feats)
        assign_b = jnp.stack(assigns)

        pa_b, ra_b, pf_b = pool_chain_pallas(adj_b, feat_b, assign_b)

        # ---- spectral distances: ONE batched eigvalsh over all [adj, ra]
        # pairs, cropped to nmax.  Remaining zero-pad rows contribute exact
        # unit eigenvalues to BOTH Laplacians of a pair and cancel in the
        # sorted-L1 distance.
        ncut = nmax
        mats = jnp.concatenate(
            [adj_b[:, :ncut, :ncut], ra_b[:, :ncut, :ncut]], axis=0)
        evals = batched_lap_eigvals(mats)                          # (2Ge, ncut)
        Ge = len(elig)
        sp_all = jnp.sum(jnp.abs(evals[:Ge] - evals[Ge:]), axis=-1)  # (Ge,)

        for k, gi in enumerate(elig):
            pooled_adjs[gi] = pa_b[k, :M, :M]
            pooled_feats[gi] = pf_b[k, :M, :H]
            batch_sp[gi] = sp_all[k]

    return pooled_adjs, pooled_feats, batch_sp


def net_forward(params, node_feats, adj_blocks, *, cfg, node_counts):
    H = cfg["hidden_dim"]
    h = jnp.asarray(node_feats, jnp.float32)
    cur_adjs = [jnp.asarray(a, jnp.float32) for a in adj_blocks]
    cur_counts = list(node_counts)
    sp_dist_list = []
    pooled_feats = None
    for layer in range(cfg["num_pool_layer"]):
        # dgl.batch: block-diagonal batched adjacency (binary edge existence)
        n_tot = sum(cur_counts)
        adj_batch = jnp.zeros((n_tot, n_tot), jnp.float32)
        off = 0
        for gi, n_i in enumerate(cur_counts):
            adj_batch = adj_batch.at[off:off + n_i, off:off + n_i].set(cur_adjs[gi])
            off += n_i
        h_pad = gcn_apply(adj_batch, h, params["gcn"][layer])        # (Rp, Hp)
        pooled_adjs, pooled_feats, batch_sp = sdpool_forward(
            params["sdpool"][layer], params["lmfeat"][layer], h_pad, n_tot,
            cur_adjs, cur_counts, cfg["size_landmark"][layer], H)
        sp_dist_list.append(sum(batch_sp) / len(batch_sp))
        # state for a possible next pooling layer (dgl g.adj() is binary)
        h = jnp.concatenate(pooled_feats, axis=0)
        cur_adjs = [(pa > 0).astype(jnp.float32) for pa in pooled_adjs]
        cur_counts = [f.shape[0] for f in pooled_feats]
    # readout_nodes (sum) + classifier: single-vreg problems -> plain jnp so
    # XLA fuses them with the surrounding glue (no dedicated pallas_call).
    readout = jnp.stack([jnp.sum(f, axis=0) for f in pooled_feats])  # (G, H)
    logits = readout @ params["cls_W"].T + params["cls_b"]
    return logits, sum(sp_dist_list) / len(sp_dist_list)


# ----------------------------------------------------------------------------
# Deterministic parameter / input construction (+ one-time prep outside jit)
# ----------------------------------------------------------------------------
def init_params(key, cfg):
    def gcn_layers(key, in_dim, hid, out_dim, n_layers):
        dims = [in_dim] + [hid] * (n_layers - 1) + [out_dim]
        layers = []
        for l in range(n_layers):
            key, k1 = jax.random.split(key)
            W = 0.1 * jax.random.normal(k1, (dims[l], dims[l + 1]), jnp.float32)
            b = jnp.zeros((dims[l + 1],), jnp.float32)
            layers.append((W, b))
        return key, layers

    H = cfg["hidden_dim"]
    params = {"gcn": [], "sdpool": []}
    for layer in range(cfg["num_pool_layer"]):
        in_dim = cfg["input_dim"] if layer == 0 else H
        key, glayers = gcn_layers(key, in_dim, H, H, cfg["num_gcn_layers"])
        params["gcn"].append(glayers)

        M = cfg["size_landmark"][layer]
        key, lm_layers = gcn_layers(key, M, H, H, cfg["num_landmark_gcn_layers"])
        key, k1, k2, k3 = jax.random.split(key, 4)
        # landmark adjacency elements: only their (always dense) nonzero
        # structure is consumed by the forward pass.
        adj_elems = [jax.random.uniform(k, (M * (M - 1) // 2,), jnp.float32)
                     for k in jax.random.split(k1, cfg["num_landmark"][layer])]
        params["sdpool"].append({
            "adj_elems": adj_elems,
            "landmark_gcn": lm_layers,
            "att_W": 0.1 * jax.random.normal(k2, (H, H), jnp.float32),          # Linear(H,H,bias=False)
            "att_alpha": 0.1 * jax.random.normal(k3, (1, 2 * H), jnp.float32),  # Linear(2H,1,bias=False)
        })
    key, k1 = jax.random.split(key)
    params["cls_W"] = 0.1 * jax.random.normal(k1, (cfg["out_dim"], H), jnp.float32)
    params["cls_b"] = jnp.zeros((cfg["out_dim"],), jnp.float32)
    return params


def _gcn_reference(adj, feats, layers):
    """Plain-jnp Kipf GCN (used only for the one-time landmark precompute)."""
    n = adj.shape[0]
    a = adj + jnp.eye(n, dtype=jnp.float32)
    d = 1.0 / jnp.sqrt(jnp.sum(a, axis=1))
    a_hat = a * d[:, None] * d[None, :]
    h = feats
    for l, (W, b) in enumerate(layers):
        h = a_hat @ (h @ W) + b
        if l < len(layers) - 1:
            h = jnp.maximum(h, 0.0)
    return h


def prepare_params(params, cfg):
    """One-time prep OUTSIDE jit: pad feature (K) dims only to the f32 sublane
    minimum of 8 (not 128), and hoist the landmark GCN out of the hot path —
    it depends only on params, so its features are precomputed here.
    TODO(synk): for training, the landmark GCN must move back inside the step
    (or be fused into the attention kernel) so its params receive gradients.
    """
    H = cfg["hidden_dim"]

    def pad_mat(W):
        K, N = W.shape
        return jnp.zeros((_ru(K, 8), _ru(N, 8)), jnp.float32).at[:K, :N].set(W)

    def pad_row(b):
        v = b.reshape(-1)
        N = v.shape[0]
        return jnp.zeros((1, _ru(N, 8)), jnp.float32).at[0, :N].set(v)

    out = {"gcn": [], "sdpool": [], "lmfeat": [],
           "cls_W": params["cls_W"], "cls_b": params["cls_b"]}
    for layer in range(cfg["num_pool_layer"]):
        out["gcn"].append([(pad_mat(W), pad_row(b))
                           for (W, b) in params["gcn"][layer]])
        sp = params["sdpool"][layer]
        M = cfg["size_landmark"][layer]
        alpha = sp["att_alpha"][0]
        out["sdpool"].append({
            "att_wT": pad_mat(sp["att_W"].T),   # Linear: y = x @ W.T
            "a_coar": pad_row(alpha[:H]),       # alpha . [coar || orig]
            "a_orig": pad_row(alpha[H:]),
        })
        # landmark GCN hoisted: constant fully-connected structure + eye feats
        lm_adj = jnp.ones((M, M), jnp.float32) - jnp.eye(M, dtype=jnp.float32)
        lmfeat = _gcn_reference(lm_adj, jnp.eye(M, dtype=jnp.float32),
                                sp["landmark_gcn"])                  # (M, H)
        Mp, Hp = _ru(M, 8), _ru(H, 8)
        out["lmfeat"].append(
            jnp.zeros((Mp, Hp), jnp.float32).at[:M, :H].set(lmfeat))
    return out


def make_adj(key, n):
    up = jnp.triu(jax.random.bernoulli(key, 0.2, (n, n)).astype(jnp.float32), k=1)
    a = up + up.T
    idx = jnp.arange(n)
    ring = jnp.zeros((n, n), jnp.float32).at[idx, (idx + 1) % n].set(1.0)
    ring = ring + ring.T
    return jnp.clip(a + ring, 0.0, 1.0)   # symmetric, zero diag, every degree >= 2


if __name__ == "__main__":
    cfg = {
        "input_dim": 16,
        "hidden_dim": 32,
        "out_dim": 4,
        "num_gcn_layers": 2,
        "num_landmark_gcn_layers": 2,
        "num_pool_layer": 1,
        "size_landmark": [8],   # size_coarsen_graphs_list
        "num_landmark": [2],    # num_coarsen_graphs_list
    }
    node_counts = (12, 10)      # two graphs in the batch, both >= size_landmark

    key = jax.random.PRNGKey(0)
    key, kp, kf, ka0, ka1 = jax.random.split(key, 5)
    params = init_params(kp, cfg)
    pparams = prepare_params(params, cfg)   # pad + landmark precompute, outside jit
    node_feats = jax.random.normal(kf, (sum(node_counts), cfg["input_dim"]), jnp.float32)
    adj_blocks = (make_adj(ka0, node_counts[0]), make_adj(ka1, node_counts[1]))

    fwd = jax.jit(functools.partial(net_forward, cfg=cfg, node_counts=node_counts))
    logits, mean_sp_dist = fwd(pparams, node_feats, adj_blocks)
    jax.block_until_ready((logits, mean_sp_dist))
    assert logits.shape == (len(node_counts), cfg["out_dim"])
    assert not bool(jnp.any(jnp.isnan(logits)))
    assert not bool(jnp.isnan(mean_sp_dist))
    print("KERNEL_OK")
</pallas_src>

<mosaic_0001>
module attributes {stable_mosaic.version = 11 : i64} {
  func.func @_gcn_layer_kernel(%arg0: i32, %arg1: memref<128x128xf32, #tpu.memory_space<vmem>>, %arg2: memref<128x16xf32, #tpu.memory_space<vmem>>, %arg3: memref<16x32xf32, #tpu.memory_space<vmem>>, %arg4: memref<1x32xf32, #tpu.memory_space<vmem>>, %arg5: memref<128x32xf32, #tpu.memory_space<vmem>>) attributes {dimension_semantics = [#tpu.dimension_semantics<parallel>], iteration_bounds = array<i64: 1>, scalar_prefetch = 0 : i64, scratch_operands = 0 : i64, tpu.core_type = #tpu.core_type<tc>, window_params = [{transform_indices = @transform_0, window_bounds = array<i64: 128, 128>}, {pipeline_mode = #tpu.pipeline_mode<synchronous>, transform_indices = @transform_1, window_bounds = array<i64: 128, 16>}, {pipeline_mode = #tpu.pipeline_mode<synchronous>, transform_indices = @transform_2, window_bounds = array<i64: 16, 32>}, {pipeline_mode = #tpu.pipeline_mode<synchronous>, transform_indices = @transform_3, window_bounds = array<i64: 1, 32>}, {transform_indices = @transform_4, window_bounds = array<i64: 128, 32>}]} {
    %c0 = arith.constant 0 : index
    %c0_0 = arith.constant 0 : index
    %0 = vector.load %arg1[%c0, %c0_0] : memref<128x128xf32, #tpu.memory_space<vmem>>, vector<128x128xf32>
    %c0_1 = arith.constant 0 : index
    %c0_2 = arith.constant 0 : index
    %1 = vector.load %arg2[%c0_1, %c0_2] : memref<128x16xf32, #tpu.memory_space<vmem>>, vector<128x16xf32>
    %cst = arith.constant dense<0.000000e+00> : vector<128x16xf32>
    %2 = tpu.matmul %0, %1, %cst {dimension_numbers = #tpu.dot_dimension_numbers<[1], [0], [0], [1], [0, 0, 1, 1], [], []>} : vector<128x128xf32>, vector<128x16xf32>, vector<128x16xf32> -> vector<128x16xf32>
    %c0_3 = arith.constant 0 : index
    %c0_4 = arith.constant 0 : index
    %3 = vector.load %arg3[%c0_3, %c0_4] : memref<16x32xf32, #tpu.memory_space<vmem>>, vector<16x32xf32>
    %cst_5 = arith.constant dense<0.000000e+00> : vector<128x32xf32>
    %4 = tpu.matmul %2, %3, %cst_5 {dimension_numbers = #tpu.dot_dimension_numbers<[1], [0], [0], [1], [0, 0, 1, 1], [], []>} : vector<128x16xf32>, vector<16x32xf32>, vector<128x32xf32> -> vector<128x32xf32>
    %c0_6 = arith.constant 0 : index
    %c0_7 = arith.constant 0 : index
    %5 = vector.load %arg4[%c0_6, %c0_7] : memref<1x32xf32, #tpu.memory_space<vmem>>, vector<1x32xf32>
    %6 = vector.broadcast %5 : vector<1x32xf32> to vector<128x32xf32>
    %7 = arith.addf %4, %6 : vector<128x32xf32>
    %cst_8 = arith.constant 0.000000e+00 : f32
    %8 = vector.broadcast %cst_8 : f32 to vector<128x32xf32>
    %9 = arith.maximumf %7, %8 : vector<128x32xf32>
    %c0_9 = arith.constant 0 : index
    %c0_10 = arith.constant 0 : index
    %10 = vector.load %arg5[%c0_9, %c0_10] : memref<128x32xf32, #tpu.memory_space<vmem>>, vector<128x32xf32>
    tpu.vector_store %arg5[%c0_9, %c0_10], %9 {strides = array<i32>} : memref<128x32xf32, #tpu.memory_space<vmem>>, vector<128x32xf32>,
    return
  }
  func.func @transform_0(%arg0: i32) -> (i32, i32) {
    %c0_i32 = arith.constant 0 : i32
    %c0_i32_0 = arith.constant 0 : i32
    return %arg0, %c0_i32 : i32, i32
  }
  func.func @transform_1(%arg0: i32) -> (i32, i32) {
    %c0_i32 = arith.constant 0 : i32
    %c0_i32_0 = arith.constant 0 : i32
    %c0_i32_1 = arith.constant 0 : i32
    return %c0_i32, %c0_i32_0 : i32, i32
  }
  func.func @transform_2(%arg0: i32) -> (i32, i32) {
    %c0_i32 = arith.constant 0 : i32
    %c0_i32_0 = arith.constant 0 : i32
    %c0_i32_1 = arith.constant 0 : i32
    return %c0_i32, %c0_i32_0 : i32, i32
  }
  func.func @transform_3(%arg0: i32) -> (i32, i32) {
    %c0_i32 = arith.constant 0 : i32
    %c0_i32_0 = arith.constant 0 : i32
    %c0_i32_1 = arith.constant 0 : i32
    return %c0_i32, %c0_i32_0 : i32, i32
  }
  func.func @transform_4(%arg0: i32) -> (i32, i32) {
    %c0_i32 = arith.constant 0 : i32
    %c0_i32_0 = arith.constant 0 : i32
    return %arg0, %c0_i32 : i32, i32
  }
}

module attributes {stable_mosaic.version = 11 : i64} {
  func.func @_gcn_layer_kernel(%arg0: i32, %arg1: memref<128x128xf32, #tpu.memory_space<vmem>>, %arg2: memref<128x32xf32, #tpu.memory_space<vmem>>, %arg3: memref<32x32xf32, #tpu.memory_space<vmem>>, %arg4: memref<1x32xf32, #tpu.memory_space<vmem>>, %arg5: memref<128x32xf32, #tpu.memory_space<vmem>>) attributes {dimension_semantics = [#tpu.dimension_semantics<parallel>], iteration_bounds = array<i64: 1>, scalar_prefetch = 0 : i64, scratch_operands = 0 : i64, tpu.core_type = #tpu.core_type<tc>, window_params = [{transform_indices = @transform_0, window_bounds = array<i64: 128, 128>}, {pipeline_mode = #tpu.pipeline_mode<synchronous>, transform_indices = @transform_1, window_bounds = array<i64: 128, 32>}, {pipeline_mode = #tpu.pipeline_mode<synchronous>, transform_indices = @transform_2, window_bounds = array<i64: 32, 32>}, {pipeline_mode = #tpu.pipeline_mode<synchronous>, transform_indices = @transform_3, window_bounds = array<i64: 1, 32>}, {transform_indices = @transform_4, window_bounds = array<i64: 128, 32>}]} {
    %c0 = arith.constant 0 : index
    %c0_0 = arith.constant 0 : index
    %0 = vector.load %arg1[%c0, %c0_0] : memref<128x128xf32, #tpu.memory_space<vmem>>, vector<128x128xf32>
    %c0_1 = arith.constant 0 : index
    %c0_2 = arith.constant 0 : index
    %1 = vector.load %arg2[%c0_1, %c0_2] : memref<128x32xf32, #tpu.memory_space<vmem>>, vector<128x32xf32>
    %cst = arith.constant dense<0.000000e+00> : vector<128x32xf32>
    %2 = tpu.matmul %0, %1, %cst {dimension_numbers = #tpu.dot_dimension_numbers<[1], [0], [0], [1], [0, 0, 1, 1], [], []>} : vector<128x128xf32>, vector<128x32xf32>, vector<128x32xf32> -> vector<128x32xf32>
    %c0_3 = arith.constant 0 : index
    %c0_4 = arith.constant 0 : index
    %3 = vector.load %arg3[%c0_3, %c0_4] : memref<32x32xf32, #tpu.memory_space<vmem>>, vector<32x32xf32>
    %cst_5 = arith.constant dense<0.000000e+00> : vector<128x32xf32>
    %4 = tpu.matmul %2, %3, %cst_5 {dimension_numbers = #tpu.dot_dimension_numbers<[1], [0], [0], [1], [0, 0, 1, 1], [], []>} : vector<128x32xf32>, vector<32x32xf32>, vector<128x32xf32> -> vector<128x32xf32>
    %c0_6 = arith.constant 0 : index
    %c0_7 = arith.constant 0 : index
    %5 = vector.load %arg4[%c0_6, %c0_7] : memref<1x32xf32, #tpu.memory_space<vmem>>, vector<1x32xf32>
    %6 = vector.broadcast %5 : vector<1x32xf32> to vector<128x32xf32>
    %7 = arith.addf %4, %6 : vector<128x32xf32>
    %c0_8 = arith.constant 0 : index
    %c0_9 = arith.constant 0 : index
    %8 = vector.load %arg5[%c0_8, %c0_9] : memref<128x32xf32, #tpu.memory_space<vmem>>, vector<128x32xf32>
    tpu.vector_store %arg5[%c0_8, %c0_9], %7 {strides = array<i32>} : memref<128x32xf32, #tpu.memory_space<vmem>>, vector<128x32xf32>,
    return
  }
  func.func @transform_0(%arg0: i32) -> (i32, i32) {
    %c0_i32 = arith.constant 0 : i32
    %c0_i32_0 = arith.constant 0 : i32
    return %arg0, %c0_i32 : i32, i32
  }
  func.func @transform_1(%arg0: i32) -> (i32, i32) {
    %c0_i32 = arith.constant 0 : i32
    %c0_i32_0 = arith.constant 0 : i32
    %c0_i32_1 = arith.constant 0 : i32
    return %c0_i32, %c0_i32_0 : i32, i32
  }
  func.func @transform_2(%arg0: i32) -> (i32, i32) {
    %c0_i32 = arith.constant 0 : i32
    %c0_i32_0 = arith.constant 0 : i32
    %c0_i32_1 = arith.constant 0 : i32
    return %c0_i32, %c0_i32_0 : i32, i32
  }
  func.func @transform_3(%arg0: i32) -> (i32, i32) {
    %c0_i32 = arith.constant 0 : i32
    %c0_i32_0 = arith.constant 0 : i32
    %c0_i32_1 = arith.constant 0 : i32
    return %c0_i32, %c0_i32_0 : i32, i32
  }
  func.func @transform_4(%arg0: i32) -> (i32, i32) {
    %c0_i32 = arith.constant 0 : i32
    %c0_i32_0 = arith.constant 0 : i32
    return %arg0, %c0_i32 : i32, i32
  }
}

module attributes {stable_mosaic.version = 11 : i64} {
  func.func @_att_score_kernel(%arg0: memref<128x32xf32, #tpu.memory_space<vmem>>, %arg1: memref<8x32xf32, #tpu.memory_space<vmem>>, %arg2: memref<32x32xf32, #tpu.memory_space<vmem>>, %arg3: memref<1x32xf32, #tpu.memory_space<vmem>>, %arg4: memref<1x32xf32, #tpu.memory_space<vmem>>, %arg5: memref<8x128xf32, #tpu.memory_space<vmem>>) attributes {dimension_semantics = [], scalar_prefetch = 0 : i64, scratch_operands = 0 : i64, tpu.core_type = #tpu.core_type<tc>} {
    %c0 = arith.constant 0 : index
    %c0_0 = arith.constant 0 : index
    %0 = vector.load %arg2[%c0, %c0_0] : memref<32x32xf32, #tpu.memory_space<vmem>>, vector<32x32xf32>
    %c0_1 = arith.constant 0 : index
    %c0_2 = arith.constant 0 : index
    %1 = vector.load %arg0[%c0_1, %c0_2] : memref<128x32xf32, #tpu.memory_space<vmem>>, vector<128x32xf32>
    %cst = arith.constant dense<0.000000e+00> : vector<128x32xf32>
    %2 = tpu.matmul %1, %0, %cst {dimension_numbers = #tpu.dot_dimension_numbers<[1], [0], [0], [1], [0, 0, 1, 1], [], []>} : vector<128x32xf32>, vector<32x32xf32>, vector<128x32xf32> -> vector<128x32xf32>
    %cst_3 = arith.constant 0.000000e+00 : f32
    %3 = vector.broadcast %cst_3 : f32 to vector<128x32xf32>
    %4 = arith.cmpf oge, %2, %3 : vector<128x32xf32>
    %cst_4 = arith.constant 2.000000e-01 : f32
    %5 = vector.broadcast %cst_4 : f32 to vector<128x32xf32>
    %6 = arith.mulf %5, %2 : vector<128x32xf32>
    %7 = arith.select %4, %2, %6 : vector<128x32xi1>, vector<128x32xf32>
    %c0_5 = arith.constant 0 : index
    %c0_6 = arith.constant 0 : index
    %8 = vector.load %arg1[%c0_5, %c0_6] : memref<8x32xf32, #tpu.memory_space<vmem>>, vector<8x32xf32>
    %cst_7 = arith.constant dense<0.000000e+00> : vector<8x32xf32>
    %9 = tpu.matmul %8, %0, %cst_7 {dimension_numbers = #tpu.dot_dimension_numbers<[1], [0], [0], [1], [0, 0, 1, 1], [], []>} : vector<8x32xf32>, vector<32x32xf32>, vector<8x32xf32> -> vector<8x32xf32>
    %cst_8 = arith.constant 0.000000e+00 : f32
    %10 = vector.broadcast %cst_8 : f32 to vector<8x32xf32>
    %11 = arith.cmpf oge, %9, %10 : vector<8x32xf32>
    %cst_9 = arith.constant 2.000000e-01 : f32
    %12 = vector.broadcast %cst_9 : f32 to vector<8x32xf32>
    %13 = arith.mulf %12, %9 : vector<8x32xf32>
    %14 = arith.select %11, %9, %13 : vector<8x32xi1>, vector<8x32xf32>
    %c0_10 = arith.constant 0 : index
    %c0_11 = arith.constant 0 : index
    %15 = vector.load %arg4[%c0_10, %c0_11] : memref<1x32xf32, #tpu.memory_space<vmem>>, vector<1x32xf32>
    %16 = vector.broadcast %15 : vector<1x32xf32> to vector<8x32xf32>
    %17 = arith.mulf %14, %16 : vector<8x32xf32>
    %cst_12 = arith.constant dense<0.000000e+00> : vector<8xf32>
    %18 = vector.multi_reduction <add>, %17, %cst_12 [1] : vector<8x32xf32> to vector<8xf32>
    %19 = vector.shape_cast %18 : vector<8xf32> to vector<8x1xf32>
    %c0_13 = arith.constant 0 : index
    %c0_14 = arith.constant 0 : index
    %20 = vector.load %arg3[%c0_13, %c0_14] : memref<1x32xf32, #tpu.memory_space<vmem>>, vector<1x32xf32>
    %cst_15 = arith.constant dense<0.000000e+00> : vector<1x128xf32>
    %21 = tpu.matmul %20, %7, %cst_15 {dimension_numbers = #tpu.dot_dimension_numbers<[1], [1], [0], [0], [0, 0, 1, 0], [], []>} : vector<1x32xf32>, vector<128x32xf32>, vector<1x128xf32> -> vector<1x128xf32>
    %22 = vector.broadcast %19 : vector<8x1xf32> to vector<8x128xf32>
    %23 = vector.broadcast %21 : vector<1x128xf32> to vector<8x128xf32>
    %24 = arith.addf %22, %23 : vector<8x128xf32>
    %c0_16 = arith.constant 0 : index
    %c0_17 = arith.constant 0 : index
    %25 = vector.load %arg5[%c0_16, %c0_17] : memref<8x128xf32, #tpu.memory_space<vmem>>, vector<8x128xf32>
    tpu.vector_store %arg5[%c0_16, %c0_17], %24 {strides = array<i32>} : memref<8x128xf32, #tpu.memory_space<vmem>>, vector<8x128xf32>,
    return
  }
}

module attributes {stable_mosaic.version = 11 : i64} {
  func.func @_pool_chain_kernel(%arg0: i32, %arg1: memref<1x128x128xf32, #tpu.memory_space<vmem>>, %arg2: memref<1x128x32xf32, #tpu.memory_space<vmem>>, %arg3: memref<1x128x128xf32, #tpu.memory_space<vmem>>, %arg4: memref<1x128x128xf32, #tpu.memory_space<vmem>>, %arg5: memref<1x128x128xf32, #tpu.memory_space<vmem>>, %arg6: memref<1x128x32xf32, #tpu.memory_space<vmem>>) attributes {dimension_semantics = [#tpu.dimension_semantics<parallel>], iteration_bounds = array<i64: 2>, scalar_prefetch = 0 : i64, scratch_operands = 0 : i64, tpu.core_type = #tpu.core_type<tc>, window_params = [{transform_indices = @transform_0, window_bounds = array<i64: 1, 128, 128>}, {transform_indices = @transform_1, window_bounds = array<i64: 1, 128, 32>}, {transform_indices = @transform_2, window_bounds = array<i64: 1, 128, 128>}, {transform_indices = @transform_3, window_bounds = array<i64: 1, 128, 128>}, {transform_indices = @transform_4, window_bounds = array<i64: 1, 128, 128>}, {transform_indices = @transform_5, window_bounds = array<i64: 1, 128, 32>}]} {
    %c0 = arith.constant 0 : index
    %c0_0 = arith.constant 0 : index
    %c0_1 = arith.constant 0 : index
    %0 = vector.load %arg1[%c0, %c0_0, %c0_1] : memref<1x128x128xf32, #tpu.memory_space<vmem>>, vector<1x128x128xf32>
    %1 = vector.shape_cast %0 : vector<1x128x128xf32> to vector<128x128xf32>
    %c0_2 = arith.constant 0 : index
    %c0_3 = arith.constant 0 : index
    %c0_4 = arith.constant 0 : index
    %2 = vector.load %arg3[%c0_2, %c0_3, %c0_4] : memref<1x128x128xf32, #tpu.memory_space<vmem>>, vector<1x128x128xf32>
    %3 = vector.shape_cast %2 : vector<1x128x128xf32> to vector<128x128xf32>
    %4 = tpu.transpose %3, [1, 0] : vector<128x128xf32> -> vector<128x128xf32>
    %cst = arith.constant dense<0.000000e+00> : vector<128x128xf32>
    %5 = tpu.matmul %1, %3, %cst {dimension_numbers = #tpu.dot_dimension_numbers<[1], [0], [0], [1], [0, 0, 1, 1], [], []>} : vector<128x128xf32>, vector<128x128xf32>, vector<128x128xf32> -> vector<128x128xf32>
    %cst_5 = arith.constant dense<0.000000e+00> : vector<128x128xf32>
    %6 = tpu.matmul %4, %5, %cst_5 {dimension_numbers = #tpu.dot_dimension_numbers<[1], [0], [0], [1], [0, 0, 1, 1], [], []>} : vector<128x128xf32>, vector<128x128xf32>, vector<128x128xf32> -> vector<128x128xf32>
    %7 = tpu.iota {dimensions = array<i32: 0>} : vector<128x128xi32>
    %8 = tpu.iota {dimensions = array<i32: 1>} : vector<128x128xi32>
    %9 = arith.cmpi eq, %7, %8 : vector<128x128xi32>
    %cst_6 = arith.constant 0.000000e+00 : f32
    %10 = vector.broadcast %cst_6 : f32 to vector<128x128xf32>
    %11 = arith.select %9, %10, %6 : vector<128x128xi1>, vector<128x128xf32>
    %c0_7 = arith.constant 0 : index
    %c0_8 = arith.constant 0 : index
    %c0_9 = arith.constant 0 : index
    %12 = vector.load %arg4[%c0_7, %c0_8, %c0_9] : memref<1x128x128xf32, #tpu.memory_space<vmem>>, vector<1x128x128xf32>
    %13 = vector.shape_cast %12 : vector<1x128x128xf32> to vector<128x128xf32>
    %14 = vector.shape_cast %11 : vector<128x128xf32> to vector<1x128x128xf32>
    tpu.vector_store %arg4[%c0_7, %c0_8, %c0_9], %14 {strides = array<i32>} : memref<1x128x128xf32, #tpu.memory_space<vmem>>, vector<1x128x128xf32>,
    %cst_10 = arith.constant dense<0.000000e+00> : vector<128xf32>
    %15 = vector.multi_reduction <add>, %3, %cst_10 [0] : vector<128x128xf32> to vector<128xf32>
    %16 = vector.shape_cast %15 : vector<128xf32> to vector<1x128xf32>
    %cst_11 = arith.constant 0.000000e+00 : f32
    %17 = vector.broadcast %cst_11 : f32 to vector<1x128xf32>
    %18 = arith.cmpf ogt, %16, %17 : vector<1x128xf32>
    %cst_12 = arith.constant 1.000000e+00 : f32
    %19 = vector.broadcast %cst_12 : f32 to vector<1x128xf32>
    %20 = arith.select %18, %16, %19 : vector<1x128xi1>, vector<1x128xf32>
    %cst_13 = arith.constant 1.000000e+00 : f32
    %21 = vector.broadcast %cst_13 : f32 to vector<1x128xf32>
    %22 = arith.divf %21, %20 : vector<1x128xf32>
    %23 = vector.broadcast %22 : vector<1x128xf32> to vector<128x128xf32>
    %24 = arith.mulf %3, %23 : vector<128x128xf32>
    %cst_14 = arith.constant dense<0.000000e+00> : vector<128x128xf32>
    %25 = tpu.matmul %24, %11, %cst_14 {dimension_numbers = #tpu.dot_dimension_numbers<[1], [0], [0], [1], [0, 0, 1, 1], [], []>} : vector<128x128xf32>, vector<128x128xf32>, vector<128x128xf32> -> vector<128x128xf32>
    %cst_15 = arith.constant dense<0.000000e+00> : vector<128x128xf32>
    %26 = tpu.matmul %25, %24, %cst_15 {dimension_numbers = #tpu.dot_dimension_numbers<[1], [1], [0], [0], [0, 0, 1, 0], [], []>} : vector<128x128xf32>, vector<128x128xf32>, vector<128x128xf32> -> vector<128x128xf32>
    %27 = tpu.iota {dimensions = array<i32: 0>} : vector<128x128xi32>
    %28 = tpu.iota {dimensions = array<i32: 1>} : vector<128x128xi32>
    %29 = arith.cmpi eq, %27, %28 : vector<128x128xi32>
    %cst_16 = arith.constant 0.000000e+00 : f32
    %30 = vector.broadcast %cst_16 : f32 to vector<128x128xf32>
    %31 = arith.select %29, %30, %26 : vector<128x128xi1>, vector<128x128xf32>
    %c0_17 = arith.constant 0 : index
    %c0_18 = arith.constant 0 : index
    %c0_19 = arith.constant 0 : index
    %32 = vector.load %arg5[%c0_17, %c0_18, %c0_19] : memref<1x128x128xf32, #tpu.memory_space<vmem>>, vector<1x128x128xf32>
    %33 = vector.shape_cast %32 : vector<1x128x128xf32> to vector<128x128xf32>
    %34 = vector.shape_cast %31 : vector<128x128xf32> to vector<1x128x128xf32>
    tpu.vector_store %arg5[%c0_17, %c0_18, %c0_19], %34 {strides = array<i32>} : memref<1x128x128xf32, #tpu.memory_space<vmem>>, vector<1x128x128xf32>,
    %c0_20 = arith.constant 0 : index
    %c0_21 = arith.constant 0 : index
    %c0_22 = arith.constant 0 : index
    %35 = vector.load %arg2[%c0_20, %c0_21, %c0_22] : memref<1x128x32xf32, #tpu.memory_space<vmem>>, vector<1x128x32xf32>
    %36 = vector.shape_cast %35 : vector<1x128x32xf32> to vector<128x32xf32>
    %cst_23 = arith.constant dense<0.000000e+00> : vector<128x32xf32>
    %37 = tpu.matmul %4, %36, %cst_23 {dimension_numbers = #tpu.dot_dimension_numbers<[1], [0], [0], [1], [0, 0, 1, 1], [], []>} : vector<128x128xf32>, vector<128x32xf32>, vector<128x32xf32> -> vector<128x32xf32>
    %c0_24 = arith.constant 0 : index
    %c0_25 = arith.constant 0 : index
    %c0_26 = arith.constant 0 : index
    %38 = vector.load %arg6[%c0_24, %c0_25, %c0_26] : memref<1x128x32xf32, #tpu.memory_space<vmem>>, vector<1x128x32xf32>
    %39 = vector.shape_cast %38 : vector<1x128x32xf32> to vector<128x32xf32>
    %40 = vector.shape_cast %37 : vector<128x32xf32> to vector<1x128x32xf32>
    tpu.vector_store %arg6[%c0_24, %c0_25, %c0_26], %40 {strides = array<i32>} : memref<1x128x32xf32, #tpu.memory_space<vmem>>, vector<1x128x32xf32>,
    return
  }
  func.func @transform_0(%arg0: i32) -> (i32, i32, i32) {
    %c0_i32 = arith.constant 0 : i32
    %c0_i32_0 = arith.constant 0 : i32
    %c0_i32_1 = arith.constant 0 : i32
    return %arg0, %c0_i32, %c0_i32_0 : i32, i32, i32
  }
  func.func @transform_1(%arg0: i32) -> (i32, i32, i32) {
    %c0_i32 = arith.constant 0 : i32
    %c0_i32_0 = arith.constant 0 : i32
    %c0_i32_1 = arith.constant 0 : i32
    return %arg0, %c0_i32, %c0_i32_0 : i32, i32, i32
  }
  func.func @transform_2(%arg0: i32) -> (i32, i32, i32) {
    %c0_i32 = arith.constant 0 : i32
    %c0_i32_0 = arith.constant 0 : i32
    %c0_i32_1 = arith.constant 0 : i32
    return %arg0, %c0_i32, %c0_i32_0 : i32, i32, i32
  }
  func.func @transform_3(%arg0: i32) -> (i32, i32, i32) {
    %c0_i32 = arith.constant 0 : i32
    %c0_i32_0 = arith.constant 0 : i32
    %c0_i32_1 = arith.constant 0 : i32
    return %arg0, %c0_i32, %c0_i32_0 : i32, i32, i32
  }
  func.func @transform_4(%arg0: i32) -> (i32, i32, i32) {
    %c0_i32 = arith.constant 0 : i32
    %c0_i32_0 = arith.constant 0 : i32
    %c0_i32_1 = arith.constant 0 : i32
    return %arg0, %c0_i32, %c0_i32_0 : i32, i32, i32
  }
  func.func @transform_5(%arg0: i32) -> (i32, i32, i32) {
    %c0_i32 = arith.constant 0 : i32
    %c0_i32_0 = arith.constant 0 : i32
    %c0_i32_1 = arith.constant 0 : i32
    return %arg0, %c0_i32, %c0_i32_0 : i32, i32, i32
  }
}

</mosaic_0001>

<llo_original>
// kernel: net_forward.6
$region0: #{net_forward.6}
  #allocation0 [shape = 'u32[]', space=smem, size = 0x4, offset = 0x4, fixed_abs, tag = 'smem constant byte address 0x4 - core index']
  #allocation1 [shape = 'u32[72,128]{1,0:T(1,128)}', space=vmem, size = 0x9000, scoped, tag = 'internal scratch']
  %s0 = inlined_call_operand.vmem [shape: f32[128,32], index: 0, kind: input, shape index: {}]
  %s1 = inlined_call_operand.vmem [shape: f32[8,32], index: 1, kind: input, shape index: {}]
  %s2 = inlined_call_operand.vmem [shape: f32[32,32], index: 2, kind: input, shape index: {}]
  %s3 = inlined_call_operand.vmem [shape: f32[1,32], index: 3, kind: input, shape index: {}]
  %s4 = inlined_call_operand.vmem [shape: f32[1,32], index: 4, kind: input, shape index: {}]
  %s5 = inlined_call_operand.vmem [shape: f32[8,128], index: 5, kind: output, shape index: {}]
  %s6 = sld [smem:[#allocation0]]
  $region30: #{net_forward.6} parent=0
    _
  %s8 = ssub.s32 1, %s6
  %s9 = scalar_select 0, %s8, %s6
  // Predicated region
  $region2: #{net_forward.6} parent=0 // pred_check
    _
  $region3: #{net_forward.6} parent=0 // pred_check_branch
    %11 = sbr.rel (0) target = $region5
  $region4: #{net_forward.6} parent=0 // pred_region
    _
  $region5: #{net_forward.6} parent=0 // pred_fallthru
    _
  // Predicated region
  $region6: #{net_forward.6} parent=0 // pred_check
    _
  $region7: #{net_forward.6} parent=0 // pred_check_branch
    %13 = sbr.rel (0) target = $region9
  $region8: #{net_forward.6} parent=0 // pred_region
    _
  $region9: #{net_forward.6} parent=0 // pred_fallthru
    _
  // Predicated region
  $region10: #{net_forward.6} parent=0 // pred_check
    _
  $region11: #{net_forward.6} parent=0 // pred_check_branch
    %15 = sbr.rel (0) target = $region13
  $region12: #{net_forward.6} parent=0 // pred_region
    _
  $region13: #{net_forward.6} parent=0 // pred_fallthru
    _
  // Predicated region
  $region14: #{net_forward.6} parent=0 // pred_check
    _
  $region15: #{net_forward.6} parent=0 // pred_check_branch
    %17 = sbr.rel (0) target = $region17
  $region16: #{net_forward.6} parent=0 // pred_region
    _
  $region17: #{net_forward.6} parent=0 // pred_fallthru
    _
  // Predicated region
  $region18: #{net_forward.6} parent=0 // pred_check
    _
  $region19: #{net_forward.6} parent=0 // pred_check_branch
    %19 = sbr.rel (0) target = $region21
  $region20: #{net_forward.6} parent=0 // pred_region
    _
  $region21: #{net_forward.6} parent=0 // pred_fallthru
    _
  %v20 = vld [vmem:[%s2] sm:$0xff]
  %v21 = vld [vmem:[%s2 + $0x8] sm:$0xff]
  %v22 = vld [vmem:[%s2 + $0x10] sm:$0xff]
  %v23 = vld [vmem:[%s2 + $0x18] sm:$0xff]
  %v24 = vld [vmem:[%s0] sm:$0xff]
  %v25 = vld [vmem:[%s0 + $0x8] sm:$0xff]
  %v26 = vld [vmem:[%s0 + $0x10] sm:$0xff]
  %v27 = vld [vmem:[%s0 + $0x18] sm:$0xff]
  %v28 = vld [vmem:[%s0 + $0x20] sm:$0xff]
  %v29 = vld [vmem:[%s0 + $0x28] sm:$0xff]
  %v30 = vld [vmem:[%s0 + $0x30] sm:$0xff]
  %v31 = vld [vmem:[%s0 + $0x38] sm:$0xff]
  %v32 = vld [vmem:[%s0 + $0x40] sm:$0xff]
  %v33 = vld [vmem:[%s0 + $0x48] sm:$0xff]
  %v34 = vld [vmem:[%s0 + $0x50] sm:$0xff]
  %v35 = vld [vmem:[%s0 + $0x58] sm:$0xff]
  %v36 = vld [vmem:[%s0 + $0x60] sm:$0xff]
  %v37 = vld [vmem:[%s0 + $0x68] sm:$0xff]
  %v38 = vld [vmem:[%s0 + $0x70] sm:$0xff]
  %v39 = vld [vmem:[%s0 + $0x78] sm:$0xff]
  %vm40 = vcmask 261120
  %v42 = vsel %vm40, %v24, 0
  %v45 = vsel %vm40, %v25, 0
  %v48 = vsel %vm40, %v26, 0
  %v51 = vsel %vm40, %v27, 0
  %v54 = vsel %vm40, %v28, 0
  %v57 = vsel %vm40, %v29, 0
  %v60 = vsel %vm40, %v30, 0
  %v63 = vsel %vm40, %v31, 0
  %v66 = vsel %vm40, %v32, 0
  %v69 = vsel %vm40, %v33, 0
  %v72 = vsel %vm40, %v34, 0
  %v75 = vsel %vm40, %v35, 0
  %v78 = vsel %vm40, %v36, 0
  %v81 = vsel %vm40, %v37, 0
  %v84 = vsel %vm40, %v38, 0
  %v87 = vsel %vm40, %v39, 0
  %89 = vmatpush.msra.mxu0 0.0
  %90 = vmatpush.msra.mxu0 0.0
  %91 = vmatpush.msra.mxu0 0.0
  %92 = vmatpush.msra.mxu0 0.0
  %93 = vmatpush.msra.mxu0 0.0
  %94 = vmatpush.msra.mxu0 0.0
  %95 = vmatpush.msra.mxu0 0.0
  %96 = vmatpush.msra.mxu0 0.0
  %97 = vmatpush.msra.mxu0 0.0
  %98 = vmatpush.msra.mxu0 0.0
  %99 = vmatpush.msra.mxu0 0.0
  %100 = vmatpush.msra.mxu0 0.0
  %101 = vmatpush.msra.mxu0 %v23
  %102 = vmatpush.msra.mxu0 %v22
  %103 = vmatpush.msra.mxu0 %v21
  %104 = vmatpush.msra.mxu0 %v20
  %105 = vmatmul.f32.gmra.mxu0 %v42
  %v106 = vpop.f32.mrf.mxu0
  %v107 = vadd.f32 0.0, %v106
  %108 = vmatmul.f32.gmra.mxu0 %v45
  %v109 = vpop.f32.mrf.mxu0
  %v110 = vadd.f32 0.0, %v109
  %111 = vmatmul.f32.gmra.mxu0 %v48
  %v112 = vpop.f32.mrf.mxu0
  %v113 = vadd.f32 0.0, %v112
  %114 = vmatmul.f32.gmra.mxu0 %v51
  %v115 = vpop.f32.mrf.mxu0
  %v116 = vadd.f32 0.0, %v115
  %117 = vmatmul.f32.gmra.mxu0 %v54
  %v118 = vpop.f32.mrf.mxu0
  %v119 = vadd.f32 0.0, %v118
  %120 = vmatmul.f32.gmra.mxu0 %v57
  %v121 = vpop.f32.mrf.mxu0
  %v122 = vadd.f32 0.0, %v121
  %123 = vmatmul.f32.gmra.mxu0 %v60
  %v124 = vpop.f32.mrf.mxu0
  %v125 = vadd.f32 0.0, %v124
  %126 = vmatmul.f32.gmra.mxu0 %v63
  %v127 = vpop.f32.mrf.mxu0
  %v128 = vadd.f32 0.0, %v127
  %129 = vmatmul.f32.gmra.mxu0 %v66
  %v130 = vpop.f32.mrf.mxu0
  %v131 = vadd.f32 0.0, %v130
  %132 = vmatmul.f32.gmra.mxu0 %v69
  %v133 = vpop.f32.mrf.mxu0
  %v134 = vadd.f32 0.0, %v133
  %135 = vmatmul.f32.gmra.mxu0 %v72
  %v136 = vpop.f32.mrf.mxu0
  %v137 = vadd.f32 0.0, %v136
  %138 = vmatmul.f32.gmra.mxu0 %v75
  %v139 = vpop.f32.mrf.mxu0
  %v140 = vadd.f32 0.0, %v139
  %141 = vmatmul.f32.gmra.mxu0 %v78
  %v142 = vpop.f32.mrf.mxu0
  %v143 = vadd.f32 0.0, %v142
  %144 = vmatmul.f32.gmra.mxu0 %v81
  %v145 = vpop.f32.mrf.mxu0
  %v146 = vadd.f32 0.0, %v145
  %147 = vmatmul.f32.gmra.mxu0 %v84
  %v148 = vpop.f32.mrf.mxu0
  %v149 = vadd.f32 0.0, %v148
  %150 = vmatmul.f32.gmra.mxu0 %v87
  %v151 = vpop.f32.mrf.mxu0
  %v152 = vadd.f32 0.0, %v151
  %153 = vdwg.mxu0
  %vm154 = vcmp.ge.f32.partialorder %v107, 0.0
  %vm155 = vcmp.ge.f32.partialorder %v110, 0.0
  %vm156 = vcmp.ge.f32.partialorder %v113, 0.0
  %vm157 = vcmp.ge.f32.partialorder %v116, 0.0
  %vm158 = vcmp.ge.f32.partialorder %v119, 0.0
  %vm159 = vcmp.ge.f32.partialorder %v122, 0.0
  %vm160 = vcmp.ge.f32.partialorder %v125, 0.0
  %vm161 = vcmp.ge.f32.partialorder %v128, 0.0
  %vm162 = vcmp.ge.f32.partialorder %v131, 0.0
  %vm163 = vcmp.ge.f32.partialorder %v134, 0.0
  %vm164 = vcmp.ge.f32.partialorder %v137, 0.0
  %vm165 = vcmp.ge.f32.partialorder %v140, 0.0
  %vm166 = vcmp.ge.f32.partialorder %v143, 0.0
  %vm167 = vcmp.ge.f32.partialorder %v146, 0.0
  %vm168 = vcmp.ge.f32.partialorder %v149, 0.0
  %vm169 = vcmp.ge.f32.partialorder %v152, 0.0
  %v170 = vmul.f32 %v107, 0.2
  %v171 = vmul.f32 %v110, 0.2
  %v172 = vmul.f32 %v113, 0.2
  %v173 = vmul.f32 %v116, 0.2
  %v174 = vmul.f32 %v119, 0.2
  %v175 = vmul.f32 %v122, 0.2
  %v176 = vmul.f32 %v125, 0.2
  %v177 = vmul.f32 %v128, 0.2
  %v178 = vmul.f32 %v131, 0.2
  %v179 = vmul.f32 %v134, 0.2
  %v180 = vmul.f32 %v137, 0.2
  %v181 = vmul.f32 %v140, 0.2
  %v182 = vmul.f32 %v143, 0.2
  %v183 = vmul.f32 %v146, 0.2
  %v184 = vmul.f32 %v149, 0.2
  %v185 = vmul.f32 %v152, 0.2
  %v186 = vsel %vm154, %v107, %v170
  %v187 = vsel %vm155, %v110, %v171
  %v188 = vsel %vm156, %v113, %v172
  %v189 = vsel %vm157, %v116, %v173
  %v190 = vsel %vm158, %v119, %v174
  %v191 = vsel %vm159, %v122, %v175
  %v192 = vsel %vm160, %v125, %v176
  %v193 = vsel %vm161, %v128, %v177
  %v194 = vsel %vm162, %v131, %v178
  %v195 = vsel %vm163, %v134, %v179
  %v196 = vsel %vm164, %v137, %v180
  %v197 = vsel %vm165, %v140, %v181
  %v198 = vsel %vm166, %v143, %v182
  %v199 = vsel %vm167, %v146, %v183
  %v200 = vsel %vm168, %v149, %v184
  %v201 = vsel %vm169, %v152, %v185
  %v202 = vld [vmem:[%s1] sm:$0xff]
  %v204 = vsel %vm40, %v202, 0
  %206 = vmatpush.msra.mxu0 0.0
  %207 = vmatpush.msra.mxu0 0.0
  %208 = vmatpush.msra.mxu0 0.0
  %209 = vmatpush.msra.mxu0 0.0
  %210 = vmatpush.msra.mxu0 0.0
  %211 = vmatpush.msra.mxu0 0.0
  %212 = vmatpush.msra.mxu0 0.0
  %213 = vmatpush.msra.mxu0 0.0
  %214 = vmatpush.msra.mxu0 0.0
  %215 = vmatpush.msra.mxu0 0.0
  %216 = vmatpush.msra.mxu0 0.0
  %217 = vmatpush.msra.mxu0 0.0
  %218 = vmatpush.msra.mxu0 %v23
  %219 = vmatpush.msra.mxu0 %v22
  %220 = vmatpush.msra.mxu0 %v21
  %221 = vmatpush.msra.mxu0 %v20
  %222 = vmatmul.f32.gmra.mxu0 %v204
  %v223 = vpop.f32.mrf.mxu0
  %v224 = vadd.f32 0.0, %v223
  %225 = vdwg.mxu0
  %vm226 = vcmp.ge.f32.partialorder %v224, 0.0
  %v227 = vmul.f32 %v224, 0.2
  %v228 = vsel %vm226, %v224, %v227
  %v229 = vld [vmem:[%s4] sm:$0x1]
  %v231 = vperm.slane %v229, 0
  %v233 = vmul.f32 %v228, %v231
  %v234 = vsel %vm40, %v233, 0.0
  %235 = vadd.xlane.f32.xlu0 %v234
  %v236 = vpop.xlane.xlu0 %235
  %v237 = vld [vmem:[%s3] sm:$0x1]
  %v239 = vsel %vm40, %v237, 0
  %v242 = vsel %vm40, %v186, 0
  %v245 = vsel %vm40, %v187, 0
  %v248 = vsel %vm40, %v188, 0
  %v251 = vsel %vm40, %v189, 0
  %v254 = vsel %vm40, %v190, 0
  %v257 = vsel %vm40, %v191, 0
  %v260 = vsel %vm40, %v192, 0
  %v263 = vsel %vm40, %v193, 0
  %v266 = vsel %vm40, %v194, 0
  %v269 = vsel %vm40, %v195, 0
  %v272 = vsel %vm40, %v196, 0
  %v275 = vsel %vm40, %v197, 0
  %v278 = vsel %vm40, %v198, 0
  %v281 = vsel %vm40, %v199, 0
  %v284 = vsel %vm40, %v200, 0
  %v287 = vsel %vm40, %v201, 0
  %289 = vmatpush.xpose.msra.mxu0 %v287
  %290 = vmatpush.xpose.msra.mxu0 %v284
  %291 = vmatpush.xpose.msra.mxu0 %v281
  %292 = vmatpush.xpose.msra.mxu0 %v278
  %293 = vmatpush.xpose.msra.mxu0 %v275
  %294 = vmatpush.xpose.msra.mxu0 %v272
  %295 = vmatpush.xpose.msra.mxu0 %v269
  %296 = vmatpush.xpose.msra.mxu0 %v266
  %297 = vmatpush.xpose.msra.mxu0 %v263
  %298 = vmatpush.xpose.msra.mxu0 %v260
  %299 = vmatpush.xpose.msra.mxu0 %v257
  %300 = vmatpush.xpose.msra.mxu0 %v254
  %301 = vmatpush.xpose.msra.mxu0 %v251
  %302 = vmatpush.xpose.msra.mxu0 %v248
  %303 = vmatpush.xpose.msra.mxu0 %v245
  %304 = vmatpush.xpose.msra.mxu0 %v242
  %305 = vmatmul.f32.gmra.mxu0 %v239
  %v306 = vpop.f32.mrf.mxu0
  %v307 = vadd.f32 0.0, %v306
  %308 = vdwg.mxu0
  %v309 = vperm.slane %v307, 0
  %v310 = vadd.f32 %v236, %v309
  %311 = vst [vmem:[%s5] sm:$0xff] %v310
  // Predicated region
  $region22: #{net_forward.6} parent=0 // pred_check
    _
  $region23: #{net_forward.6} parent=0 // pred_check_branch
    %313 = sbr.rel (0) target = $region25
  $region24: #{net_forward.6} parent=0 // pred_region
    _
  $region25: #{net_forward.6} parent=0 // pred_fallthru
    _
  // Predicated region
  $region26: #{net_forward.6} parent=0 // pred_check
    _
  $region27: #{net_forward.6} parent=0 // pred_check_branch
    %315 = sbr.rel (0) target = $region29
  $region28: #{net_forward.6} parent=0 // pred_region
    _
  $region29: #{net_forward.6} parent=0 // pred_fallthru
    _

// kernel: net_forward.5
$region0: #{net_forward.5}
  #allocation0 [shape = 'u32[]', space=smem, size = 0x4, offset = 0x4, fixed_abs, tag = 'smem constant byte address 0x4 - core index']
  #allocation1 [shape = 'u32[72,128]{1,0:T(1,128)}', space=vmem, size = 0x9000, scoped, tag = 'internal scratch']
  %s0 = inlined_call_operand.vmem [shape: f32[128,128], index: 0, kind: input, shape index: {}]
  %s1 = inlined_call_operand.vmem [shape: f32[128,32], index: 1, kind: input, shape index: {}]
  %s2 = inlined_call_operand.vmem [shape: f32[32,32], index: 2, kind: input, shape index: {}]
  %s3 = inlined_call_operand.vmem [shape: f32[1,32], index: 3, kind: input, shape index: {}]
  %s4 = inlined_call_operand.vmem [shape: f32[128,32], index: 4, kind: output, shape index: {}]
  %s5 = sld [smem:[#allocation0]]
  $region26: #{net_forward.5} parent=0
    _
  %s7 = ssub.s32 1, %s5
  %s8 = scalar_select 0, %s7, %s5
  // Predicated region
  $region2: #{net_forward.5} parent=0 // pred_check
    _
  $region3: #{net_forward.5} parent=0 // pred_check_branch
    %10 = sbr.rel (0) target = $region5
  $region4: #{net_forward.5} parent=0 // pred_region
    _
  $region5: #{net_forward.5} parent=0 // pred_fallthru
    _
  // Predicated region
  $region6: #{net_forward.5} parent=0 // pred_check
    _
  $region7: #{net_forward.5} parent=0 // pred_check_branch
    %12 = sbr.rel (0) target = $region9
  $region8: #{net_forward.5} parent=0 // pred_region
    _
  $region9: #{net_forward.5} parent=0 // pred_fallthru
    _
  // Predicated region
  $region10: #{net_forward.5} parent=0 // pred_check
    _
  $region11: #{net_forward.5} parent=0 // pred_check_branch
    %14 = sbr.rel (0) target = $region13
  $region12: #{net_forward.5} parent=0 // pred_region
    _
  $region13: #{net_forward.5} parent=0 // pred_fallthru
    _
  // Predicated region
  $region14: #{net_forward.5} parent=0 // pred_check
    _
  $region15: #{net_forward.5} parent=0 // pred_check_branch
    %16 = sbr.rel (0) target = $region17
  $region16: #{net_forward.5} parent=0 // pred_region
    _
  $region17: #{net_forward.5} parent=0 // pred_fallthru
    _
  %v17 = vld [vmem:[%s0] sm:$0xff]
  %v18 = vld [vmem:[%s0 + $0x8] sm:$0xff]
  %v19 = vld [vmem:[%s0 + $0x10] sm:$0xff]
  %v20 = vld [vmem:[%s0 + $0x18] sm:$0xff]
  %v21 = vld [vmem:[%s0 + $0x20] sm:$0xff]
  %v22 = vld [vmem:[%s0 + $0x28] sm:$0xff]
  %v23 = vld [vmem:[%s0 + $0x30] sm:$0xff]
  %v24 = vld [vmem:[%s0 + $0x38] sm:$0xff]
  %v25 = vld [vmem:[%s0 + $0x40] sm:$0xff]
  %v26 = vld [vmem:[%s0 + $0x48] sm:$0xff]
  %v27 = vld [vmem:[%s0 + $0x50] sm:$0xff]
  %v28 = vld [vmem:[%s0 + $0x58] sm:$0xff]
  %v29 = vld [vmem:[%s0 + $0x60] sm:$0xff]
  %v30 = vld [vmem:[%s0 + $0x68] sm:$0xff]
  %v31 = vld [vmem:[%s0 + $0x70] sm:$0xff]
  %v32 = vld [vmem:[%s0 + $0x78] sm:$0xff]
  %v33 = vld [vmem:[%s1] sm:$0xff]
  %v34 = vld [vmem:[%s1 + $0x8] sm:$0xff]
  %v35 = vld [vmem:[%s1 + $0x10] sm:$0xff]
  %v36 = vld [vmem:[%s1 + $0x18] sm:$0xff]
  %v37 = vld [vmem:[%s1 + $0x20] sm:$0xff]
  %v38 = vld [vmem:[%s1 + $0x28] sm:$0xff]
  %v39 = vld [vmem:[%s1 + $0x30] sm:$0xff]
  %v40 = vld [vmem:[%s1 + $0x38] sm:$0xff]
  %v41 = vld [vmem:[%s1 + $0x40] sm:$0xff]
  %v42 = vld [vmem:[%s1 + $0x48] sm:$0xff]
  %v43 = vld [vmem:[%s1 + $0x50] sm:$0xff]
  %v44 = vld [vmem:[%s1 + $0x58] sm:$0xff]
  %v45 = vld [vmem:[%s1 + $0x60] sm:$0xff]
  %v46 = vld [vmem:[%s1 + $0x68] sm:$0xff]
  %v47 = vld [vmem:[%s1 + $0x70] sm:$0xff]
  %v48 = vld [vmem:[%s1 + $0x78] sm:$0xff]
  %49 = vmatpush.msra.mxu0 %v48
  %50 = vmatpush.msra.mxu0 %v47
  %51 = vmatpush.msra.mxu0 %v46
  %52 = vmatpush.msra.mxu0 %v45
  %53 = vmatpush.msra.mxu0 %v44
  %54 = vmatpush.msra.mxu0 %v43
  %55 = vmatpush.msra.mxu0 %v42
  %56 = vmatpush.msra.mxu0 %v41
  %57 = vmatpush.msra.mxu0 %v40
  %58 = vmatpush.msra.mxu0 %v39
  %59 = vmatpush.msra.mxu0 %v38
  %60 = vmatpush.msra.mxu0 %v37
  %61 = vmatpush.msra.mxu0 %v36
  %62 = vmatpush.msra.mxu0 %v35
  %63 = vmatpush.msra.mxu0 %v34
  %64 = vmatpush.msra.mxu0 %v33
  %65 = vmatmul.f32.gmra.mxu0 %v17
  %v66 = vpop.f32.mrf.mxu0
  %v67 = vadd.f32 0.0, %v66
  %68 = vmatmul.f32.gmra.mxu0 %v18
  %v69 = vpop.f32.mrf.mxu0
  %v70 = vadd.f32 0.0, %v69
  %71 = vmatmul.f32.gmra.mxu0 %v19
  %v72 = vpop.f32.mrf.mxu0
  %v73 = vadd.f32 0.0, %v72
  %74 = vmatmul.f32.gmra.mxu0 %v20
  %v75 = vpop.f32.mrf.mxu0
  %v76 = vadd.f32 0.0, %v75
  %77 = vmatmul.f32.gmra.mxu0 %v21
  %v78 = vpop.f32.mrf.mxu0
  %v79 = vadd.f32 0.0, %v78
  %80 = vmatmul.f32.gmra.mxu0 %v22
  %v81 = vpop.f32.mrf.mxu0
  %v82 = vadd.f32 0.0, %v81
  %83 = vmatmul.f32.gmra.mxu0 %v23
  %v84 = vpop.f32.mrf.mxu0
  %v85 = vadd.f32 0.0, %v84
  %86 = vmatmul.f32.gmra.mxu0 %v24
  %v87 = vpop.f32.mrf.mxu0
  %v88 = vadd.f32 0.0, %v87
  %89 = vmatmul.f32.gmra.mxu0 %v25
  %v90 = vpop.f32.mrf.mxu0
  %v91 = vadd.f32 0.0, %v90
  %92 = vmatmul.f32.gmra.mxu0 %v26
  %v93 = vpop.f32.mrf.mxu0
  %v94 = vadd.f32 0.0, %v93
  %95 = vmatmul.f32.gmra.mxu0 %v27
  %v96 = vpop.f32.mrf.mxu0
  %v97 = vadd.f32 0.0, %v96
  %98 = vmatmul.f32.gmra.mxu0 %v28
  %v99 = vpop.f32.mrf.mxu0
  %v100 = vadd.f32 0.0, %v99
  %101 = vmatmul.f32.gmra.mxu0 %v29
  %v102 = vpop.f32.mrf.mxu0
  %v103 = vadd.f32 0.0, %v102
  %104 = vmatmul.f32.gmra.mxu0 %v30
  %v105 = vpop.f32.mrf.mxu0
  %v106 = vadd.f32 0.0, %v105
  %107 = vmatmul.f32.gmra.mxu0 %v31
  %v108 = vpop.f32.mrf.mxu0
  %v109 = vadd.f32 0.0, %v108
  %110 = vmatmul.f32.gmra.mxu0 %v32
  %v111 = vpop.f32.mrf.mxu0
  %v112 = vadd.f32 0.0, %v111
  %113 = vdwg.mxu0
  %v114 = vld [vmem:[%s2] sm:$0xff]
  %v115 = vld [vmem:[%s2 + $0x8] sm:$0xff]
  %v116 = vld [vmem:[%s2 + $0x10] sm:$0xff]
  %v117 = vld [vmem:[%s2 + $0x18] sm:$0xff]
  %v118 = vld [vmem:[%s3] sm:$0x1]
  %v120 = vperm.slane %v118, 0
  %vm122 = vcmask 261120
  %v124 = vsel %vm122, %v67, 0
  %v127 = vsel %vm122, %v70, 0
  %v130 = vsel %vm122, %v73, 0
  %v133 = vsel %vm122, %v76, 0
  %v136 = vsel %vm122, %v79, 0
  %v139 = vsel %vm122, %v82, 0
  %v142 = vsel %vm122, %v85, 0
  %v145 = vsel %vm122, %v88, 0
  %v148 = vsel %vm122, %v91, 0
  %v151 = vsel %vm122, %v94, 0
  %v154 = vsel %vm122, %v97, 0
  %v157 = vsel %vm122, %v100, 0
  %v160 = vsel %vm122, %v103, 0
  %v163 = vsel %vm122, %v106, 0
  %v166 = vsel %vm122, %v109, 0
  %v169 = vsel %vm122, %v112, 0
  %171 = vmatpush.msra.mxu0 0.0
  %172 = vmatpush.msra.mxu0 0.0
  %173 = vmatpush.msra.mxu0 0.0
  %174 = vmatpush.msra.mxu0 0.0
  %175 = vmatpush.msra.mxu0 0.0
  %176 = vmatpush.msra.mxu0 0.0
  %177 = vmatpush.msra.mxu0 0.0
  %178 = vmatpush.msra.mxu0 0.0
  %179 = vmatpush.msra.mxu0 0.0
  %180 = vmatpush.msra.mxu0 0.0
  %181 = vmatpush.msra.mxu0 0.0
  %182 = vmatpush.msra.mxu0 0.0
  %183 = vmatpush.msra.mxu0 %v117
  %184 = vmatpush.msra.mxu0 %v116
  %185 = vmatpush.msra.mxu0 %v115
  %186 = vmatpush.msra.mxu0 %v114
  %187 = vmatmul.f32.gmra.mxu0 %v124
  %v188 = vpop.f32.mrf.mxu0
  %v189 = vadd.f32 %v120, %v188
  %190 = vmatmul.f32.gmra.mxu0 %v127
  %v191 = vpop.f32.mrf.mxu0
  %v192 = vadd.f32 %v120, %v191
  %193 = vmatmul.f32.gmra.mxu0 %v130
  %v194 = vpop.f32.mrf.mxu0
  %v195 = vadd.f32 %v120, %v194
  %196 = vmatmul.f32.gmra.mxu0 %v133
  %v197 = vpop.f32.mrf.mxu0
  %v198 = vadd.f32 %v120, %v197
  %199 = vmatmul.f32.gmra.mxu0 %v136
  %v200 = vpop.f32.mrf.mxu0
  %v201 = vadd.f32 %v120, %v200
  %202 = vmatmul.f32.gmra.mxu0 %v139
  %v203 = vpop.f32.mrf.mxu0
  %v204 = vadd.f32 %v120, %v203
  %205 = vmatmul.f32.gmra.mxu0 %v142
  %v206 = vpop.f32.mrf.mxu0
  %v207 = vadd.f32 %v120, %v206
  %208 = vmatmul.f32.gmra.mxu0 %v145
  %v209 = vpop.f32.mrf.mxu0
  %v210 = vadd.f32 %v120, %v209
  %211 = vmatmul.f32.gmra.mxu0 %v148
  %v212 = vpop.f32.mrf.mxu0
  %v213 = vadd.f32 %v120, %v212
  %214 = vmatmul.f32.gmra.mxu0 %v151
  %v215 = vpop.f32.mrf.mxu0
  %v216 = vadd.f32 %v120, %v215
  %217 = vmatmul.f32.gmra.mxu0 %v154
  %v218 = vpop.f32.mrf.mxu0
  %v219 = vadd.f32 %v120, %v218
  %220 = vmatmul.f32.gmra.mxu0 %v157
  %v221 = vpop.f32.mrf.mxu0
  %v222 = vadd.f32 %v120, %v221
  %223 = vmatmul.f32.gmra.mxu0 %v160
  %v224 = vpop.f32.mrf.mxu0
  %v225 = vadd.f32 %v120, %v224
  %226 = vmatmul.f32.gmra.mxu0 %v163
  %v227 = vpop.f32.mrf.mxu0
  %v228 = vadd.f32 %v120, %v227
  %229 = vmatmul.f32.gmra.mxu0 %v166
  %v230 = vpop.f32.mrf.mxu0
  %v231 = vadd.f32 %v120, %v230
  %232 = vmatmul.f32.gmra.mxu0 %v169
  %v233 = vpop.f32.mrf.mxu0
  %v234 = vadd.f32 %v120, %v233
  %235 = vdwg.mxu0
  %236 = vst.msk [vmem:[%s4] sm:$0xff] %vm122, %v189
  %237 = vst.msk [vmem:[%s4 + $0x8] sm:$0xff] %vm122, %v192
  %238 = vst.msk [vmem:[%s4 + $0x10] sm:$0xff] %vm122, %v195
  %239 = vst.msk [vmem:[%s4 + $0x18] sm:$0xff] %vm122, %v198
  %240 = vst.msk [vmem:[%s4 + $0x20] sm:$0xff] %vm122, %v201
  %241 = vst.msk [vmem:[%s4 + $0x28] sm:$0xff] %vm122, %v204
  %242 = vst.msk [vmem:[%s4 + $0x30] sm:$0xff] %vm122, %v207
  %243 = vst.msk [vmem:[%s4 + $0x38] sm:$0xff] %vm122, %v210
  %244 = vst.msk [vmem:[%s4 + $0x40] sm:$0xff] %vm122, %v213
  %245 = vst.msk [vmem:[%s4 + $0x48] sm:$0xff] %vm122, %v216
  %246 = vst.msk [vmem:[%s4 + $0x50] sm:$0xff] %vm122, %v219
  %247 = vst.msk [vmem:[%s4 + $0x58] sm:$0xff] %vm122, %v222
  %248 = vst.msk [vmem:[%s4 + $0x60] sm:$0xff] %vm122, %v225
  %249 = vst.msk [vmem:[%s4 + $0x68] sm:$0xff] %vm122, %v228
  %250 = vst.msk [vmem:[%s4 + $0x70] sm:$0xff] %vm122, %v231
  %251 = vst.msk [vmem:[%s4 + $0x78] sm:$0xff] %vm122, %v234
  // Predicated region
  $region18: #{net_forward.5} parent=0 // pred_check
    _
  $region19: #{net_forward.5} parent=0 // pred_check_branch
    %253 = sbr.rel (0) target = $region21
  $region20: #{net_forward.5} parent=0 // pred_region
    _
  $region21: #{net_forward.5} parent=0 // pred_fallthru
    _
  // Predicated region
  $region22: #{net_forward.5} parent=0 // pred_check
    _
  $region23: #{net_forward.5} parent=0 // pred_check_branch
    %255 = sbr.rel (0) target = $region25
  $region24: #{net_forward.5} parent=0 // pred_region
    _
  $region25: #{net_forward.5} parent=0 // pred_fallthru
    _

// kernel: net_forward.4
$region0: #{net_forward.4}
  #allocation0 [shape = 'u32[]', space=smem, size = 0x4, offset = 0x4, fixed_abs, tag = 'smem constant byte address 0x4 - core index']
  #allocation1 [shape = 'u32[72,128]{1,0:T(1,128)}', space=vmem, size = 0x9000, scoped, tag = 'internal scratch']
  %s0 = inlined_call_operand.vmem [shape: f32[128,128], index: 0, kind: input, shape index: {}]
  %s1 = inlined_call_operand.vmem [shape: f32[128,16], index: 1, kind: input, shape index: {}]
  %s2 = inlined_call_operand.vmem [shape: f32[16,32], index: 2, kind: input, shape index: {}]
  %s3 = inlined_call_operand.vmem [shape: f32[1,32], index: 3, kind: input, shape index: {}]
  %s4 = inlined_call_operand.vmem [shape: f32[128,32], index: 4, kind: output, shape index: {}]
  %s5 = sld [smem:[#allocation0]]
  $region26: #{net_forward.4} parent=0
    _
  %s7 = ssub.s32 1, %s5
  %s8 = scalar_select 0, %s7, %s5
  // Predicated region
  $region2: #{net_forward.4} parent=0 // pred_check
    _
  $region3: #{net_forward.4} parent=0 // pred_check_branch
    %10 = sbr.rel (0) target = $region5
  $region4: #{net_forward.4} parent=0 // pred_region
    _
  $region5: #{net_forward.4} parent=0 // pred_fallthru
    _
  // Predicated region
  $region6: #{net_forward.4} parent=0 // pred_check
    _
  $region7: #{net_forward.4} parent=0 // pred_check_branch
    %12 = sbr.rel (0) target = $region9
  $region8: #{net_forward.4} parent=0 // pred_region
    _
  $region9: #{net_forward.4} parent=0 // pred_fallthru
    _
  // Predicated region
  $region10: #{net_forward.4} parent=0 // pred_check
    _
  $region11: #{net_forward.4} parent=0 // pred_check_branch
    %14 = sbr.rel (0) target = $region13
  $region12: #{net_forward.4} parent=0 // pred_region
    _
  $region13: #{net_forward.4} parent=0 // pred_fallthru
    _
  // Predicated region
  $region14: #{net_forward.4} parent=0 // pred_check
    _
  $region15: #{net_forward.4} parent=0 // pred_check_branch
    %16 = sbr.rel (0) target = $region17
  $region16: #{net_forward.4} parent=0 // pred_region
    _
  $region17: #{net_forward.4} parent=0 // pred_fallthru
    _
  %v17 = vld [vmem:[%s0] sm:$0xff]
  %v18 = vld [vmem:[%s0 + $0x8] sm:$0xff]
  %v19 = vld [vmem:[%s0 + $0x10] sm:$0xff]
  %v20 = vld [vmem:[%s0 + $0x18] sm:$0xff]
  %v21 = vld [vmem:[%s0 + $0x20] sm:$0xff]
  %v22 = vld [vmem:[%s0 + $0x28] sm:$0xff]
  %v23 = vld [vmem:[%s0 + $0x30] sm:$0xff]
  %v24 = vld [vmem:[%s0 + $0x38] sm:$0xff]
  %v25 = vld [vmem:[%s0 + $0x40] sm:$0xff]
  %v26 = vld [vmem:[%s0 + $0x48] sm:$0xff]
  %v27 = vld [vmem:[%s0 + $0x50] sm:$0xff]
  %v28 = vld [vmem:[%s0 + $0x58] sm:$0xff]
  %v29 = vld [vmem:[%s0 + $0x60] sm:$0xff]
  %v30 = vld [vmem:[%s0 + $0x68] sm:$0xff]
  %v31 = vld [vmem:[%s0 + $0x70] sm:$0xff]
  %v32 = vld [vmem:[%s0 + $0x78] sm:$0xff]
  %v33 = vld [vmem:[%s1] sm:$0xff]
  %v34 = vld [vmem:[%s1 + $0x8] sm:$0xff]
  %v35 = vld [vmem:[%s1 + $0x10] sm:$0xff]
  %v36 = vld [vmem:[%s1 + $0x18] sm:$0xff]
  %v37 = vld [vmem:[%s1 + $0x20] sm:$0xff]
  %v38 = vld [vmem:[%s1 + $0x28] sm:$0xff]
  %v39 = vld [vmem:[%s1 + $0x30] sm:$0xff]
  %v40 = vld [vmem:[%s1 + $0x38] sm:$0xff]
  %v41 = vld [vmem:[%s1 + $0x40] sm:$0xff]
  %v42 = vld [vmem:[%s1 + $0x48] sm:$0xff]
  %v43 = vld [vmem:[%s1 + $0x50] sm:$0xff]
  %v44 = vld [vmem:[%s1 + $0x58] sm:$0xff]
  %v45 = vld [vmem:[%s1 + $0x60] sm:$0xff]
  %v46 = vld [vmem:[%s1 + $0x68] sm:$0xff]
  %v47 = vld [vmem:[%s1 + $0x70] sm:$0xff]
  %v48 = vld [vmem:[%s1 + $0x78] sm:$0xff]
  %49 = vmatpush.msra.mxu0 %v48
  %50 = vmatpush.msra.mxu0 %v47
  %51 = vmatpush.msra.mxu0 %v46
  %52 = vmatpush.msra.mxu0 %v45
  %53 = vmatpush.msra.mxu0 %v44
  %54 = vmatpush.msra.mxu0 %v43
  %55 = vmatpush.msra.mxu0 %v42
  %56 = vmatpush.msra.mxu0 %v41
  %57 = vmatpush.msra.mxu0 %v40
  %58 = vmatpush.msra.mxu0 %v39
  %59 = vmatpush.msra.mxu0 %v38
  %60 = vmatpush.msra.mxu0 %v37
  %61 = vmatpush.msra.mxu0 %v36
  %62 = vmatpush.msra.mxu0 %v35
  %63 = vmatpush.msra.mxu0 %v34
  %64 = vmatpush.msra.mxu0 %v33
  %65 = vmatmul.f32.gmra.mxu0 %v17
  %v66 = vpop.f32.mrf.mxu0
  %v67 = vadd.f32 0.0, %v66
  %68 = vmatmul.f32.gmra.mxu0 %v18
  %v69 = vpop.f32.mrf.mxu0
  %v70 = vadd.f32 0.0, %v69
  %71 = vmatmul.f32.gmra.mxu0 %v19
  %v72 = vpop.f32.mrf.mxu0
  %v73 = vadd.f32 0.0, %v72
  %74 = vmatmul.f32.gmra.mxu0 %v20
  %v75 = vpop.f32.mrf.mxu0
  %v76 = vadd.f32 0.0, %v75
  %77 = vmatmul.f32.gmra.mxu0 %v21
  %v78 = vpop.f32.mrf.mxu0
  %v79 = vadd.f32 0.0, %v78
  %80 = vmatmul.f32.gmra.mxu0 %v22
  %v81 = vpop.f32.mrf.mxu0
  %v82 = vadd.f32 0.0, %v81
  %83 = vmatmul.f32.gmra.mxu0 %v23
  %v84 = vpop.f32.mrf.mxu0
  %v85 = vadd.f32 0.0, %v84
  %86 = vmatmul.f32.gmra.mxu0 %v24
  %v87 = vpop.f32.mrf.mxu0
  %v88 = vadd.f32 0.0, %v87
  %89 = vmatmul.f32.gmra.mxu0 %v25
  %v90 = vpop.f32.mrf.mxu0
  %v91 = vadd.f32 0.0, %v90
  %92 = vmatmul.f32.gmra.mxu0 %v26
  %v93 = vpop.f32.mrf.mxu0
  %v94 = vadd.f32 0.0, %v93
  %95 = vmatmul.f32.gmra.mxu0 %v27
  %v96 = vpop.f32.mrf.mxu0
  %v97 = vadd.f32 0.0, %v96
  %98 = vmatmul.f32.gmra.mxu0 %v28
  %v99 = vpop.f32.mrf.mxu0
  %v100 = vadd.f32 0.0, %v99
  %101 = vmatmul.f32.gmra.mxu0 %v29
  %v102 = vpop.f32.mrf.mxu0
  %v103 = vadd.f32 0.0, %v102
  %104 = vmatmul.f32.gmra.mxu0 %v30
  %v105 = vpop.f32.mrf.mxu0
  %v106 = vadd.f32 0.0, %v105
  %107 = vmatmul.f32.gmra.mxu0 %v31
  %v108 = vpop.f32.mrf.mxu0
  %v109 = vadd.f32 0.0, %v108
  %110 = vmatmul.f32.gmra.mxu0 %v32
  %v111 = vpop.f32.mrf.mxu0
  %v112 = vadd.f32 0.0, %v111
  %113 = vdwg.mxu0
  %v114 = vld [vmem:[%s2] sm:$0xff]
  %v115 = vld [vmem:[%s2 + $0x8] sm:$0xff]
  %v116 = vld [vmem:[%s3] sm:$0x1]
  %v118 = vperm.slane %v116, 0
  %vm120 = vcmask 130048
  %v122 = vsel %vm120, %v67, 0
  %v125 = vsel %vm120, %v70, 0
  %v128 = vsel %vm120, %v73, 0
  %v131 = vsel %vm120, %v76, 0
  %v134 = vsel %vm120, %v79, 0
  %v137 = vsel %vm120, %v82, 0
  %v140 = vsel %vm120, %v85, 0
  %v143 = vsel %vm120, %v88, 0
  %v146 = vsel %vm120, %v91, 0
  %v149 = vsel %vm120, %v94, 0
  %v152 = vsel %vm120, %v97, 0
  %v155 = vsel %vm120, %v100, 0
  %v158 = vsel %vm120, %v103, 0
  %v161 = vsel %vm120, %v106, 0
  %v164 = vsel %vm120, %v109, 0
  %v167 = vsel %vm120, %v112, 0
  %169 = vmatpush.msra.mxu0 0.0
  %170 = vmatpush.msra.mxu0 0.0
  %171 = vmatpush.msra.mxu0 0.0
  %172 = vmatpush.msra.mxu0 0.0
  %173 = vmatpush.msra.mxu0 0.0
  %174 = vmatpush.msra.mxu0 0.0
  %175 = vmatpush.msra.mxu0 0.0
  %176 = vmatpush.msra.mxu0 0.0
  %177 = vmatpush.msra.mxu0 0.0
  %178 = vmatpush.msra.mxu0 0.0
  %179 = vmatpush.msra.mxu0 0.0
  %180 = vmatpush.msra.mxu0 0.0
  %181 = vmatpush.msra.mxu0 0.0
  %182 = vmatpush.msra.mxu0 0.0
  %183 = vmatpush.msra.mxu0 %v115
  %184 = vmatpush.msra.mxu0 %v114
  %185 = vmatmul.f32.gmra.mxu0 %v122
  %v186 = vpop.f32.mrf.mxu0
  %v187 = vadd.f32 %v118, %v186
  %188 = vmatmul.f32.gmra.mxu0 %v125
  %v189 = vpop.f32.mrf.mxu0
  %v190 = vadd.f32 %v118, %v189
  %191 = vmatmul.f32.gmra.mxu0 %v128
  %v192 = vpop.f32.mrf.mxu0
  %v193 = vadd.f32 %v118, %v192
  %194 = vmatmul.f32.gmra.mxu0 %v131
  %v195 = vpop.f32.mrf.mxu0
  %v196 = vadd.f32 %v118, %v195
  %197 = vmatmul.f32.gmra.mxu0 %v134
  %v198 = vpop.f32.mrf.mxu0
  %v199 = vadd.f32 %v118, %v198
  %200 = vmatmul.f32.gmra.mxu0 %v137
  %v201 = vpop.f32.mrf.mxu0
  %v202 = vadd.f32 %v118, %v201
  %203 = vmatmul.f32.gmra.mxu0 %v140
  %v204 = vpop.f32.mrf.mxu0
  %v205 = vadd.f32 %v118, %v204
  %206 = vmatmul.f32.gmra.mxu0 %v143
  %v207 = vpop.f32.mrf.mxu0
  %v208 = vadd.f32 %v118, %v207
  %209 = vmatmul.f32.gmra.mxu0 %v146
  %v210 = vpop.f32.mrf.mxu0
  %v211 = vadd.f32 %v118, %v210
  %212 = vmatmul.f32.gmra.mxu0 %v149
  %v213 = vpop.f32.mrf.mxu0
  %v214 = vadd.f32 %v118, %v213
  %215 = vmatmul.f32.gmra.mxu0 %v152
  %v216 = vpop.f32.mrf.mxu0
  %v217 = vadd.f32 %v118, %v216
  %218 = vmatmul.f32.gmra.mxu0 %v155
  %v219 = vpop.f32.mrf.mxu0
  %v220 = vadd.f32 %v118, %v219
  %221 = vmatmul.f32.gmra.mxu0 %v158
  %v222 = vpop.f32.mrf.mxu0
  %v223 = vadd.f32 %v118, %v222
  %224 = vmatmul.f32.gmra.mxu0 %v161
  %v225 = vpop.f32.mrf.mxu0
  %v226 = vadd.f32 %v118, %v225
  %227 = vmatmul.f32.gmra.mxu0 %v164
  %v228 = vpop.f32.mrf.mxu0
  %v229 = vadd.f32 %v118, %v228
  %230 = vmatmul.f32.gmra.mxu0 %v167
  %v231 = vpop.f32.mrf.mxu0
  %v232 = vadd.f32 %v118, %v231
  %233 = vdwg.mxu0
  %v234 = vmax.f32 %v187, 0.0
  %v235 = vmax.f32 %v190, 0.0
  %v236 = vmax.f32 %v193, 0.0
  %v237 = vmax.f32 %v196, 0.0
  %v238 = vmax.f32 %v199, 0.0
  %v239 = vmax.f32 %v202, 0.0
  %v240 = vmax.f32 %v205, 0.0
  %v241 = vmax.f32 %v208, 0.0
  %v242 = vmax.f32 %v211, 0.0
  %v243 = vmax.f32 %v214, 0.0
  %v244 = vmax.f32 %v217, 0.0
  %v245 = vmax.f32 %v220, 0.0
  %v246 = vmax.f32 %v223, 0.0
  %v247 = vmax.f32 %v226, 0.0
  %v248 = vmax.f32 %v229, 0.0
  %v249 = vmax.f32 %v232, 0.0
  %vm250 = vcmask 261120
  %251 = vst.msk [vmem:[%s4] sm:$0xff] %vm250, %v234
  %252 = vst.msk [vmem:[%s4 + $0x8] sm:$0xff] %vm250, %v235
  %253 = vst.msk [vmem:[%s4 + $0x10] sm:$0xff] %vm250, %v236
  %254 = vst.msk [vmem:[%s4 + $0x18] sm:$0xff] %vm250, %v237
  %255 = vst.msk [vmem:[%s4 + $0x20] sm:$0xff] %vm250, %v238
  %256 = vst.msk [vmem:[%s4 + $0x28] sm:$0xff] %vm250, %v239
  %257 = vst.msk [vmem:[%s4 + $0x30] sm:$0xff] %vm250, %v240
  %258 = vst.msk [vmem:[%s4 + $0x38] sm:$0xff] %vm250, %v241
  %259 = vst.msk [vmem:[%s4 + $0x40] sm:$0xff] %vm250, %v242
  %260 = vst.msk [vmem:[%s4 + $0x48] sm:$0xff] %vm250, %v243
  %261 = vst.msk [vmem:[%s4 + $0x50] sm:$0xff] %vm250, %v244
  %262 = vst.msk [vmem:[%s4 + $0x58] sm:$0xff] %vm250, %v245
  %263 = vst.msk [vmem:[%s4 + $0x60] sm:$0xff] %vm250, %v246
  %264 = vst.msk [vmem:[%s4 + $0x68] sm:$0xff] %vm250, %v247
  %265 = vst.msk [vmem:[%s4 + $0x70] sm:$0xff] %vm250, %v248
  %266 = vst.msk [vmem:[%s4 + $0x78] sm:$0xff] %vm250, %v249
  // Predicated region
  $region18: #{net_forward.4} parent=0 // pred_check
    _
  $region19: #{net_forward.4} parent=0 // pred_check_branch
    %268 = sbr.rel (0) target = $region21
  $region20: #{net_forward.4} parent=0 // pred_region
    _
  $region21: #{net_forward.4} parent=0 // pred_fallthru
    _
  // Predicated region
  $region22: #{net_forward.4} parent=0 // pred_check
    _
  $region23: #{net_forward.4} parent=0 // pred_check_branch
    %270 = sbr.rel (0) target = $region25
  $region24: #{net_forward.4} parent=0 // pred_region
    _
  $region25: #{net_forward.4} parent=0 // pred_fallthru
    _

// kernel: custom-call.3
$region0: #{custom-call.3}
  %s0 = inlined_call_operand.vmem [shape: f32[4,6,6], index: 0, kind: input, shape index: {}]
  %s1 = inlined_call_operand.vmem [shape: f32[4,6,6], index: 1, kind: input, shape index: {}]
  %s2 = inlined_call_operand.vmem [shape: f32[4,6,6], index: 2, kind: input, shape index: {}]
  %s3 = inlined_call_operand.vmem [shape: f32[4,6,6], index: 3, kind: input, shape index: {}]
  %s4 = inlined_call_operand.vmem [shape: f32[4,6], index: 4, kind: output, shape index: {0}]
  %s5 = inlined_call_operand.vmem [shape: f32[4,6], index: 5, kind: output, shape index: {1}]
  %s6 = inlined_call_operand.hbm [shape: f32[4,6,6], index: 6, kind: output, shape index: {2}]
  %s7 = inlined_call_operand.hbm [shape: f32[4,6,6], index: 7, kind: output, shape index: {3}]
  %s8 = inlined_call_operand.hbm [shape: f32[4,6,6], index: 8, kind: output, shape index: {4}]
  %s9 = inlined_call_operand.hbm [shape: f32[4,6,6], index: 9, kind: output, shape index: {5}]
  %10 = xla_tuple %s4, %s5, %s6, %s7, %s8, %s9
  $region1: #{custom-call.3} parent=0
    #allocation0 [shape = 'u8[8192]{0}', space=vmem, size = 0x2000, scoped, tag = 'operand span for operand 0']
    #allocation1 [shape = 'u8[8192]{0}', space=vmem, size = 0x2000, scoped, tag = 'operand span for operand 1']
    #allocation2 [shape = 'u8[8192]{0}', space=vmem, size = 0x2000, scoped, tag = 'operand span for operand 2']
    #allocation3 [shape = 'u8[8192]{0}', space=vmem, size = 0x2000, scoped, tag = 'operand span for operand 3']
    #allocation4 [shape = 'u8[4096]{0}', space=vmem, size = 0x1000, scoped, tag = 'operand span for operand 4']
    #allocation5 [shape = 'u8[4096]{0}', space=vmem, size = 0x1000, scoped, tag = 'packed  for operand 4']
    #allocation6 [shape = 'u8[4096]{0}', space=vmem, size = 0x1000, scoped, tag = 'operand span for operand 5']
    #allocation7 [shape = 'u8[4096]{0}', space=vmem, size = 0x1000, scoped, tag = 'packed  for operand 5']
    #allocation8 [shape = 'u8[8192]{0}', space=vmem, size = 0x2000, scoped, tag = 'operand span for operand 6']
    #allocation9 [shape = 's32[2]{0}', space=sflag, size = 0x8, scoped, tag = 'scoped memory for custom-call.3']
    #allocation10 [shape = 'u8[8192]{0}', space=vmem, size = 0x2000, scoped, tag = 'operand span for operand 7']
    #allocation11 [shape = 's32[2]{0}', space=sflag, size = 0x8, scoped, tag = 'scoped memory for custom-call.3']
    #allocation12 [shape = 'u8[8192]{0}', space=vmem, size = 0x2000, scoped, tag = 'operand span for operand 8']
    #allocation13 [shape = 'u8[8192]{0}', space=vmem, size = 0x2000, scoped, tag = 'operand span for operand 9']
    #allocation14 [shape = 's32[2]{0}', space=sflag, size = 0x8, scoped, tag = 'scoped memory for custom-call.3']
    %11 = vsyncpa [#allocation9], 0
    %s12 = scalar_lea.sflag [#allocation9], 1
    %13 = vsyncpa %s12, 0
    %14 = vsyncpa [#allocation11], 0
    %s15 = scalar_lea.sflag [#allocation11], 1
    %16 = vsyncpa %s15, 0
    %17 = vsyncpa [#allocation14], 0
    %s18 = scalar_lea.sflag [#allocation14], 1
    %19 = vsyncpa %s18, 0
    loop: start=0, step=1, limit=6
    $region2: #{custom-call.3} parent=1 // loop_pre_header
      _
    $region3: #{custom-call.3} parent=1 // loop_header
      %s21 = sphi 0, %s25
      %p22 = scmp.ge.s32.totalorder %s21, 6
      %s33 = sphi 0, %s35
      %s36 = sphi 0, %s33
      %s37 = sphi 0, %s36
      %s53 = sphi 0, %s37
      %s61 = sphi 0, %s63
      %s64 = sphi 0, %s61
      %s65 = sphi 0, %s64
      %s81 = sphi 0, %s65
    $region4: #{custom-call.3} parent=1 // loop_header_branch
      %24 = sbr.rel (%p22) target = $region8
    $region5: #{custom-call.3} parent=1 // loop_body
      %s26 = ssub.s32 %s21, 1
      %s27 = ssub.s32 %s21, 2
      %s28 = sadd.s32 %s21, 1
      %s29 = sshrl.u32 %s21, 3
      %s30 = sshrl.u32 %s28, 3
      %s31 = ssub.s32 %s29, %s30
      %p32 = scmp.eq.s32.totalorder %s31, 0
      %s34 = sadd.s32 %s33, 1
      %s35 = scalar_select %p32, %s33, %s34
      %p38 = pneg %p32
      %p39 = scmp.eq.s32.totalorder %s21, 3
      %p40 = por %p38, %p39
      %p41 = scmp.ne.s32.totalorder %s33, %s36
      %p42 = scmp.eq.s32.totalorder %s21, 0
      %p43 = por %p41, %p42
      %p44 = scmp.ne.s32.totalorder %s33, %s36
      %p45 = scmp.eq.s32.totalorder %s26, 3
      %p46 = por %p44, %p45
      %p47 = scmp.ne.s32.totalorder %s36, %s37
      %p48 = scmp.eq.s32.totalorder %s26, 0
      %p49 = por %p47, %p48
      %p50 = scmp.ne.s32.totalorder %s36, %s37
      %p51 = scmp.eq.s32.totalorder %s27, 3
      %p52 = por %p50, %p51
      %p54 = scmp.ne.s32.totalorder %s37, %s53
      %p55 = scmp.eq.s32.totalorder %s27, 0
      %p56 = por %p54, %p55
      %s57 = sshrl.u32 %s21, 3
      %s58 = sshrl.u32 %s28, 3
      %s59 = ssub.s32 %s57, %s58
      %p60 = scmp.eq.s32.totalorder %s59, 0
      %s62 = sadd.s32 %s61, 1
      %s63 = scalar_select %p60, %s61, %s62
      %p66 = pneg %p60
      %p67 = scmp.eq.s32.totalorder %s21, 3
      %p68 = por %p66, %p67
      %p69 = scmp.ne.s32.totalorder %s61, %s64
      %p70 = scmp.eq.s32.totalorder %s21, 0
      %p71 = por %p69, %p70
      %p72 = scmp.ne.s32.totalorder %s61, %s64
      %p73 = scmp.eq.s32.totalorder %s26, 3
      %p74 = por %p72, %p73
      %p75 = scmp.ne.s32.totalorder %s64, %s65
      %p76 = scmp.eq.s32.totalorder %s26, 0
      %p77 = por %p75, %p76
      %p78 = scmp.ne.s32.totalorder %s64, %s65
      %p79 = scmp.eq.s32.totalorder %s27, 3
      %p80 = por %p78, %p79
      %p82 = scmp.ne.s32.totalorder %s65, %s81
      %p83 = scmp.eq.s32.totalorder %s27, 0
      %p84 = por %p82, %p83
      %p85 = scmp.le.s32.totalorder 1, %s21
      %p86 = scmp.lt.s32.totalorder %s21, 5
      %p87 = pnand %p85, %p86
      %p88 = pneg %p87
      // Predicated region
      $region9: #{custom-call.3} parent=5 // pred_check
        _
      $region10: #{custom-call.3} parent=5 // pred_check_branch
        %90 = sbr.rel (%p87) target = $region12
      $region11: #{custom-call.3} parent=5 // pred_region
        %s91 = ssub.s32 %s21, 1
      $region12: #{custom-call.3} parent=5 // pred_fallthru
        _
      %p92 = scmp.lt.s32.totalorder %s21, 4
      // Predicated region
      $region13: #{custom-call.3} parent=5 // pred_check
        %p93 = pneg %p92
      $region14: #{custom-call.3} parent=5 // pred_check_branch
        %95 = sbr.rel (%p93) target = $region16
      $region15: #{custom-call.3} parent=5 // pred_region
        %s96 = sand.u32 %s21, 1
        %s97 = sand.u32 %s21, 1
        %s98 = smul.addr %s97, 8
        %s99 = scalar_lea.vmem [#allocation0], %s98
        %s100 = smul.addr %s21, 8
        %s101 = scalar_lea.vmem %s0, %s100
        // Predicated region
        $region17: #{custom-call.3} parent=15 // pred_check
          _
        $region18: #{custom-call.3} parent=15 // pred_check_branch
          %103 = sbr.rel (0) target = $region20
        $region19: #{custom-call.3} parent=15 // pred_region
          // Predicated region
          $region21: #{custom-call.3} parent=19 // pred_check
            _
          $region22: #{custom-call.3} parent=19 // pred_check_branch
            %105 = sbr.rel (0) target = $region24
          $region23: #{custom-call.3} parent=19 // pred_region
            // Predicated region
            $region36: #{custom-call.3} parent=23 // pred_check
              _
            $region37: #{custom-call.3} parent=23 // pred_check_branch
              %121 = sbr.rel (0) target = $region39
            $region38: #{custom-call.3} parent=23 // pred_region
              loop: start=0, step=1, limit=1
              $region40: #{custom-call.3} parent=38 // loop_pre_header
                _
              $region41: #{custom-call.3} parent=38 // loop_header
                %s123 = sphi 0, %s127
                %p124 = scmp.ge.s32.totalorder %s123, 1
                %s128 = sphi %s101, %s101
                %s129 = sphi %s99, %s99
              $region42: #{custom-call.3} parent=38 // loop_header_branch
                %126 = sbr.rel (%p124) target = $region46
              $region43: #{custom-call.3} parent=38 // loop_body
                %v130 = vld [vmem:[%s128] sm:$0xff]
                %131 = vst [vmem:[%s129] sm:$0xff] %v130
              $region44: #{custom-call.3} parent=38 // loop_footer
                %s127 = sadd.s32 1, %s123
              $region45: #{custom-call.3} parent=38 // loop_footer_branch
                %122 = sbr.rel target = $region41
              $region46: #{custom-call.3} parent=38 // loop_exit
                _
            $region39: #{custom-call.3} parent=23 // pred_fallthru
              _
            // Predicated region
            $region47: #{custom-call.3} parent=23 // pred_check
              _
            $region48: #{custom-call.3} parent=23 // pred_check_branch
              %133 = sbr.rel target = $region50
            $region49: #{custom-call.3} parent=23 // pred_region
              _
            $region50: #{custom-call.3} parent=23 // pred_fallthru
              _
          $region24: #{custom-call.3} parent=19 // pred_fallthru
            _
          // Predicated region
          $region25: #{custom-call.3} parent=19 // pred_check
            _
          $region26: #{custom-call.3} parent=19 // pred_check_branch
            %107 = sbr.rel target = $region28
          $region27: #{custom-call.3} parent=19 // pred_region
            %s109 = ssub.s32 256, 1
            loop: start=0, step=1, limit=1
            $region29: #{custom-call.3} parent=27 // loop_pre_header
              _
            $region30: #{custom-call.3} parent=27 // loop_header
              %s111 = sphi 0, %s115
              %p112 = scmp.ge.s32.totalorder %s111, 1
              %s116 = sphi %s101, %s101
              %s117 = sphi %s99, %s99
            $region31: #{custom-call.3} parent=27 // loop_header_branch
              %114 = sbr.rel (%p112) target = $region35
            $region32: #{custom-call.3} parent=27 // loop_body
              %v118 = vld [vmem:[%s116] sm:%s109]
              %119 = vst [vmem:[%s117] sm:%s109] %v118
            $region33: #{custom-call.3} parent=27 // loop_footer
              %s115 = sadd.s32 1, %s111
            $region34: #{custom-call.3} parent=27 // loop_footer_branch
              %110 = sbr.rel target = $region30
            $region35: #{custom-call.3} parent=27 // loop_exit
              _
          $region28: #{custom-call.3} parent=19 // pred_fallthru
            _
        $region20: #{custom-call.3} parent=15 // pred_fallthru
          _
        %134 = vnop
        %s135 = sand.u32 %s21, 1
        %s136 = sand.u32 %s21, 1
        %s137 = smul.addr %s136, 8
        %s138 = scalar_lea.vmem [#allocation1], %s137
        %s139 = smul.addr %s21, 8
        %s140 = scalar_lea.vmem %s1, %s139
        // Predicated region
        $region51: #{custom-call.3} parent=15 // pred_check
          _
        $region52: #{custom-call.3} parent=15 // pred_check_branch
          %142 = sbr.rel (0) target = $region54
        $region53: #{custom-call.3} parent=15 // pred_region
          // Predicated region
          $region55: #{custom-call.3} parent=53 // pred_check
            _
          $region56: #{custom-call.3} parent=53 // pred_check_branch
            %144 = sbr.rel (0) target = $region58
          $region57: #{custom-call.3} parent=53 // pred_region
            // Predicated region
            $region70: #{custom-call.3} parent=57 // pred_check
              _
            $region71: #{custom-call.3} parent=57 // pred_check_branch
              %160 = sbr.rel (0) target = $region73
            $region72: #{custom-call.3} parent=57 // pred_region
              loop: start=0, step=1, limit=1
              $region74: #{custom-call.3} parent=72 // loop_pre_header
                _
              $region75: #{custom-call.3} parent=72 // loop_header
                %s162 = sphi 0, %s166
                %p163 = scmp.ge.s32.totalorder %s162, 1
                %s167 = sphi %s140, %s140
                %s168 = sphi %s138, %s138
              $region76: #{custom-call.3} parent=72 // loop_header_branch
                %165 = sbr.rel (%p163) target = $region80
              $region77: #{custom-call.3} parent=72 // loop_body
                %v169 = vld [vmem:[%s167] sm:$0xff]
                %170 = vst [vmem:[%s168] sm:$0xff] %v169
              $region78: #{custom-call.3} parent=72 // loop_footer
                %s166 = sadd.s32 1, %s162
              $region79: #{custom-call.3} parent=72 // loop_footer_branch
                %161 = sbr.rel target = $region75
              $region80: #{custom-call.3} parent=72 // loop_exit
                _
            $region73: #{custom-call.3} parent=57 // pred_fallthru
              _
            // Predicated region
            $region81: #{custom-call.3} parent=57 // pred_check
              _
            $region82: #{custom-call.3} parent=57 // pred_check_branch
              %172 = sbr.rel target = $region84
            $region83: #{custom-call.3} parent=57 // pred_region
              _
            $region84: #{custom-call.3} parent=57 // pred_fallthru
              _
          $region58: #{custom-call.3} parent=53 // pred_fallthru
            _
          // Predicated region
          $region59: #{custom-call.3} parent=53 // pred_check
            _
          $region60: #{custom-call.3} parent=53 // pred_check_branch
            %146 = sbr.rel target = $region62
          $region61: #{custom-call.3} parent=53 // pred_region
            %s148 = ssub.s32 256, 1
            loop: start=0, step=1, limit=1
            $region63: #{custom-call.3} parent=61 // loop_pre_header
              _
            $region64: #{custom-call.3} parent=61 // loop_header
              %s150 = sphi 0, %s154
              %p151 = scmp.ge.s32.totalorder %s150, 1
              %s155 = sphi %s140, %s140
              %s156 = sphi %s138, %s138
            $region65: #{custom-call.3} parent=61 // loop_header_branch
              %153 = sbr.rel (%p151) target = $region69
            $region66: #{custom-call.3} parent=61 // loop_body
              %v157 = vld [vmem:[%s155] sm:%s148]
              %158 = vst [vmem:[%s156] sm:%s148] %v157
            $region67: #{custom-call.3} parent=61 // loop_footer
              %s154 = sadd.s32 1, %s150
            $region68: #{custom-call.3} parent=61 // loop_footer_branch
              %149 = sbr.rel target = $region64
            $region69: #{custom-call.3} parent=61 // loop_exit
              _
          $region62: #{custom-call.3} parent=53 // pred_fallthru
            _
        $region54: #{custom-call.3} parent=15 // pred_fallthru
          _
        %173 = vnop
        %s174 = sand.u32 %s21, 1
        %s175 = sand.u32 %s21, 1
        %s176 = smul.addr %s175, 8
        %s177 = scalar_lea.vmem [#allocation2], %s176
        %s178 = smul.addr %s21, 8
        %s179 = scalar_lea.vmem %s2, %s178
        // Predicated region
        $region85: #{custom-call.3} parent=15 // pred_check
          _
        $region86: #{custom-call.3} parent=15 // pred_check_branch
          %181 = sbr.rel (0) target = $region88
        $region87: #{custom-call.3} parent=15 // pred_region
          // Predicated region
          $region89: #{custom-call.3} parent=87 // pred_check
            _
          $region90: #{custom-call.3} parent=87 // pred_check_branch
            %183 = sbr.rel (0) target = $region92
          $region91: #{custom-call.3} parent=87 // pred_region
            // Predicated region
            $region104: #{custom-call.3} parent=91 // pred_check
              _
            $region105: #{custom-call.3} parent=91 // pred_check_branch
              %199 = sbr.rel (0) target = $region107
            $region106: #{custom-call.3} parent=91 // pred_region
              loop: start=0, step=1, limit=1
              $region108: #{custom-call.3} parent=106 // loop_pre_header
                _
              $region109: #{custom-call.3} parent=106 // loop_header
                %s201 = sphi 0, %s205
                %p202 = scmp.ge.s32.totalorder %s201, 1
                %s206 = sphi %s179, %s179
                %s207 = sphi %s177, %s177
              $region110: #{custom-call.3} parent=106 // loop_header_branch
                %204 = sbr.rel (%p202) target = $region114
              $region111: #{custom-call.3} parent=106 // loop_body
                %v208 = vld [vmem:[%s206] sm:$0xff]
                %209 = vst [vmem:[%s207] sm:$0xff] %v208
              $region112: #{custom-call.3} parent=106 // loop_footer
                %s205 = sadd.s32 1, %s201
              $region113: #{custom-call.3} parent=106 // loop_footer_branch
                %200 = sbr.rel target = $region109
              $region114: #{custom-call.3} parent=106 // loop_exit
                _
            $region107: #{custom-call.3} parent=91 // pred_fallthru
              _
            // Predicated region
            $region115: #{custom-call.3} parent=91 // pred_check
              _
            $region116: #{custom-call.3} parent=91 // pred_check_branch
              %211 = sbr.rel target = $region118
            $region117: #{custom-call.3} parent=91 // pred_region
              _
            $region118: #{custom-call.3} parent=91 // pred_fallthru
              _
          $region92: #{custom-call.3} parent=87 // pred_fallthru
            _
          // Predicated region
          $region93: #{custom-call.3} parent=87 // pred_check
            _
          $region94: #{custom-call.3} parent=87 // pred_check_branch
            %185 = sbr.rel target = $region96
          $region95: #{custom-call.3} parent=87 // pred_region
            %s187 = ssub.s32 256, 1
            loop: start=0, step=1, limit=1
            $region97: #{custom-call.3} parent=95 // loop_pre_header
              _
            $region98: #{custom-call.3} parent=95 // loop_header
              %s189 = sphi 0, %s193
              %p190 = scmp.ge.s32.totalorder %s189, 1
              %s194 = sphi %s179, %s179
              %s195 = sphi %s177, %s177
            $region99: #{custom-call.3} parent=95 // loop_header_branch
              %192 = sbr.rel (%p190) target = $region103
            $region100: #{custom-call.3} parent=95 // loop_body
              %v196 = vld [vmem:[%s194] sm:%s187]
              %197 = vst [vmem:[%s195] sm:%s187] %v196
            $region101: #{custom-call.3} parent=95 // loop_footer
              %s193 = sadd.s32 1, %s189
            $region102: #{custom-call.3} parent=95 // loop_footer_branch
              %188 = sbr.rel target = $region98
            $region103: #{custom-call.3} parent=95 // loop_exit
              _
          $region96: #{custom-call.3} parent=87 // pred_fallthru
            _
        $region88: #{custom-call.3} parent=15 // pred_fallthru
          _
        %212 = vnop
        %s213 = sand.u32 %s21, 1
        %s214 = sand.u32 %s21, 1
        %s215 = smul.addr %s214, 8
        %s216 = scalar_lea.vmem [#allocation3], %s215
        %s217 = smul.addr %s21, 8
        %s218 = scalar_lea.vmem %s3, %s217
        // Predicated region
        $region119: #{custom-call.3} parent=15 // pred_check
          _
        $region120: #{custom-call.3} parent=15 // pred_check_branch
          %220 = sbr.rel (0) target = $region122
        $region121: #{custom-call.3} parent=15 // pred_region
          // Predicated region
          $region123: #{custom-call.3} parent=121 // pred_check
            _
          $region124: #{custom-call.3} parent=121 // pred_check_branch
            %222 = sbr.rel (0) target = $region126
          $region125: #{custom-call.3} parent=121 // pred_region
            // Predicated region
            $region138: #{custom-call.3} parent=125 // pred_check
              _
            $region139: #{custom-call.3} parent=125 // pred_check_branch
              %238 = sbr.rel (0) target = $region141
            $region140: #{custom-call.3} parent=125 // pred_region
              loop: start=0, step=1, limit=1
              $region142: #{custom-call.3} parent=140 // loop_pre_header
                _
              $region143: #{custom-call.3} parent=140 // loop_header
                %s240 = sphi 0, %s244
                %p241 = scmp.ge.s32.totalorder %s240, 1
                %s245 = sphi %s218, %s218
                %s246 = sphi %s216, %s216
              $region144: #{custom-call.3} parent=140 // loop_header_branch
                %243 = sbr.rel (%p241) target = $region148
              $region145: #{custom-call.3} parent=140 // loop_body
                %v247 = vld [vmem:[%s245] sm:$0xff]
                %248 = vst [vmem:[%s246] sm:$0xff] %v247
              $region146: #{custom-call.3} parent=140 // loop_footer
                %s244 = sadd.s32 1, %s240
              $region147: #{custom-call.3} parent=140 // loop_footer_branch
                %239 = sbr.rel target = $region143
              $region148: #{custom-call.3} parent=140 // loop_exit
                _
            $region141: #{custom-call.3} parent=125 // pred_fallthru
              _
            // Predicated region
            $region149: #{custom-call.3} parent=125 // pred_check
              _
            $region150: #{custom-call.3} parent=125 // pred_check_branch
              %250 = sbr.rel target = $region152
            $region151: #{custom-call.3} parent=125 // pred_region
              _
            $region152: #{custom-call.3} parent=125 // pred_fallthru
              _
          $region126: #{custom-call.3} parent=121 // pred_fallthru
            _
          // Predicated region
          $region127: #{custom-call.3} parent=121 // pred_check
            _
          $region128: #{custom-call.3} parent=121 // pred_check_branch
            %224 = sbr.rel target = $region130
          $region129: #{custom-call.3} parent=121 // pred_region
            %s226 = ssub.s32 256, 1
            loop: start=0, step=1, limit=1
            $region131: #{custom-call.3} parent=129 // loop_pre_header
              _
            $region132: #{custom-call.3} parent=129 // loop_header
              %s228 = sphi 0, %s232
              %p229 = scmp.ge.s32.totalorder %s228, 1
              %s233 = sphi %s218, %s218
              %s234 = sphi %s216, %s216
            $region133: #{custom-call.3} parent=129 // loop_header_branch
              %231 = sbr.rel (%p229) target = $region137
            $region134: #{custom-call.3} parent=129 // loop_body
              %v235 = vld [vmem:[%s233] sm:%s226]
              %236 = vst [vmem:[%s234] sm:%s226] %v235
            $region135: #{custom-call.3} parent=129 // loop_footer
              %s232 = sadd.s32 1, %s228
            $region136: #{custom-call.3} parent=129 // loop_footer_branch
              %227 = sbr.rel target = $region132
            $region137: #{custom-call.3} parent=129 // loop_exit
              _
          $region130: #{custom-call.3} parent=121 // pred_fallthru
            _
        $region122: #{custom-call.3} parent=15 // pred_fallthru
          _
        %251 = vnop
      $region16: #{custom-call.3} parent=5 // pred_fallthru
        _
      %p252 = scmp.le.s32.totalorder 1, %s21
      %p253 = scmp.lt.s32.totalorder %s21, 5
      %p254 = pnand %p252, %p253
      %p255 = pneg %p254
      // Predicated region
      $region153: #{custom-call.3} parent=5 // pred_check
        _
      $region154: #{custom-call.3} parent=5 // pred_check_branch
        %257 = sbr.rel (%p254) target = $region156
      $region155: #{custom-call.3} parent=5 // pred_region
        #allocation15 [shape = 'f32[6,6]{1,0}', space=vmem, size = 0x1000, scoped, tag = 'a top-left matrix']
        #allocation16 [shape = 'f32[6,6]{1,0}', space=vmem, size = 0x1000, scoped, tag = 'a top-right matrix']
        #allocation17 [shape = 'f32[6,6]{1,0}', space=vmem, size = 0x1000, scoped, tag = 'a bottom-left matrix']
        #allocation18 [shape = 'f32[6,6]{1,0}', space=vmem, size = 0x1000, scoped, tag = 'a bottom-right matrix']
        %s258 = ssub.s32 %s21, 1
        %s259 = sand.u32 %s26, 1
        %s260 = sand.u32 %s26, 1
        %s261 = smul.addr %s260, 8
        %s262 = scalar_lea.vmem [#allocation0], %s261
        %s263 = sand.u32 %s26, 1
        %s264 = sand.u32 %s26, 1
        %s265 = smul.addr %s264, 8
        %s266 = scalar_lea.vmem [#allocation1], %s265
        %s267 = sand.u32 %s26, 1
        %s268 = sand.u32 %s26, 1
        %s269 = smul.addr %s268, 8
        %s270 = scalar_lea.vmem [#allocation2], %s269
        %s271 = sand.u32 %s26, 1
        %s272 = sand.u32 %s26, 1
        %s273 = smul.addr %s272, 8
        %s274 = scalar_lea.vmem [#allocation3], %s273
        %s275 = sand.u32 %s26, 1
        %s276 = sand.u32 %s26, 1
        %s277 = smul.addr %s276, 8
        %s278 = scalar_lea.vmem [#allocation0], %s277
        %s279 = sand.u32 %s26, 1
        %s280 = sand.u32 %s26, 1
        %s281 = smul.addr %s280, 8
        %s282 = scalar_lea.vmem [#allocation1], %s281
        %s283 = sand.u32 %s26, 1
        %s284 = sand.u32 %s26, 1
        %s285 = smul.addr %s284, 8
        %s286 = scalar_lea.vmem [#allocation2], %s285
        %s287 = sand.u32 %s26, 1
        %s288 = sand.u32 %s26, 1
        %s289 = smul.addr %s288, 8
        %s290 = scalar_lea.vmem [#allocation3], %s289
        %p291 = pneg %p49
        %p292 = pneg %p46
        %s293 = sand.u32 %s36, 1
        %s294 = sand.u32 %s36, 1
        %s295 = smul.addr %s294, 4
        %s296 = scalar_lea.vmem [#allocation5], %s295
        %p297 = pneg %p77
        %p298 = pneg %p74
        %s299 = sand.u32 %s64, 1
        %s300 = sand.u32 %s64, 1
        %s301 = smul.addr %s300, 4
        %s302 = scalar_lea.vmem [#allocation7], %s301
        %s303 = sand.u32 %s26, 1
        %s304 = scalar_lea.sflag [#allocation9], %s303
        %s305 = sand.u32 %s26, 1
        %s306 = smul.addr %s305, 8
        %s307 = scalar_lea.vmem [#allocation8], %s306
        %s308 = sand.u32 %s26, 1
        %s309 = scalar_lea.sflag [#allocation11], %s308
        %s310 = sand.u32 %s26, 1
        %s311 = smul.addr %s310, 8
        %s312 = scalar_lea.vmem [#allocation10], %s311
        %s313 = sand.u32 %s26, 1
        %s314 = scalar_lea.sflag [#allocation11], %s313
        %s315 = sand.u32 %s26, 1
        %s316 = smul.addr %s315, 8
        %s317 = scalar_lea.vmem [#allocation12], %s316
        %s318 = sand.u32 %s26, 1
        %s319 = scalar_lea.sflag [#allocation14], %s318
        %s320 = sand.u32 %s26, 1
        %s321 = smul.addr %s320, 8
        %s322 = scalar_lea.vmem [#allocation13], %s321
        %s323 = sshrl.u32 %s26, 3
        %s324 = sshrl.u32 %s26, 3
        %s325 = smov [#allocation15]
        %v326 = vld [vmem:[%s262] sm:$0xff]
        %327 = vst [vmem:[%s325] sm:$0xff] %v326
        %s328 = smov [#allocation16]
        %v329 = vld [vmem:[%s266] sm:$0xff]
        %330 = vst [vmem:[%s328] sm:$0xff] %v329
        %s331 = smov [#allocation17]
        %v332 = vld [vmem:[%s270] sm:$0xff]
        %333 = vst [vmem:[%s331] sm:$0xff] %v332
        %s334 = smov [#allocation18]
        %v335 = vld [vmem:[%s274] sm:$0xff]
        %336 = vst [vmem:[%s334] sm:$0xff] %v335
        %337 = vst [vmem:[%s307] sm:$0xff] 0.0
        %338 = vst [vmem:[%s312] sm:$0xff] 0.0
        %339 = vst [vmem:[%s317] sm:$0xff] 0.0
        %340 = vst [vmem:[%s322] sm:$0xff] 0.0
        %s341 = smov %s307
        %v342 = vlaneseq
        %v343 = vand.u32 %v342, 127
        %v344 = vmov %v343
        %v345 = vlaneseq
        %v346 = vshrl.u32 %v345, 7
        %v347 = vmov %v346
        %v348 = vld [vmem:[%s341] sm:$0x3f]
        %vm351 = vcmp.eq.s32.totalorder %v347, %v344
        %v352 = vsel %vm351, 1.0, %v348
        %353 = vst [vmem:[%s341] sm:$0x3f] %v352
        %s354 = smov %s322
        %v355 = vlaneseq
        %v356 = vand.u32 %v355, 127
        %v357 = vmov %v356
        %v358 = vlaneseq
        %v359 = vshrl.u32 %v358, 7
        %v360 = vmov %v359
        %v361 = vld [vmem:[%s354] sm:$0x3f]
        %vm364 = vcmp.eq.s32.totalorder %v360, %v357
        %v365 = vsel %vm364, 1.0, %v361
        %366 = vst [vmem:[%s354] sm:$0x3f] %v365
        // While loop
        $region157: #{custom-call.3} parent=155 // loop_pre_header
          _
        $region158: #{custom-call.3} parent=155 // loop_header
          %s368 = sphi 0, %s950
          %v369 = vlaneseq
          %v370 = vand.u32 %v369, 127
          %v371 = vmov %v370
          %v372 = vlaneseq
          %v373 = vshrl.u32 %v372, 7
          %v374 = vmov %v373
          %s375 = smov [#allocation15]
          %v376 = vlaneseq
          %v377 = vand.u32 %v376, 127
          %vm378 = vcmp.ge.s32.totalorder %v377, 0
          %vm379 = vcmp.lt.s32.totalorder %v377, 6
          %vm380 = vmand %vm378, %vm379
          %v381 = vld [vmem:[%s375] sm:$0x3f]
          %v382 = vsel %vm380, %v381, 0.0
          %v383 = vmul.f32 %v382, %v382
          %vm386 = vcmp.eq.s32.totalorder %v374, %v371
          %v387 = vsel %vm386, 0.0, %v383
          %v388 = vlaneseq
          %v389 = vand.u32 %v388, 127
          %v390 = vmov %v389
          %v391 = vlaneseq
          %v392 = vshrl.u32 %v391, 7
          %v393 = vmov %v392
          %s394 = smov [#allocation16]
          %v395 = vlaneseq
          %v396 = vand.u32 %v395, 127
          %vm397 = vcmp.ge.s32.totalorder %v396, 0
          %vm398 = vcmp.lt.s32.totalorder %v396, 6
          %vm399 = vmand %vm397, %vm398
          %v400 = vld [vmem:[%s394] sm:$0x3f]
          %v401 = vsel %vm399, %v400, 0.0
          %v402 = vmul.f32 %v401, %v401
          %v403 = vadd.f32 %v387, %v402
          %v404 = vadd.f32 %v383, %v402
          %v405 = vlaneseq
          %v406 = vand.u32 %v405, 127
          %v407 = vmov %v406
          %v408 = vlaneseq
          %v409 = vshrl.u32 %v408, 7
          %v410 = vmov %v409
          %s411 = smov [#allocation17]
          %v412 = vlaneseq
          %v413 = vand.u32 %v412, 127
          %vm414 = vcmp.ge.s32.totalorder %v413, 0
          %vm415 = vcmp.lt.s32.totalorder %v413, 6
          %vm416 = vmand %vm414, %vm415
          %v417 = vld [vmem:[%s411] sm:$0x3f]
          %v418 = vsel %vm416, %v417, 0.0
          %v419 = vmul.f32 %v418, %v418
          %v420 = vadd.f32 %v403, %v419
          %v421 = vadd.f32 %v404, %v419
          %v422 = vlaneseq
          %v423 = vand.u32 %v422, 127
          %v424 = vmov %v423
          %v425 = vlaneseq
          %v426 = vshrl.u32 %v425, 7
          %v427 = vmov %v426
          %s428 = smov [#allocation18]
          %v429 = vlaneseq
          %v430 = vand.u32 %v429, 127
          %vm431 = vcmp.ge.s32.totalorder %v430, 0
          %vm432 = vcmp.lt.s32.totalorder %v430, 6
          %vm433 = vmand %vm431, %vm432
          %v434 = vld [vmem:[%s428] sm:$0x3f]
          %v435 = vsel %vm433, %v434, 0.0
          %v436 = vmul.f32 %v435, %v435
          %vm439 = vcmp.eq.s32.totalorder %v427, %v424
          %v440 = vsel %vm439, 0.0, %v436
          %v441 = vadd.f32 %v420, %v440
          %v442 = vadd.f32 %v421, %v436
          %443 = vadd.xlane.f32.xlu0 %v442
          %v444 = vpop.xlane.xlu0 %443
          %v445 = vrot.slane %v444, 4
          %v446 = vadd.f32 %v444, %v445
          %v447 = vrot.slane %v446, 2
          %v448 = vadd.f32 %v446, %v447
          %v449 = vrot.slane %v448, 1
          %v450 = vadd.f32 %v448, %v449
          %451 = vadd.xlane.f32.xlu0 %v441
          %v452 = vpop.xlane.xlu0 %451
          %v453 = vrot.slane %v452, 4
          %v454 = vadd.f32 %v452, %v453
          %v455 = vrot.slane %v454, 2
          %v456 = vadd.f32 %v454, %v455
          %v457 = vrot.slane %v456, 1
          %v458 = vadd.f32 %v456, %v457
          %s459 = vtos %v458
          %s460 = vtos %v450
          %s461 = smul.f32 1e-10, %s460
          %p462 = scmp.le.f32.partialorder %s459, %s461
          %p463 = scmp.ge.s32.totalorder %s368, 15
          %p464 = por %p462, %p463
        $region159: #{custom-call.3} parent=155 // loop_header_branch
          %952 = sbr.rel (%p464) target = $region163
        $region160: #{custom-call.3} parent=155 // loop_body
          loop: start=0, step=1, limit=11
          $region164: #{custom-call.3} parent=160 // loop_pre_header
            _
          $region165: #{custom-call.3} parent=160 // loop_header
            %s466 = sphi 0, %s470
            %p467 = scmp.ge.s32.totalorder %s466, 11
          $region166: #{custom-call.3} parent=160 // loop_header_branch
            %469 = sbr.rel (%p467) target = $region170
          $region167: #{custom-call.3} parent=160 // loop_body
            #allocation19 [shape = 'f32[1024]{0}', space=vmem, size = 0x1000, scoped, tag = 'a_tl_diag vmem']
            #allocation20 [shape = 'f32[1024]{0}', space=vmem, size = 0x1000, scoped, tag = 'a_tr_diag vmem']
            #allocation21 [shape = 'f32[1024]{0}', space=vmem, size = 0x1000, scoped, tag = 'a_br_diag vmem']
            #allocation22 [shape = 'f32[1024]{0}', space=vmem, size = 0x1000, scoped, tag = 'rt1 vmem']
            #allocation23 [shape = 'f32[1024]{0}', space=vmem, size = 0x1000, scoped, tag = 'rt2 vmem']
            #allocation24 [shape = 'f32[1024]{0}', space=vmem, size = 0x1000, scoped, tag = 'c vmem']
            #allocation25 [shape = 'f32[1024]{0}', space=vmem, size = 0x1000, scoped, tag = 's vmem']
            #allocation26 [shape = 'f32[4096]{0}', space=vmem, size = 0x4000, scoped, tag = 'c broadcast']
            #allocation27 [shape = 'f32[4096]{0}', space=vmem, size = 0x4000, scoped, tag = 's broadcast']
            %s471 = smov [#allocation15]
            %s472 = smov [#allocation19]
            %v473 = vlaneseq
            %v474 = vand.u32 %v473, 127
            %v475 = vmov %v474
            %v476 = vlaneseq
            %v477 = vshrl.u32 %v476, 7
            %v478 = vmov %v477
            %v479 = vld [vmem:[%s471] sm:$0x3f]
            %vm482 = vcmp.eq.s32.totalorder %v478, %v475
            %v483 = vsel %vm482, %v479, 0.0
            %v484 = vrot.slane %v483, 4
            %v485 = vadd.f32 %v483, %v484
            %v486 = vrot.slane %v485, 2
            %v487 = vadd.f32 %v485, %v486
            %v488 = vrot.slane %v487, 1
            %v489 = vadd.f32 %v487, %v488
            %490 = vst [vmem:[%s472] sm:$0x1] %v489
            %s491 = smov [#allocation16]
            %s492 = smov [#allocation20]
            %v493 = vlaneseq
            %v494 = vand.u32 %v493, 127
            %v495 = vmov %v494
            %v496 = vlaneseq
            %v497 = vshrl.u32 %v496, 7
            %v498 = vmov %v497
            %v499 = vld [vmem:[%s491] sm:$0x3f]
            %vm502 = vcmp.eq.s32.totalorder %v498, %v495
            %v503 = vsel %vm502, %v499, 0.0
            %v504 = vrot.slane %v503, 4
            %v505 = vadd.f32 %v503, %v504
            %v506 = vrot.slane %v505, 2
            %v507 = vadd.f32 %v505, %v506
            %v508 = vrot.slane %v507, 1
            %v509 = vadd.f32 %v507, %v508
            %510 = vst [vmem:[%s492] sm:$0x1] %v509
            %s511 = smov [#allocation18]
            %s512 = smov [#allocation21]
            %v513 = vlaneseq
            %v514 = vand.u32 %v513, 127
            %v515 = vmov %v514
            %v516 = vlaneseq
            %v517 = vshrl.u32 %v516, 7
            %v518 = vmov %v517
            %v519 = vld [vmem:[%s511] sm:$0x3f]
            %vm522 = vcmp.eq.s32.totalorder %v518, %v515
            %v523 = vsel %vm522, %v519, 0.0
            %v524 = vrot.slane %v523, 4
            %v525 = vadd.f32 %v523, %v524
            %v526 = vrot.slane %v525, 2
            %v527 = vadd.f32 %v525, %v526
            %v528 = vrot.slane %v527, 1
            %v529 = vadd.f32 %v527, %v528
            %530 = vst [vmem:[%s512] sm:$0x1] %v529
            %s531 = smov [#allocation24]
            %s532 = smov [#allocation25]
            %s533 = smov [#allocation19]
            %v534 = vld [vmem:[%s533] sm:$0xff]
            %s535 = smov [#allocation20]
            %v536 = vld [vmem:[%s535] sm:$0xff]
            %s537 = smov [#allocation21]
            %v538 = vld [vmem:[%s537] sm:$0xff]
            %v539 = vsub.f32 %v538, %v534
            %v540 = vmul.f32 2.0, %v536
            %v541 = vrcp.pop %v540
            %v542 = vmul.f32 %v540, %v541
            %v543 = vsub.f32 1.0, %v542
            %v544 = vmul.f32 %v541, %v543
            %v545 = vadd.f32 %v541, %v544
            %vm546 = vweird.f32 %v540
            %vm547 = vweird.f32 %v541
            %vm548 = vmor %vm546, %vm547
            %v549 = vsel %vm548, %v541, %v545
            %v550 = vand.u32 2147483647, %v540
            %vm551 = vcmp.eq.f32.partialorder %v550, 8.507059e+37
            %v552 = vand.u32 %v540, 2147483648
            %v553 = vor.u32 1.1754944e-38, %v552
            %v554 = vsel %vm551, %v553, %v549
            %v555 = vmul.f32 %v539, %v554
            %vm556 = vcmp.ge.f32.partialorder %v555, 0.0
            %v557 = vmul.f32 %v555, %v555
            %v558 = vadd.f32 1.0, %v557
            %v559 = vrsqrt.pop %v558
            %v560 = vmul.f32 %v559, %v558
            %v561 = vmul.f32 %v560, %v559
            %v562 = vmul.f32 0.5, %v561
            %v563 = vsub.f32 1.5, %v562
            %v564 = vmul.f32 %v559, %v563
            %v565 = vmul.f32 %v558, %v564
            %vm566 = vcmp.eq.f32.partialorder %v558, inf
            %v567 = vsel %vm566, %v558, %v565
            %vm568 = vcmp.eq.f32.partialorder %v558, 0.0
            %v569 = vand.u32 %v558, 2147483648
            %v570 = vsel %vm568, %v569, %v567
            %v571 = vxor.u32 %v570, 2147483648
            %v572 = vsel %vm556, %v570, %v571
            %v573 = vadd.f32 %v555, %v572
            %v574 = vrcp.pop %v573
            %v575 = vmul.f32 %v573, %v574
            %v576 = vsub.f32 1.0, %v575
            %v577 = vmul.f32 %v574, %v576
            %v578 = vadd.f32 %v574, %v577
            %vm579 = vweird.f32 %v573
            %vm580 = vweird.f32 %v574
            %vm581 = vmor %vm579, %vm580
            %v582 = vsel %vm581, %v574, %v578
            %v583 = vand.u32 2147483647, %v573
            %vm584 = vcmp.eq.f32.partialorder %v583, 8.507059e+37
            %v585 = vand.u32 %v573, 2147483648
            %v586 = vor.u32 1.1754944e-38, %v585
            %v587 = vsel %vm584, %v586, %v582
            %v588 = vand.u32 2147483647, %v534
            %v589 = vand.u32 2147483647, %v536
            %v590 = vand.u32 2147483647, %v538
            %v591 = vmin.f32 %v588, %v590
            %v592 = vmul.f32 1.1920929e-08, %v591
            %vm593 = vcmp.le.f32.partialorder %v589, %v592
            %v594 = vsel %vm593, 0.0, %v587
            %v595 = vmul.f32 %v594, %v594
            %v596 = vadd.f32 1.0, %v595
            %v597 = vrsqrt.pop %v596
            %v598 = vmul.f32 %v597, %v596
            %v599 = vmul.f32 %v598, %v597
            %v600 = vmul.f32 0.5, %v599
            %v601 = vsub.f32 1.5, %v600
            %v602 = vmul.f32 %v597, %v601
            %vm603 = vweird.f32 %v596
            %vm604 = vweird.f32 %v597
            %vm605 = vmor %vm603, %vm604
            %v606 = vsel %vm605, %v597, %v602
            %v607 = vmul.f32 %v594, %v606
            %v608 = vmul.f32 %v594, %v536
            %v609 = vsub.f32 %v534, %v608
            %v610 = vmul.f32 %v594, %v536
            %v611 = vadd.f32 %v538, %v610
            %s612 = smov [#allocation22]
            %613 = vst [vmem:[%s612] sm:$0xff] %v609
            %s614 = smov [#allocation23]
            %615 = vst [vmem:[%s614] sm:$0xff] %v611
            %s616 = smov %s531
            %617 = vst [vmem:[%s616] sm:$0xff] %v606
            %s618 = smov %s532
            %619 = vst [vmem:[%s618] sm:$0xff] %v607
            %s620 = smov [#allocation24]
            %v621 = vld [vmem:[%s620] ss:$0 sm:$0xff]
            %v622 = vlaneseq
            %v623 = vand.u32 %v622, 127
            %v624 = vmov %v623
            %v625 = vlaneseq
            %v626 = vshrl.u32 %v625, 7
            %v627 = vmov %v626
            %vm629 = vcmp.eq.s32.totalorder %v627, %v624
            %v630 = vsel %vm629, %v621, 0.0
            %631 = vadd.xlane.f32.xlu0 %v630
            %v632 = vpop.xlane.xlu0 %631
            %s633 = smov [#allocation26]
            %634 = vst [vmem:[%s633] sm:$0xff] %v632
            %s635 = smov [#allocation25]
            %v636 = vld [vmem:[%s635] ss:$0 sm:$0xff]
            %v637 = vlaneseq
            %v638 = vand.u32 %v637, 127
            %v639 = vmov %v638
            %v640 = vlaneseq
            %v641 = vshrl.u32 %v640, 7
            %v642 = vmov %v641
            %vm644 = vcmp.eq.s32.totalorder %v642, %v639
            %v645 = vsel %vm644, %v636, 0.0
            %646 = vadd.xlane.f32.xlu0 %v645
            %v647 = vpop.xlane.xlu0 %646
            %s648 = smov [#allocation27]
            %649 = vst [vmem:[%s648] sm:$0xff] %v647
            %s650 = smov [#allocation26]
            %v651 = vld [vmem:[%s650] sm:$0xff]
            %s652 = smov [#allocation27]
            %v653 = vld [vmem:[%s652] sm:$0xff]
            %s654 = smov [#allocation15]
            %s655 = smov [#allocation16]
            %s656 = smov [#allocation17]
            %s657 = smov [#allocation18]
            %v658 = vld [vmem:[%s654] sm:$0x3f]
            %v659 = vld [vmem:[%s655] sm:$0x3f]
            %v660 = vld [vmem:[%s656] sm:$0x3f]
            %v661 = vld [vmem:[%s657] sm:$0x3f]
            %v662 = vmul.f32 %v651, %v658
            %v663 = vmul.f32 %v653, %v660
            %v664 = vsub.f32 %v662, %v663
            %v665 = vmul.f32 %v651, %v659
            %v666 = vmul.f32 %v653, %v661
            %v667 = vsub.f32 %v665, %v666
            %v668 = vmul.f32 %v653, %v658
            %v669 = vmul.f32 %v651, %v660
            %v670 = vadd.f32 %v668, %v669
            %v671 = vmul.f32 %v653, %v659
            %v672 = vmul.f32 %v651, %v661
            %v673 = vadd.f32 %v671, %v672
            %674 = vst [vmem:[%s654] sm:$0x3f] %v664
            %675 = vst [vmem:[%s655] sm:$0x3f] %v667
            %676 = vst [vmem:[%s656] sm:$0x3f] %v670
            %677 = vst [vmem:[%s657] sm:$0x3f] %v673
            %s678 = smov [#allocation24]
            %v679 = vld [vmem:[%s678] ss:$0 sm:$0xff]
            %s680 = smov [#allocation25]
            %v681 = vld [vmem:[%s680] ss:$0 sm:$0xff]
            %s682 = smov [#allocation15]
            %s683 = smov [#allocation16]
            %s684 = smov [#allocation17]
            %s685 = smov [#allocation18]
            %v686 = vld [vmem:[%s682] sm:$0x3f]
            %v687 = vld [vmem:[%s683] sm:$0x3f]
            %v688 = vld [vmem:[%s684] sm:$0x3f]
            %v689 = vld [vmem:[%s685] sm:$0x3f]
            %v690 = vmul.f32 %v679, %v686
            %v691 = vmul.f32 %v681, %v687
            %v692 = vsub.f32 %v690, %v691
            %v693 = vmul.f32 %v681, %v686
            %v694 = vmul.f32 %v679, %v687
            %v695 = vadd.f32 %v693, %v694
            %v696 = vmul.f32 %v679, %v688
            %v697 = vmul.f32 %v681, %v689
            %v698 = vsub.f32 %v696, %v697
            %v699 = vmul.f32 %v681, %v688
            %v700 = vmul.f32 %v679, %v689
            %v701 = vadd.f32 %v699, %v700
            %702 = vst [vmem:[%s682] sm:$0x3f] %v692
            %703 = vst [vmem:[%s683] sm:$0x3f] %v695
            %704 = vst [vmem:[%s684] sm:$0x3f] %v698
            %705 = vst [vmem:[%s685] sm:$0x3f] %v701
            %s706 = smov [#allocation15]
            %s707 = smov [#allocation22]
            %v708 = vlaneseq
            %v709 = vand.u32 %v708, 127
            %v710 = vmov %v709
            %v711 = vlaneseq
            %v712 = vshrl.u32 %v711, 7
            %v713 = vmov %v712
            %v714 = vld [vmem:[%s707] ss:$0 sm:$0xff]
            %v715 = vld [vmem:[%s706] sm:$0x3f]
            %vm718 = vcmp.eq.s32.totalorder %v713, %v710
            %v719 = vsel %vm718, %v714, %v715
            %720 = vst [vmem:[%s706] sm:$0x3f] %v719
            %s721 = smov [#allocation16]
            %v722 = vlaneseq
            %v723 = vand.u32 %v722, 127
            %v724 = vmov %v723
            %v725 = vlaneseq
            %v726 = vshrl.u32 %v725, 7
            %v727 = vmov %v726
            %v728 = vld [vmem:[%s721] sm:$0x3f]
            %vm731 = vcmp.eq.s32.totalorder %v727, %v724
            %v732 = vsel %vm731, 0.0, %v728
            %733 = vst [vmem:[%s721] sm:$0x3f] %v732
            %s734 = smov [#allocation17]
            %v735 = vlaneseq
            %v736 = vand.u32 %v735, 127
            %v737 = vmov %v736
            %v738 = vlaneseq
            %v739 = vshrl.u32 %v738, 7
            %v740 = vmov %v739
            %v741 = vld [vmem:[%s734] sm:$0x3f]
            %vm744 = vcmp.eq.s32.totalorder %v740, %v737
            %v745 = vsel %vm744, 0.0, %v741
            %746 = vst [vmem:[%s734] sm:$0x3f] %v745
            %s747 = smov [#allocation18]
            %s748 = smov [#allocation23]
            %v749 = vlaneseq
            %v750 = vand.u32 %v749, 127
            %v751 = vmov %v750
            %v752 = vlaneseq
            %v753 = vshrl.u32 %v752, 7
            %v754 = vmov %v753
            %v755 = vld [vmem:[%s748] ss:$0 sm:$0xff]
            %v756 = vld [vmem:[%s747] sm:$0x3f]
            %vm759 = vcmp.eq.s32.totalorder %v754, %v751
            %v760 = vsel %vm759, %v755, %v756
            %761 = vst [vmem:[%s747] sm:$0x3f] %v760
            %s762 = smov [#allocation15]
            %s763 = smov [#allocation16]
            %v764 = vld [vmem:[%s763] sm:$0x3f]
            %765 = vrot.lane.b32.xlu0 %v764, 1
            %v766 = vpop.permute.xlu0 %765
            %v767 = vld [vmem:[%s762] sm:$0x3f]
            %v768 = vld [vmem:[%s762] sm:$0x3f]
            %769 = vrot.lane.b32.xlu0 %v768, 1
            %v770 = vpop.permute.xlu0 %769
            %v771 = vlaneseq
            %v772 = vand.u32 %v771, 127
            %vm773 = vcmp.eq.s32.totalorder %v772, 0
            %v774 = vsel %vm773, %v768, %v770
            %v775 = vlaneseq
            %v776 = vand.u32 %v775, 127
            %vm777 = vcmp.eq.s32.totalorder %v776, 1
            %v778 = vsel %vm777, %v766, %v774
            %v779 = vlaneseq
            %v780 = vand.u32 %v779, 127
            %vm781 = vcmp.ge.s32.totalorder %v780, 0
            %vm782 = vcmp.lt.s32.totalorder %v780, 6
            %vm783 = vmand %vm781, %vm782
            %v784 = vsel %vm783, %v778, 0.0
            %v785 = vld [vmem:[%s763] sm:$0x3f]
            %786 = vrot.lane.b32.xlu0 %v785, 127
            %v787 = vpop.permute.xlu0 %786
            %v788 = vlaneseq
            %v789 = vand.u32 %v788, 127
            %vm790 = vcmp.eq.s32.totalorder %v789, 5
            %v791 = vsel %vm790, %v767, %v787
            %792 = vst [vmem:[%s762] sm:$0x3f] %v784
            %793 = vst [vmem:[%s763] sm:$0x3f] %v791
            %s794 = smov [#allocation17]
            %s795 = smov [#allocation18]
            %v796 = vld [vmem:[%s795] sm:$0x3f]
            %797 = vrot.lane.b32.xlu0 %v796, 1
            %v798 = vpop.permute.xlu0 %797
            %v799 = vld [vmem:[%s794] sm:$0x3f]
            %v800 = vld [vmem:[%s794] sm:$0x3f]
            %801 = vrot.lane.b32.xlu0 %v800, 1
            %v802 = vpop.permute.xlu0 %801
            %v803 = vlaneseq
            %v804 = vand.u32 %v803, 127
            %vm805 = vcmp.eq.s32.totalorder %v804, 0
            %v806 = vsel %vm805, %v800, %v802
            %v807 = vlaneseq
            %v808 = vand.u32 %v807, 127
            %vm809 = vcmp.eq.s32.totalorder %v808, 1
            %v810 = vsel %vm809, %v798, %v806
            %v811 = vlaneseq
            %v812 = vand.u32 %v811, 127
            %vm813 = vcmp.ge.s32.totalorder %v812, 0
            %vm814 = vcmp.lt.s32.totalorder %v812, 6
            %vm815 = vmand %vm813, %vm814
            %v816 = vsel %vm815, %v810, 0.0
            %v817 = vld [vmem:[%s795] sm:$0x3f]
            %818 = vrot.lane.b32.xlu0 %v817, 127
            %v819 = vpop.permute.xlu0 %818
            %v820 = vlaneseq
            %v821 = vand.u32 %v820, 127
            %vm822 = vcmp.eq.s32.totalorder %v821, 5
            %v823 = vsel %vm822, %v799, %v819
            %824 = vst [vmem:[%s794] sm:$0x3f] %v816
            %825 = vst [vmem:[%s795] sm:$0x3f] %v823
            %s826 = smov [#allocation15]
            %s827 = smov [#allocation17]
            %v828 = vld [vmem:[%s826] ss:$0 sm:$0xff]
            %s830 = scalar_lea.vmem %s826, 4294967295
            %v831 = vld [vmem:[%s830] sm:$0x3e]
            %v832 = vlaneseq
            %v833 = vshrl.u32 %v832, 7
            %vm834 = vcmp.eq.s32.totalorder %v833, 0
            %v835 = vsel %vm834, %v828, %v831
            %s836 = scalar_lea.vmem %s826, 5
            %v837 = vld [vmem:[%s836] ss:$0 sm:$0xff]
            %838 = vst [vmem:[%s826] sm:$0x3f] %v835
            %v839 = vld [vmem:[%s827] ss:$0 sm:$0xff]
            %s840 = scalar_lea.vmem %s826, 1
            %841 = vst [vmem:[%s840] sm:$0x1] %v839
            %s842 = scalar_lea.vmem %s827, 1
            %v843 = vld [vmem:[%s842] sm:$0x1f]
            %v844 = vlaneseq
            %v845 = vshrl.u32 %v844, 7
            %vm846 = vcmp.eq.s32.totalorder %v845, 5
            %v847 = vsel %vm846, %v837, %v843
            %v848 = vld [vmem:[%s827] ss:$0 sm:$0xff]
            %849 = vst [vmem:[%s827] sm:$0x3f] %v847
            %s850 = smov [#allocation16]
            %s851 = smov [#allocation18]
            %v852 = vld [vmem:[%s850] ss:$0 sm:$0xff]
            %s854 = scalar_lea.vmem %s850, 4294967295
            %v855 = vld [vmem:[%s854] sm:$0x3e]
            %v856 = vlaneseq
            %v857 = vshrl.u32 %v856, 7
            %vm858 = vcmp.eq.s32.totalorder %v857, 0
            %v859 = vsel %vm858, %v852, %v855
            %s860 = scalar_lea.vmem %s850, 5
            %v861 = vld [vmem:[%s860] ss:$0 sm:$0xff]
            %862 = vst [vmem:[%s850] sm:$0x3f] %v859
            %v863 = vld [vmem:[%s851] ss:$0 sm:$0xff]
            %s864 = scalar_lea.vmem %s850, 1
            %865 = vst [vmem:[%s864] sm:$0x1] %v863
            %s866 = scalar_lea.vmem %s851, 1
            %v867 = vld [vmem:[%s866] sm:$0x1f]
            %v868 = vlaneseq
            %v869 = vshrl.u32 %v868, 7
            %vm870 = vcmp.eq.s32.totalorder %v869, 5
            %v871 = vsel %vm870, %v861, %v867
            %v872 = vld [vmem:[%s851] ss:$0 sm:$0xff]
            %873 = vst [vmem:[%s851] sm:$0x3f] %v871
            %s874 = smov [#allocation26]
            %v875 = vld [vmem:[%s874] sm:$0xff]
            %s876 = smov [#allocation27]
            %v877 = vld [vmem:[%s876] sm:$0xff]
            %s878 = smov %s307
            %s879 = smov %s312
            %s880 = smov %s317
            %s881 = smov %s322
            %v882 = vld [vmem:[%s878] sm:$0x3f]
            %v883 = vld [vmem:[%s879] sm:$0x3f]
            %v884 = vld [vmem:[%s880] sm:$0x3f]
            %v885 = vld [vmem:[%s881] sm:$0x3f]
            %v886 = vmul.f32 %v875, %v882
            %v887 = vmul.f32 %v877, %v884
            %v888 = vsub.f32 %v886, %v887
            %v889 = vmul.f32 %v875, %v883
            %v890 = vmul.f32 %v877, %v885
            %v891 = vsub.f32 %v889, %v890
            %v892 = vmul.f32 %v877, %v882
            %v893 = vmul.f32 %v875, %v884
            %v894 = vadd.f32 %v892, %v893
            %v895 = vmul.f32 %v877, %v883
            %v896 = vmul.f32 %v875, %v885
            %v897 = vadd.f32 %v895, %v896
            %898 = vst [vmem:[%s878] sm:$0x3f] %v888
            %899 = vst [vmem:[%s879] sm:$0x3f] %v891
            %900 = vst [vmem:[%s880] sm:$0x3f] %v894
            %901 = vst [vmem:[%s881] sm:$0x3f] %v897
            %s902 = smov %s307
            %s903 = smov %s317
            %v904 = vld [vmem:[%s902] ss:$0 sm:$0xff]
            %s906 = scalar_lea.vmem %s902, 4294967295
            %v907 = vld [vmem:[%s906] sm:$0x3e]
            %v908 = vlaneseq
            %v909 = vshrl.u32 %v908, 7
            %vm910 = vcmp.eq.s32.totalorder %v909, 0
            %v911 = vsel %vm910, %v904, %v907
            %s912 = scalar_lea.vmem %s902, 5
            %v913 = vld [vmem:[%s912] ss:$0 sm:$0xff]
            %914 = vst [vmem:[%s902] sm:$0x3f] %v911
            %v915 = vld [vmem:[%s903] ss:$0 sm:$0xff]
            %s916 = scalar_lea.vmem %s902, 1
            %917 = vst [vmem:[%s916] sm:$0x1] %v915
            %s918 = scalar_lea.vmem %s903, 1
            %v919 = vld [vmem:[%s918] sm:$0x1f]
            %v920 = vlaneseq
            %v921 = vshrl.u32 %v920, 7
            %vm922 = vcmp.eq.s32.totalorder %v921, 5
            %v923 = vsel %vm922, %v913, %v919
            %v924 = vld [vmem:[%s903] ss:$0 sm:$0xff]
            %925 = vst [vmem:[%s903] sm:$0x3f] %v923
            %s926 = smov %s312
            %s927 = smov %s322
            %v928 = vld [vmem:[%s926] ss:$0 sm:$0xff]
            %s930 = scalar_lea.vmem %s926, 4294967295
            %v931 = vld [vmem:[%s930] sm:$0x3e]
            %v932 = vlaneseq
            %v933 = vshrl.u32 %v932, 7
            %vm934 = vcmp.eq.s32.totalorder %v933, 0
            %v935 = vsel %vm934, %v928, %v931
            %s936 = scalar_lea.vmem %s926, 5
            %v937 = vld [vmem:[%s936] ss:$0 sm:$0xff]
            %938 = vst [vmem:[%s926] sm:$0x3f] %v935
            %v939 = vld [vmem:[%s927] ss:$0 sm:$0xff]
            %s940 = scalar_lea.vmem %s926, 1
            %941 = vst [vmem:[%s940] sm:$0x1] %v939
            %s942 = scalar_lea.vmem %s927, 1
            %v943 = vld [vmem:[%s942] sm:$0x1f]
            %v944 = vlaneseq
            %v945 = vshrl.u32 %v944, 7
            %vm946 = vcmp.eq.s32.totalorder %v945, 5
            %v947 = vsel %vm946, %v937, %v943
            %v948 = vld [vmem:[%s927] ss:$0 sm:$0xff]
            %949 = vst [vmem:[%s927] sm:$0x3f] %v947
          $region168: #{custom-call.3} parent=160 // loop_footer
            %s470 = sadd.s32 1, %s466
          $region169: #{custom-call.3} parent=160 // loop_footer_branch
            %465 = sbr.rel target = $region165
          $region170: #{custom-call.3} parent=160 // loop_exit
            _
          %s950 = sadd.s32 %s368, 1
        $region161: #{custom-call.3} parent=155 // loop_footer
          _
        $region162: #{custom-call.3} parent=155 // loop_footer_branch
          %367 = sbr.rel target = $region158
        $region163: #{custom-call.3} parent=155 // loop_exit
          _
        %s953 = sand.u32 %s26, 7
        %s954 = scalar_lea.vmem [#allocation4], %s953
        %s955 = sand.u32 %s26, 7
        %s956 = scalar_lea.vmem [#allocation6], %s955
        %s957 = smov [#allocation15]
        %s958 = smov %s954
        %v959 = vlaneseq
        %v960 = vand.u32 %v959, 127
        %v961 = vmov %v960
        %v962 = vlaneseq
        %v963 = vshrl.u32 %v962, 7
        %v964 = vmov %v963
        %v965 = vld [vmem:[%s957] sm:$0x3f]
        %vm968 = vcmp.eq.s32.totalorder %v964, %v961
        %v969 = vsel %vm968, %v965, 0.0
        %v970 = vrot.slane %v969, 4
        %v971 = vadd.f32 %v969, %v970
        %v972 = vrot.slane %v971, 2
        %v973 = vadd.f32 %v971, %v972
        %v974 = vrot.slane %v973, 1
        %v975 = vadd.f32 %v973, %v974
        %976 = vst [vmem:[%s958] sm:$0x1] %v975
        %s977 = smov [#allocation18]
        %s978 = smov %s956
        %v979 = vlaneseq
        %v980 = vand.u32 %v979, 127
        %v981 = vmov %v980
        %v982 = vlaneseq
        %v983 = vshrl.u32 %v982, 7
        %v984 = vmov %v983
        %v985 = vld [vmem:[%s977] sm:$0x3f]
        %vm988 = vcmp.eq.s32.totalorder %v984, %v981
        %v989 = vsel %vm988, %v985, 0.0
        %v990 = vrot.slane %v989, 4
        %v991 = vadd.f32 %v989, %v990
        %v992 = vrot.slane %v991, 2
        %v993 = vadd.f32 %v991, %v992
        %v994 = vrot.slane %v993, 1
        %v995 = vadd.f32 %v993, %v994
        %996 = vst [vmem:[%s978] sm:$0x1] %v995
        %s998 = ssub.s32 16, 1
        %v999 = vld [vmem:[#allocation4] sm:%s998]
        %s1001 = ssub.s32 16, 1
        %1002 = vst [vmem:[%s296] sm:%s1001] %v999
        %s1004 = ssub.s32 16, 1
        %v1005 = vld [vmem:[#allocation6] sm:%s1004]
        %s1007 = ssub.s32 16, 1
        %1008 = vst [vmem:[%s302] sm:%s1007] %v1005
        %s1009 = sand.u32 %s36, 1
        %s1010 = sand.u32 %s36, 1
        %s1011 = smul.addr %s1010, 4
        %s1012 = scalar_lea.vmem [#allocation5], %s1011
        %s1013 = sand.u32 %s64, 1
        %s1014 = sand.u32 %s64, 1
        %s1015 = smul.addr %s1014, 4
        %s1016 = scalar_lea.vmem [#allocation7], %s1015
        %s1017 = sand.u32 %s26, 1
        %s1018 = scalar_lea.sflag [#allocation9], %s1017
        %s1019 = sand.u32 %s26, 1
        %s1020 = smul.addr %s1019, 8
        %s1021 = scalar_lea.vmem [#allocation8], %s1020
        %s1022 = sand.u32 %s26, 1
        %s1023 = scalar_lea.sflag [#allocation11], %s1022
        %s1024 = sand.u32 %s26, 1
        %s1025 = smul.addr %s1024, 8
        %s1026 = scalar_lea.vmem [#allocation10], %s1025
        %s1027 = sand.u32 %s26, 1
        %s1028 = scalar_lea.sflag [#allocation11], %s1027
        %s1029 = sand.u32 %s26, 1
        %s1030 = smul.addr %s1029, 8
        %s1031 = scalar_lea.vmem [#allocation12], %s1030
        %s1032 = sand.u32 %s26, 1
        %s1033 = scalar_lea.sflag [#allocation14], %s1032
        %s1034 = sand.u32 %s26, 1
        %s1035 = smul.addr %s1034, 8
        %s1036 = scalar_lea.vmem [#allocation13], %s1035
        // Predicated region
        $region171: #{custom-call.3} parent=155 // pred_check
          %p1037 = pneg %p46
        $region172: #{custom-call.3} parent=155 // pred_check_branch
          %1039 = sbr.rel (%p1037) target = $region174
        $region173: #{custom-call.3} parent=155 // pred_region
          %s1040 = sshrl.u32 %s26, 3
          %s1041 = smul.addr %s1040, 4
          %s1042 = scalar_lea.vmem %s4, %s1041
          // Predicated region
          $region175: #{custom-call.3} parent=173 // pred_check
            _
          $region176: #{custom-call.3} parent=173 // pred_check_branch
            %1044 = sbr.rel (0) target = $region178
          $region177: #{custom-call.3} parent=173 // pred_region
            // Predicated region
            $region179: #{custom-call.3} parent=177 // pred_check
              _
            $region180: #{custom-call.3} parent=177 // pred_check_branch
              %1046 = sbr.rel target = $region182
            $region181: #{custom-call.3} parent=177 // pred_region
              // Predicated region
              $region194: #{custom-call.3} parent=181 // pred_check
                _
              $region195: #{custom-call.3} parent=181 // pred_check_branch
                %1062 = sbr.rel (0) target = $region197
              $region196: #{custom-call.3} parent=181 // pred_region
                %s1064 = ssub.s32 16, 1
                loop: start=0, step=1, limit=1
                $region198: #{custom-call.3} parent=196 // loop_pre_header
                  _
                $region199: #{custom-call.3} parent=196 // loop_header
                  %s1066 = sphi 0, %s1070
                  %p1067 = scmp.ge.s32.totalorder %s1066, 1
                  %s1071 = sphi %s1012, %s1012
                  %s1072 = sphi %s1042, %s1042
                $region200: #{custom-call.3} parent=196 // loop_header_branch
                  %1069 = sbr.rel (%p1067) target = $region204
                $region201: #{custom-call.3} parent=196 // loop_body
                  %v1073 = vld [vmem:[%s1071] sm:%s1064]
                  %1074 = vst [vmem:[%s1072] sm:%s1064] %v1073
                $region202: #{custom-call.3} parent=196 // loop_footer
                  %s1070 = sadd.s32 1, %s1066
                $region203: #{custom-call.3} parent=196 // loop_footer_branch
                  %1065 = sbr.rel target = $region199
                $region204: #{custom-call.3} parent=196 // loop_exit
                  _
              $region197: #{custom-call.3} parent=181 // pred_fallthru
                _
            $region182: #{custom-call.3} parent=177 // pred_fallthru
              _
            // Predicated region
            $region183: #{custom-call.3} parent=177 // pred_check
              _
            $region184: #{custom-call.3} parent=177 // pred_check_branch
              %1048 = sbr.rel (0) target = $region186
            $region185: #{custom-call.3} parent=177 // pred_region
              %s1050 = ssub.s32 16, 1
              loop: start=0, step=1, limit=1
              $region187: #{custom-call.3} parent=185 // loop_pre_header
                _
              $region188: #{custom-call.3} parent=185 // loop_header
                %s1052 = sphi 0, %s1056
                %p1053 = scmp.ge.s32.totalorder %s1052, 1
                %s1057 = sphi %s1012, %s1012
                %s1058 = sphi %s1042, %s1042
              $region189: #{custom-call.3} parent=185 // loop_header_branch
                %1055 = sbr.rel (%p1053) target = $region193
              $region190: #{custom-call.3} parent=185 // loop_body
                %v1059 = vld [vmem:[%s1057] sm:%s1050]
                %1060 = vst [vmem:[%s1058] sm:%s1050] %v1059
              $region191: #{custom-call.3} parent=185 // loop_footer
                %s1056 = sadd.s32 1, %s1052
              $region192: #{custom-call.3} parent=185 // loop_footer_branch
                %1051 = sbr.rel target = $region188
              $region193: #{custom-call.3} parent=185 // loop_exit
                _
            $region186: #{custom-call.3} parent=177 // pred_fallthru
              _
          $region178: #{custom-call.3} parent=173 // pred_fallthru
            _
          %1075 = vnop
        $region174: #{custom-call.3} parent=155 // pred_fallthru
          _
        // Predicated region
        $region205: #{custom-call.3} parent=155 // pred_check
          %p1076 = pneg %p74
        $region206: #{custom-call.3} parent=155 // pred_check_branch
          %1078 = sbr.rel (%p1076) target = $region208
        $region207: #{custom-call.3} parent=155 // pred_region
          %s1079 = sshrl.u32 %s26, 3
          %s1080 = smul.addr %s1079, 4
          %s1081 = scalar_lea.vmem %s5, %s1080
          // Predicated region
          $region209: #{custom-call.3} parent=207 // pred_check
            _
          $region210: #{custom-call.3} parent=207 // pred_check_branch
            %1083 = sbr.rel (0) target = $region212
          $region211: #{custom-call.3} parent=207 // pred_region
            // Predicated region
            $region213: #{custom-call.3} parent=211 // pred_check
              _
            $region214: #{custom-call.3} parent=211 // pred_check_branch
              %1085 = sbr.rel target = $region216
            $region215: #{custom-call.3} parent=211 // pred_region
              // Predicated region
              $region228: #{custom-call.3} parent=215 // pred_check
                _
              $region229: #{custom-call.3} parent=215 // pred_check_branch
                %1101 = sbr.rel (0) target = $region231
              $region230: #{custom-call.3} parent=215 // pred_region
                %s1103 = ssub.s32 16, 1
                loop: start=0, step=1, limit=1
                $region232: #{custom-call.3} parent=230 // loop_pre_header
                  _
                $region233: #{custom-call.3} parent=230 // loop_header
                  %s1105 = sphi 0, %s1109
                  %p1106 = scmp.ge.s32.totalorder %s1105, 1
                  %s1110 = sphi %s1016, %s1016
                  %s1111 = sphi %s1081, %s1081
                $region234: #{custom-call.3} parent=230 // loop_header_branch
                  %1108 = sbr.rel (%p1106) target = $region238
                $region235: #{custom-call.3} parent=230 // loop_body
                  %v1112 = vld [vmem:[%s1110] sm:%s1103]
                  %1113 = vst [vmem:[%s1111] sm:%s1103] %v1112
                $region236: #{custom-call.3} parent=230 // loop_footer
                  %s1109 = sadd.s32 1, %s1105
                $region237: #{custom-call.3} parent=230 // loop_footer_branch
                  %1104 = sbr.rel target = $region233
                $region238: #{custom-call.3} parent=230 // loop_exit
                  _
              $region231: #{custom-call.3} parent=215 // pred_fallthru
                _
            $region216: #{custom-call.3} parent=211 // pred_fallthru
              _
            // Predicated region
            $region217: #{custom-call.3} parent=211 // pred_check
              _
            $region218: #{custom-call.3} parent=211 // pred_check_branch
              %1087 = sbr.rel (0) target = $region220
            $region219: #{custom-call.3} parent=211 // pred_region
              %s1089 = ssub.s32 16, 1
              loop: start=0, step=1, limit=1
              $region221: #{custom-call.3} parent=219 // loop_pre_header
                _
              $region222: #{custom-call.3} parent=219 // loop_header
                %s1091 = sphi 0, %s1095
                %p1092 = scmp.ge.s32.totalorder %s1091, 1
                %s1096 = sphi %s1016, %s1016
                %s1097 = sphi %s1081, %s1081
              $region223: #{custom-call.3} parent=219 // loop_header_branch
                %1094 = sbr.rel (%p1092) target = $region227
              $region224: #{custom-call.3} parent=219 // loop_body
                %v1098 = vld [vmem:[%s1096] sm:%s1089]
                %1099 = vst [vmem:[%s1097] sm:%s1089] %v1098
              $region225: #{custom-call.3} parent=219 // loop_footer
                %s1095 = sadd.s32 1, %s1091
              $region226: #{custom-call.3} parent=219 // loop_footer_branch
                %1090 = sbr.rel target = $region222
              $region227: #{custom-call.3} parent=219 // loop_exit
                _
            $region220: #{custom-call.3} parent=211 // pred_fallthru
              _
          $region212: #{custom-call.3} parent=207 // pred_fallthru
            _
          %1114 = vnop
        $region208: #{custom-call.3} parent=155 // pred_fallthru
          _
        %1116 = vsyncadd %s1018, 0
        %s1117 = smul.addr %s26, 8
        %s1118 = scalar_lea.hbm %s6, %s1117
        %s1120 = sshll.u32 %s1021, 4
        %s1121 = int_to_ptr.vmem [resolvable:$true] %s1120
        %s1122 = sshll.u32 %s1118, 4
        %s1123 = int_to_ptr.hbm [resolvable:$true] %s1122
        %1125 = dma.vmem_to_hbm [thread:$0]  %s1121, 128, %s1123, %s1018
        %1127 = vsyncadd %s1023, 0
        %s1128 = smul.addr %s26, 8
        %s1129 = scalar_lea.hbm %s7, %s1128
        %s1131 = sshll.u32 %s1026, 4
        %s1132 = int_to_ptr.vmem [resolvable:$true] %s1131
        %s1133 = sshll.u32 %s1129, 4
        %s1134 = int_to_ptr.hbm [resolvable:$true] %s1133
        %1136 = dma.vmem_to_hbm [thread:$0]  %s1132, 128, %s1134, %s1023
        %1138 = vsyncadd %s1028, 0
        %s1139 = smul.addr %s26, 8
        %s1140 = scalar_lea.hbm %s8, %s1139
        %s1142 = sshll.u32 %s1031, 4
        %s1143 = int_to_ptr.vmem [resolvable:$true] %s1142
        %s1144 = sshll.u32 %s1140, 4
        %s1145 = int_to_ptr.hbm [resolvable:$true] %s1144
        %1147 = dma.vmem_to_hbm [thread:$0]  %s1143, 128, %s1145, %s1028
        %1149 = vsyncadd %s1033, 0
        %s1150 = smul.addr %s26, 8
        %s1151 = scalar_lea.hbm %s9, %s1150
        %s1153 = sshll.u32 %s1036, 4
        %s1154 = int_to_ptr.vmem [resolvable:$true] %s1153
        %s1155 = sshll.u32 %s1151, 4
        %s1156 = int_to_ptr.hbm [resolvable:$true] %s1155
        %1158 = dma.vmem_to_hbm [thread:$0]  %s1154, 128, %s1156, %s1033
      $region156: #{custom-call.3} parent=5 // pred_fallthru
        _
      %p1159 = scmp.le.s32.totalorder 2, %s21
      // Predicated region
      $region239: #{custom-call.3} parent=5 // pred_check
        %p1160 = pneg %p1159
      $region240: #{custom-call.3} parent=5 // pred_check_branch
        %1162 = sbr.rel (%p1160) target = $region242
      $region241: #{custom-call.3} parent=5 // pred_region
        %s1163 = ssub.s32 %s21, 2
        // Predicated region
        $region243: #{custom-call.3} parent=241 // pred_check
          %p1164 = pneg %p52
        $region244: #{custom-call.3} parent=241 // pred_check_branch
          %1166 = sbr.rel (%p1164) target = $region246
        $region245: #{custom-call.3} parent=241 // pred_region
          %s1167 = sand.u32 %s37, 1
          %s1168 = sand.u32 %s37, 1
          %s1169 = smul.addr %s1168, 4
          %s1170 = scalar_lea.vmem [#allocation5], %s1169
        $region246: #{custom-call.3} parent=241 // pred_fallthru
          _
        // Predicated region
        $region247: #{custom-call.3} parent=241 // pred_check
          %p1171 = pneg %p80
        $region248: #{custom-call.3} parent=241 // pred_check_branch
          %1173 = sbr.rel (%p1171) target = $region250
        $region249: #{custom-call.3} parent=241 // pred_region
          %s1174 = sand.u32 %s65, 1
          %s1175 = sand.u32 %s65, 1
          %s1176 = smul.addr %s1175, 4
          %s1177 = scalar_lea.vmem [#allocation7], %s1176
        $region250: #{custom-call.3} parent=241 // pred_fallthru
          _
        %s1178 = sand.u32 %s27, 1
        %s1179 = scalar_lea.sflag [#allocation9], %s1178
        %s1180 = sand.u32 %s27, 1
        %s1181 = smul.addr %s1180, 8
        %s1182 = scalar_lea.vmem [#allocation8], %s1181
        %1184 = dma.done %s1179, 128
        %s1185 = sand.u32 %s27, 1
        %s1186 = scalar_lea.sflag [#allocation11], %s1185
        %s1187 = sand.u32 %s27, 1
        %s1188 = smul.addr %s1187, 8
        %s1189 = scalar_lea.vmem [#allocation10], %s1188
        %1191 = dma.done %s1186, 128
        %s1192 = sand.u32 %s27, 1
        %s1193 = scalar_lea.sflag [#allocation11], %s1192
        %s1194 = sand.u32 %s27, 1
        %s1195 = smul.addr %s1194, 8
        %s1196 = scalar_lea.vmem [#allocation12], %s1195
        %1198 = dma.done %s1193, 128
        %s1199 = sand.u32 %s27, 1
        %s1200 = scalar_lea.sflag [#allocation14], %s1199
        %s1201 = sand.u32 %s27, 1
        %s1202 = smul.addr %s1201, 8
        %s1203 = scalar_lea.vmem [#allocation13], %s1202
        %1205 = dma.done %s1200, 128
      $region242: #{custom-call.3} parent=5 // pred_fallthru
        _
    $region6: #{custom-call.3} parent=1 // loop_footer
      %s25 = sadd.s32 1, %s21
    $region7: #{custom-call.3} parent=1 // loop_footer_branch
      %20 = sbr.rel target = $region3
    $region8: #{custom-call.3} parent=1 // loop_exit
      _
    %1206 = vsyncpa [#allocation9], 1
    %s1207 = scalar_lea.sflag [#allocation9], 1
    %1208 = vsyncpa %s1207, 1
    %1209 = vsyncpa [#allocation11], 1
    %s1210 = scalar_lea.sflag [#allocation11], 1
    %1211 = vsyncpa %s1210, 1
    %1212 = vsyncpa [#allocation14], 1
    %s1213 = scalar_lea.sflag [#allocation14], 1
    %1214 = vsyncpa %s1213, 1

// kernel: reverse
$region0: #{reverse}
  %s0 = inlined_call_operand.vmem [shape: f32[2,12], index: 0, kind: input, shape index: {}]
  %s1 = inlined_call_operand.vmem [shape: f32[2,12], index: 1, kind: output, shape index: {}]
  %v2 = vlaneseq
  %v3 = vsub.s32 11, %v2
  %4 = vset.pattern.permute.xlu0 %v3
  $region1: #{reverse} parent=0
    #allocation0 [shape = 'u8[4096]{0}', space=vmem, size = 0x1000, scoped, tag = 'operand span for operand 0']
    #allocation1 [shape = 'u8[1024]{0}', space=vmem, size = 0x400, scoped, tag = 'packed  for operand 0']
    #allocation2 [shape = 'u8[4096]{0}', space=vmem, size = 0x1000, scoped, tag = 'operand span for operand 1']
    #allocation3 [shape = 'u8[1024]{0}', space=vmem, size = 0x400, scoped, tag = 'packed  for operand 1']
    // Predicated region
    $region2: #{reverse} parent=1 // pred_check
      _
    $region3: #{reverse} parent=1 // pred_check_branch
      %6 = sbr.rel (0) target = $region5
    $region4: #{reverse} parent=1 // pred_region
      // Predicated region
      $region6: #{reverse} parent=4 // pred_check
        _
      $region7: #{reverse} parent=4 // pred_check_branch
        %8 = sbr.rel target = $region9
      $region8: #{reverse} parent=4 // pred_region
        // Predicated region
        $region21: #{reverse} parent=8 // pred_check
          _
        $region22: #{reverse} parent=8 // pred_check_branch
          %24 = sbr.rel (0) target = $region24
        $region23: #{reverse} parent=8 // pred_region
          %s26 = ssub.s32 4, 1
          loop: start=0, step=1, limit=1
          $region25: #{reverse} parent=23 // loop_pre_header
            _
          $region26: #{reverse} parent=23 // loop_header
            %s28 = sphi 0, %s32
            %p29 = scmp.ge.s32.totalorder %s28, 1
            %s33 = sphi %s0, %s0
            %s34 = sphi [#allocation1], [#allocation1]
          $region27: #{reverse} parent=23 // loop_header_branch
            %31 = sbr.rel (%p29) target = $region31
          $region28: #{reverse} parent=23 // loop_body
            %v35 = vld [vmem:[%s33] sm:%s26]
            %36 = vst [vmem:[%s34] sm:%s26] %v35
          $region29: #{reverse} parent=23 // loop_footer
            %s32 = sadd.s32 1, %s28
          $region30: #{reverse} parent=23 // loop_footer_branch
            %27 = sbr.rel target = $region26
          $region31: #{reverse} parent=23 // loop_exit
            _
        $region24: #{reverse} parent=8 // pred_fallthru
          _
      $region9: #{reverse} parent=4 // pred_fallthru
        _
      // Predicated region
      $region10: #{reverse} parent=4 // pred_check
        _
      $region11: #{reverse} parent=4 // pred_check_branch
        %10 = sbr.rel (0) target = $region13
      $region12: #{reverse} parent=4 // pred_region
        %s12 = ssub.s32 4, 1
        loop: start=0, step=1, limit=1
        $region14: #{reverse} parent=12 // loop_pre_header
          _
        $region15: #{reverse} parent=12 // loop_header
          %s14 = sphi 0, %s18
          %p15 = scmp.ge.s32.totalorder %s14, 1
          %s19 = sphi %s0, %s0
          %s20 = sphi [#allocation1], [#allocation1]
        $region16: #{reverse} parent=12 // loop_header_branch
          %17 = sbr.rel (%p15) target = $region20
        $region17: #{reverse} parent=12 // loop_body
          %v21 = vld [vmem:[%s19] sm:%s12]
          %22 = vst [vmem:[%s20] sm:%s12] %v21
        $region18: #{reverse} parent=12 // loop_footer
          %s18 = sadd.s32 1, %s14
        $region19: #{reverse} parent=12 // loop_footer_branch
          %13 = sbr.rel target = $region15
        $region20: #{reverse} parent=12 // loop_exit
          _
      $region13: #{reverse} parent=4 // pred_fallthru
        _
    $region5: #{reverse} parent=1 // pred_fallthru
      _
    %37 = vnop
    %s39 = ssub.s32 4, 1
    %v40 = vld [vmem:[#allocation1] sm:%s39]
    %41 = vst [vmem:[#allocation0] sm:%s39] %v40
    %v42 = vld [vmem:[#allocation0] sm:$0xff]
    %43 = vperm.xlu0 %4, %v42
    %v44 = vpop.permute.xlu0 %43
    %45 = vst [vmem:[#allocation2] sm:$0xff] %v44
    %s47 = ssub.s32 4, 1
    %v48 = vld [vmem:[#allocation2] sm:%s47]
    %s50 = ssub.s32 4, 1
    %51 = vst [vmem:[#allocation3] sm:%s50] %v48
    // Predicated region
    $region32: #{reverse} parent=1 // pred_check
      _
    $region33: #{reverse} parent=1 // pred_check_branch
      %53 = sbr.rel (0) target = $region35
    $region34: #{reverse} parent=1 // pred_region
      // Predicated region
      $region36: #{reverse} parent=34 // pred_check
        _
      $region37: #{reverse} parent=34 // pred_check_branch
        %55 = sbr.rel target = $region39
      $region38: #{reverse} parent=34 // pred_region
        // Predicated region
        $region51: #{reverse} parent=38 // pred_check
          _
        $region52: #{reverse} parent=38 // pred_check_branch
          %71 = sbr.rel (0) target = $region54
        $region53: #{reverse} parent=38 // pred_region
          %s73 = ssub.s32 4, 1
          loop: start=0, step=1, limit=1
          $region55: #{reverse} parent=53 // loop_pre_header
            _
          $region56: #{reverse} parent=53 // loop_header
            %s75 = sphi 0, %s79
            %p76 = scmp.ge.s32.totalorder %s75, 1
            %s80 = sphi [#allocation3], [#allocation3]
            %s81 = sphi %s1, %s1
          $region57: #{reverse} parent=53 // loop_header_branch
            %78 = sbr.rel (%p76) target = $region61
          $region58: #{reverse} parent=53 // loop_body
            %v82 = vld [vmem:[%s80] sm:%s73]
            %83 = vst [vmem:[%s81] sm:%s73] %v82
          $region59: #{reverse} parent=53 // loop_footer
            %s79 = sadd.s32 1, %s75
          $region60: #{reverse} parent=53 // loop_footer_branch
            %74 = sbr.rel target = $region56
          $region61: #{reverse} parent=53 // loop_exit
            _
        $region54: #{reverse} parent=38 // pred_fallthru
          _
      $region39: #{reverse} parent=34 // pred_fallthru
        _
      // Predicated region
      $region40: #{reverse} parent=34 // pred_check
        _
      $region41: #{reverse} parent=34 // pred_check_branch
        %57 = sbr.rel (0) target = $region43
      $region42: #{reverse} parent=34 // pred_region
        %s59 = ssub.s32 4, 1
        loop: start=0, step=1, limit=1
        $region44: #{reverse} parent=42 // loop_pre_header
          _
        $region45: #{reverse} parent=42 // loop_header
          %s61 = sphi 0, %s65
          %p62 = scmp.ge.s32.totalorder %s61, 1
          %s66 = sphi [#allocation3], [#allocation3]
          %s67 = sphi %s1, %s1
        $region46: #{reverse} parent=42 // loop_header_branch
          %64 = sbr.rel (%p62) target = $region50
        $region47: #{reverse} parent=42 // loop_body
          %v68 = vld [vmem:[%s66] sm:%s59]
          %69 = vst [vmem:[%s67] sm:%s59] %v68
        $region48: #{reverse} parent=42 // loop_footer
          %s65 = sadd.s32 1, %s61
        $region49: #{reverse} parent=42 // loop_footer_branch
          %60 = sbr.rel target = $region45
        $region50: #{reverse} parent=42 // loop_exit
          _
      $region43: #{reverse} parent=34 // pred_fallthru
        _
    $region35: #{reverse} parent=1 // pred_fallthru
      _
    %84 = vnop

// kernel: net_forward.7
$region0: #{net_forward.7}
  #allocation0 [shape = 'u32[]', space=smem, size = 0x4, offset = 0x4, fixed_abs, tag = 'smem constant byte address 0x4 - core index']
  #allocation1 [shape = 'u32[72,128]{1,0:T(1,128)}', space=vmem, size = 0x9000, scoped, tag = 'internal scratch']
  %s0 = inlined_call_operand.vmem [shape: f32[2,128,128], index: 0, kind: input, shape index: {}]
  %s1 = inlined_call_operand.vmem [shape: f32[2,128,32], index: 1, kind: input, shape index: {}]
  %s2 = inlined_call_operand.vmem [shape: f32[2,128,128], index: 2, kind: input, shape index: {}]
  %s3 = inlined_call_operand.hbm [shape: f32[2,128,128], index: 3, kind: output, shape index: {0}]
  %s4 = inlined_call_operand.vmem [shape: f32[2,128,128], index: 4, kind: output, shape index: {1}]
  %s5 = inlined_call_operand.vmem [shape: f32[2,128,32], index: 5, kind: output, shape index: {2}]
  %6 = xla_tuple %s3, %s4, %s5
  %s7 = sld [smem:[#allocation0]]
  $region61: #{net_forward.7} parent=0
    _
  %s9 = ssub.s32 1, %s7
  %s10 = scalar_select 0, %s9, %s7
  $region1: #{net_forward.7} parent=0
    #allocation2 [shape = 'u8[131072]{0}', space=vmem, size = 0x20000, scoped, tag = 'output window, operand 0']
    #allocation3 [shape = 's32[2]{0}', space=sflag, size = 0x8, scoped, tag = 'scoped memory for net_forward.7']
    %11 = vsyncpa [#allocation3], 0
    %s12 = scalar_lea.sflag [#allocation3], 1
    %13 = vsyncpa %s12, 0
    loop: start=0, step=1, limit=4
    $region2: #{net_forward.7} parent=1 // loop_pre_header
      _
    $region3: #{net_forward.7} parent=1 // loop_header
      %s15 = sphi 0, %s19
      %p16 = scmp.ge.s32.totalorder %s15, 4
      %s25 = sphi 0, %s27
      %s28 = sphi 0, %s25
      %s29 = sphi 0, %s28
      %s45 = sphi 0, %s29
      %s51 = sphi 0, %s53
      %s54 = sphi 0, %s51
      %s55 = sphi 0, %s54
      %s71 = sphi 0, %s55
      %s77 = sphi 0, %s79
      %s80 = sphi 0, %s77
      %s81 = sphi 0, %s80
      %s97 = sphi 0, %s81
      %s103 = sphi 0, %s105
      %s106 = sphi 0, %s103
      %s107 = sphi 0, %s106
      %s123 = sphi 0, %s107
      %s129 = sphi 0, %s131
      %s132 = sphi 0, %s129
      %s133 = sphi 0, %s132
      %s149 = sphi 0, %s133
      %s155 = sphi 0, %s157
      %s158 = sphi 0, %s155
      %s159 = sphi 0, %s158
      %s175 = sphi 0, %s159
    $region4: #{net_forward.7} parent=1 // loop_header_branch
      %18 = sbr.rel (%p16) target = $region8
    $region5: #{net_forward.7} parent=1 // loop_body
      %s20 = ssub.s32 %s15, 1
      %s21 = ssub.s32 %s15, 2
      %s22 = sadd.s32 %s15, 1
      %s23 = ssub.s32 %s15, %s22
      %p24 = scmp.eq.s32.totalorder %s23, 0
      %s26 = sadd.s32 %s25, 1
      %s27 = scalar_select %p24, %s25, %s26
      %p30 = pneg %p24
      %p31 = scmp.eq.s32.totalorder %s15, 1
      %p32 = por %p30, %p31
      %p33 = scmp.ne.s32.totalorder %s25, %s28
      %p34 = scmp.eq.s32.totalorder %s15, 0
      %p35 = por %p33, %p34
      %p36 = scmp.ne.s32.totalorder %s25, %s28
      %p37 = scmp.eq.s32.totalorder %s20, 1
      %p38 = por %p36, %p37
      %p39 = scmp.ne.s32.totalorder %s28, %s29
      %p40 = scmp.eq.s32.totalorder %s20, 0
      %p41 = por %p39, %p40
      %p42 = scmp.ne.s32.totalorder %s28, %s29
      %p43 = scmp.eq.s32.totalorder %s21, 1
      %p44 = por %p42, %p43
      %p46 = scmp.ne.s32.totalorder %s29, %s45
      %p47 = scmp.eq.s32.totalorder %s21, 0
      %p48 = por %p46, %p47
      %s49 = ssub.s32 %s15, %s22
      %p50 = scmp.eq.s32.totalorder %s49, 0
      %s52 = sadd.s32 %s51, 1
      %s53 = scalar_select %p50, %s51, %s52
      %p56 = pneg %p50
      %p57 = scmp.eq.s32.totalorder %s15, 1
      %p58 = por %p56, %p57
      %p59 = scmp.ne.s32.totalorder %s51, %s54
      %p60 = scmp.eq.s32.totalorder %s15, 0
      %p61 = por %p59, %p60
      %p62 = scmp.ne.s32.totalorder %s51, %s54
      %p63 = scmp.eq.s32.totalorder %s20, 1
      %p64 = por %p62, %p63
      %p65 = scmp.ne.s32.totalorder %s54, %s55
      %p66 = scmp.eq.s32.totalorder %s20, 0
      %p67 = por %p65, %p66
      %p68 = scmp.ne.s32.totalorder %s54, %s55
      %p69 = scmp.eq.s32.totalorder %s21, 1
      %p70 = por %p68, %p69
      %p72 = scmp.ne.s32.totalorder %s55, %s71
      %p73 = scmp.eq.s32.totalorder %s21, 0
      %p74 = por %p72, %p73
      %s75 = ssub.s32 %s15, %s22
      %p76 = scmp.eq.s32.totalorder %s75, 0
      %s78 = sadd.s32 %s77, 1
      %s79 = scalar_select %p76, %s77, %s78
      %p82 = pneg %p76
      %p83 = scmp.eq.s32.totalorder %s15, 1
      %p84 = por %p82, %p83
      %p85 = scmp.ne.s32.totalorder %s77, %s80
      %p86 = scmp.eq.s32.totalorder %s15, 0
      %p87 = por %p85, %p86
      %p88 = scmp.ne.s32.totalorder %s77, %s80
      %p89 = scmp.eq.s32.totalorder %s20, 1
      %p90 = por %p88, %p89
      %p91 = scmp.ne.s32.totalorder %s80, %s81
      %p92 = scmp.eq.s32.totalorder %s20, 0
      %p93 = por %p91, %p92
      %p94 = scmp.ne.s32.totalorder %s80, %s81
      %p95 = scmp.eq.s32.totalorder %s21, 1
      %p96 = por %p94, %p95
      %p98 = scmp.ne.s32.totalorder %s81, %s97
      %p99 = scmp.eq.s32.totalorder %s21, 0
      %p100 = por %p98, %p99
      %s101 = ssub.s32 %s15, %s22
      %p102 = scmp.eq.s32.totalorder %s101, 0
      %s104 = sadd.s32 %s103, 1
      %s105 = scalar_select %p102, %s103, %s104
      %p108 = pneg %p102
      %p109 = scmp.eq.s32.totalorder %s15, 1
      %p110 = por %p108, %p109
      %p111 = scmp.ne.s32.totalorder %s103, %s106
      %p112 = scmp.eq.s32.totalorder %s15, 0
      %p113 = por %p111, %p112
      %p114 = scmp.ne.s32.totalorder %s103, %s106
      %p115 = scmp.eq.s32.totalorder %s20, 1
      %p116 = por %p114, %p115
      %p117 = scmp.ne.s32.totalorder %s106, %s107
      %p118 = scmp.eq.s32.totalorder %s20, 0
      %p119 = por %p117, %p118
      %p120 = scmp.ne.s32.totalorder %s106, %s107
      %p121 = scmp.eq.s32.totalorder %s21, 1
      %p122 = por %p120, %p121
      %p124 = scmp.ne.s32.totalorder %s107, %s123
      %p125 = scmp.eq.s32.totalorder %s21, 0
      %p126 = por %p124, %p125
      %s127 = ssub.s32 %s15, %s22
      %p128 = scmp.eq.s32.totalorder %s127, 0
      %s130 = sadd.s32 %s129, 1
      %s131 = scalar_select %p128, %s129, %s130
      %p134 = pneg %p128
      %p135 = scmp.eq.s32.totalorder %s15, 1
      %p136 = por %p134, %p135
      %p137 = scmp.ne.s32.totalorder %s129, %s132
      %p138 = scmp.eq.s32.totalorder %s15, 0
      %p139 = por %p137, %p138
      %p140 = scmp.ne.s32.totalorder %s129, %s132
      %p141 = scmp.eq.s32.totalorder %s20, 1
      %p142 = por %p140, %p141
      %p143 = scmp.ne.s32.totalorder %s132, %s133
      %p144 = scmp.eq.s32.totalorder %s20, 0
      %p145 = por %p143, %p144
      %p146 = scmp.ne.s32.totalorder %s132, %s133
      %p147 = scmp.eq.s32.totalorder %s21, 1
      %p148 = por %p146, %p147
      %p150 = scmp.ne.s32.totalorder %s133, %s149
      %p151 = scmp.eq.s32.totalorder %s21, 0
      %p152 = por %p150, %p151
      %s153 = ssub.s32 %s15, %s22
      %p154 = scmp.eq.s32.totalorder %s153, 0
      %s156 = sadd.s32 %s155, 1
      %s157 = scalar_select %p154, %s155, %s156
      %p160 = pneg %p154
      %p161 = scmp.eq.s32.totalorder %s15, 1
      %p162 = por %p160, %p161
      %p163 = scmp.ne.s32.totalorder %s155, %s158
      %p164 = scmp.eq.s32.totalorder %s15, 0
      %p165 = por %p163, %p164
      %p166 = scmp.ne.s32.totalorder %s155, %s158
      %p167 = scmp.eq.s32.totalorder %s20, 1
      %p168 = por %p166, %p167
      %p169 = scmp.ne.s32.totalorder %s158, %s159
      %p170 = scmp.eq.s32.totalorder %s20, 0
      %p171 = por %p169, %p170
      %p172 = scmp.ne.s32.totalorder %s158, %s159
      %p173 = scmp.eq.s32.totalorder %s21, 1
      %p174 = por %p172, %p173
      %p176 = scmp.ne.s32.totalorder %s159, %s175
      %p177 = scmp.eq.s32.totalorder %s21, 0
      %p178 = por %p176, %p177
      %p179 = scmp.le.s32.totalorder 1, %s15
      %p180 = scmp.lt.s32.totalorder %s15, 3
      %p181 = pnand %p179, %p180
      %p182 = pneg %p181
      // Predicated region
      $region9: #{net_forward.7} parent=5 // pred_check
        _
      $region10: #{net_forward.7} parent=5 // pred_check_branch
        %184 = sbr.rel (%p181) target = $region12
      $region11: #{net_forward.7} parent=5 // pred_region
        %s185 = ssub.s32 %s15, 1
      $region12: #{net_forward.7} parent=5 // pred_fallthru
        _
      %p186 = scmp.lt.s32.totalorder %s15, 2
      // Predicated region
      $region13: #{net_forward.7} parent=5 // pred_check
        %p187 = pneg %p186
      $region14: #{net_forward.7} parent=5 // pred_check_branch
        %189 = sbr.rel (%p187) target = $region16
      $region15: #{net_forward.7} parent=5 // pred_region
        // Predicated region
        $region17: #{net_forward.7} parent=15 // pred_check
          %p190 = pneg %p35
        $region18: #{net_forward.7} parent=15 // pred_check_branch
          %192 = sbr.rel (%p190) target = $region20
        $region19: #{net_forward.7} parent=15 // pred_region
          %p193 = scmp.lt.s32.totalorder %s15, 1
          %s194 = scalar_select %p193, %s15, 1
          %s195 = smul.addr %s194, 16
          %s196 = smul.addr %s195, 8
          %s197 = scalar_lea.vmem %s0, %s196
        $region20: #{net_forward.7} parent=15 // pred_fallthru
          _
        // Predicated region
        $region21: #{net_forward.7} parent=15 // pred_check
          %p198 = pneg %p61
        $region22: #{net_forward.7} parent=15 // pred_check_branch
          %200 = sbr.rel (%p198) target = $region24
        $region23: #{net_forward.7} parent=15 // pred_region
          %p201 = scmp.lt.s32.totalorder %s15, 1
          %s202 = scalar_select %p201, %s15, 1
          %s203 = smul.addr %s202, 16
          %s204 = smul.addr %s203, 8
          %s205 = scalar_lea.vmem %s1, %s204
        $region24: #{net_forward.7} parent=15 // pred_fallthru
          _
        // Predicated region
        $region25: #{net_forward.7} parent=15 // pred_check
          %p206 = pneg %p87
        $region26: #{net_forward.7} parent=15 // pred_check_branch
          %208 = sbr.rel (%p206) target = $region28
        $region27: #{net_forward.7} parent=15 // pred_region
          %p209 = scmp.lt.s32.totalorder %s15, 1
          %s210 = scalar_select %p209, %s15, 1
          %s211 = smul.addr %s210, 16
          %s212 = smul.addr %s211, 8
          %s213 = scalar_lea.vmem %s2, %s212
        $region28: #{net_forward.7} parent=15 // pred_fallthru
          _
      $region16: #{net_forward.7} parent=5 // pred_fallthru
        _
      %p214 = scmp.le.s32.totalorder 1, %s15
      %p215 = scmp.lt.s32.totalorder %s15, 3
      %p216 = pnand %p214, %p215
      %p217 = pneg %p216
      // Predicated region
      $region29: #{net_forward.7} parent=5 // pred_check
        _
      $region30: #{net_forward.7} parent=5 // pred_check_branch
        %219 = sbr.rel (%p216) target = $region32
      $region31: #{net_forward.7} parent=5 // pred_region
        %s220 = ssub.s32 %s15, 1
        %p221 = scmp.lt.s32.totalorder %s20, 1
        %s222 = scalar_select %p221, %s20, 1
        %s223 = smul.addr %s222, 16
        %s224 = smul.addr %s223, 8
        %s225 = scalar_lea.vmem %s0, %s224
        %p226 = pneg %p41
        %p227 = pneg %p38
        %p228 = scmp.lt.s32.totalorder %s20, 1
        %s229 = scalar_select %p228, %s20, 1
        %s230 = smul.addr %s229, 16
        %s231 = smul.addr %s230, 8
        %s232 = scalar_lea.vmem %s1, %s231
        %p233 = pneg %p67
        %p234 = pneg %p64
        %p235 = scmp.lt.s32.totalorder %s20, 1
        %s236 = scalar_select %p235, %s20, 1
        %s237 = smul.addr %s236, 16
        %s238 = smul.addr %s237, 8
        %s239 = scalar_lea.vmem %s2, %s238
        %p240 = pneg %p93
        %p241 = pneg %p90
        %p242 = pneg %p119
        %p243 = pneg %p116
        %s244 = sand.u32 %s106, 1
        %s245 = scalar_lea.sflag [#allocation3], %s244
        %s246 = sand.u32 %s106, 1
        %s247 = smul.addr %s246, 128
        %s248 = scalar_lea.vmem [#allocation2], %s247
        %p249 = pneg %p145
        %p250 = pneg %p142
        %p251 = scmp.lt.s32.totalorder %s20, 1
        %s252 = scalar_select %p251, %s20, 1
        %s253 = smul.addr %s252, 16
        %s254 = smul.addr %s253, 8
        %s255 = scalar_lea.vmem %s4, %s254
        %p256 = pneg %p171
        %p257 = pneg %p168
        %p258 = scmp.lt.s32.totalorder %s20, 1
        %s259 = scalar_select %p258, %s20, 1
        %s260 = smul.addr %s259, 16
        %s261 = smul.addr %s260, 8
        %s262 = scalar_lea.vmem %s5, %s261
        %p263 = scmp.lt.s32.totalorder %s20, 1
        %s264 = scalar_select %p263, %s20, 1
        %s265 = smul.addr %s264, 16
        %s266 = smul.addr %s265, 8
        %s267 = scalar_lea.vmem %s0, %s266
        %p268 = scmp.lt.s32.totalorder %s20, 1
        %s269 = scalar_select %p268, %s20, 1
        %s270 = smul.addr %s269, 16
        %s271 = smul.addr %s270, 8
        %s272 = scalar_lea.vmem %s1, %s271
        %p273 = scmp.lt.s32.totalorder %s20, 1
        %s274 = scalar_select %p273, %s20, 1
        %s275 = smul.addr %s274, 16
        %s276 = smul.addr %s275, 8
        %s277 = scalar_lea.vmem %s2, %s276
        %p278 = scmp.lt.s32.totalorder %s20, 1
        %s279 = scalar_select %p278, %s20, 1
        %s280 = smul.addr %s279, 16
        %s281 = smul.addr %s280, 8
        %s282 = scalar_lea.vmem %s4, %s281
        %p283 = scmp.lt.s32.totalorder %s20, 1
        %s284 = scalar_select %p283, %s20, 1
        %s285 = smul.addr %s284, 16
        %s286 = smul.addr %s285, 8
        %s287 = scalar_lea.vmem %s5, %s286
        %v288 = vld [vmem:[%s267] sm:$0xff]
        %v289 = vld [vmem:[%s267 + $0x8] sm:$0xff]
        %v290 = vld [vmem:[%s267 + $0x10] sm:$0xff]
        %v291 = vld [vmem:[%s267 + $0x18] sm:$0xff]
        %v292 = vld [vmem:[%s267 + $0x20] sm:$0xff]
        %v293 = vld [vmem:[%s267 + $0x28] sm:$0xff]
        %v294 = vld [vmem:[%s267 + $0x30] sm:$0xff]
        %v295 = vld [vmem:[%s267 + $0x38] sm:$0xff]
        %v296 = vld [vmem:[%s267 + $0x40] sm:$0xff]
        %v297 = vld [vmem:[%s267 + $0x48] sm:$0xff]
        %v298 = vld [vmem:[%s267 + $0x50] sm:$0xff]
        %v299 = vld [vmem:[%s267 + $0x58] sm:$0xff]
        %v300 = vld [vmem:[%s267 + $0x60] sm:$0xff]
        %v301 = vld [vmem:[%s267 + $0x68] sm:$0xff]
        %v302 = vld [vmem:[%s267 + $0x70] sm:$0xff]
        %v303 = vld [vmem:[%s267 + $0x78] sm:$0xff]
        %v304 = vld [vmem:[%s277] sm:$0xff]
        %v305 = vld [vmem:[%s277 + $0x8] sm:$0xff]
        %v306 = vld [vmem:[%s277 + $0x10] sm:$0xff]
        %v307 = vld [vmem:[%s277 + $0x18] sm:$0xff]
        %v308 = vld [vmem:[%s277 + $0x20] sm:$0xff]
        %v309 = vld [vmem:[%s277 + $0x28] sm:$0xff]
        %v310 = vld [vmem:[%s277 + $0x30] sm:$0xff]
        %v311 = vld [vmem:[%s277 + $0x38] sm:$0xff]
        %v312 = vld [vmem:[%s277 + $0x40] sm:$0xff]
        %v313 = vld [vmem:[%s277 + $0x48] sm:$0xff]
        %v314 = vld [vmem:[%s277 + $0x50] sm:$0xff]
        %v315 = vld [vmem:[%s277 + $0x58] sm:$0xff]
        %v316 = vld [vmem:[%s277 + $0x60] sm:$0xff]
        %v317 = vld [vmem:[%s277 + $0x68] sm:$0xff]
        %v318 = vld [vmem:[%s277 + $0x70] sm:$0xff]
        %v319 = vld [vmem:[%s277 + $0x78] sm:$0xff]
        %320 = vxpose.xlu0.b32.start [1/16] %v304, 128
        %321 = vxpose.xlu0.b32.cont [2/16] %v305, 128
        %322 = vxpose.xlu0.b32.cont [3/16] %v306, 128
        %323 = vxpose.xlu0.b32.cont [4/16] %v307, 128
        %324 = vxpose.xlu0.b32.cont [5/16] %v308, 128
        %325 = vxpose.xlu0.b32.cont [6/16] %v309, 128
        %326 = vxpose.xlu0.b32.cont [7/16] %v310, 128
        %327 = vxpose.xlu0.b32.cont [8/16] %v311, 128
        %328 = vxpose.xlu0.b32.cont [9/16] %v312, 128
        %329 = vxpose.xlu0.b32.cont [10/16] %v313, 128
        %330 = vxpose.xlu0.b32.cont [11/16] %v314, 128
        %331 = vxpose.xlu0.b32.cont [12/16] %v315, 128
        %332 = vxpose.xlu0.b32.cont [13/16] %v316, 128
        %333 = vxpose.xlu0.b32.cont [14/16] %v317, 128
        %334 = vxpose.xlu0.b32.cont [15/16] %v318, 128
        %335 = vxpose.xlu0.b32.end [16/16] %v319, 128
        %v336 = vpop.trf.xlu0
        %v337 = vpop.trf.xlu0
        %v338 = vpop.trf.xlu0
        %v339 = vpop.trf.xlu0
        %v340 = vpop.trf.xlu0
        %v341 = vpop.trf.xlu0
        %v342 = vpop.trf.xlu0
        %v343 = vpop.trf.xlu0
        %v344 = vpop.trf.xlu0
        %v345 = vpop.trf.xlu0
        %v346 = vpop.trf.xlu0
        %v347 = vpop.trf.xlu0
        %v348 = vpop.trf.xlu0
        %v349 = vpop.trf.xlu0
        %v350 = vpop.trf.xlu0
        %v351 = vpop.trf.xlu0
        %352 = vmatpush.msra.mxu0 %v319
        %353 = vmatpush.msra.mxu0 %v318
        %354 = vmatpush.msra.mxu0 %v317
        %355 = vmatpush.msra.mxu0 %v316
        %356 = vmatpush.msra.mxu0 %v315
        %357 = vmatpush.msra.mxu0 %v314
        %358 = vmatpush.msra.mxu0 %v313
        %359 = vmatpush.msra.mxu0 %v312
        %360 = vmatpush.msra.mxu0 %v311
        %361 = vmatpush.msra.mxu0 %v310
        %362 = vmatpush.msra.mxu0 %v309
        %363 = vmatpush.msra.mxu0 %v308
        %364 = vmatpush.msra.mxu0 %v307
        %365 = vmatpush.msra.mxu0 %v306
        %366 = vmatpush.msra.mxu0 %v305
        %367 = vmatpush.msra.mxu0 %v304
        %368 = vmatmul.f32.gmra.mxu0 %v288
        %v369 = vpop.f32.mrf.mxu0
        %v370 = vadd.f32 0.0, %v369
        %371 = vmatmul.f32.gmra.mxu0 %v289
        %v372 = vpop.f32.mrf.mxu0
        %v373 = vadd.f32 0.0, %v372
        %374 = vmatmul.f32.gmra.mxu0 %v290
        %v375 = vpop.f32.mrf.mxu0
        %v376 = vadd.f32 0.0, %v375
        %377 = vmatmul.f32.gmra.mxu0 %v291
        %v378 = vpop.f32.mrf.mxu0
        %v379 = vadd.f32 0.0, %v378
        %380 = vmatmul.f32.gmra.mxu0 %v292
        %v381 = vpop.f32.mrf.mxu0
        %v382 = vadd.f32 0.0, %v381
        %383 = vmatmul.f32.gmra.mxu0 %v293
        %v384 = vpop.f32.mrf.mxu0
        %v385 = vadd.f32 0.0, %v384
        %386 = vmatmul.f32.gmra.mxu0 %v294
        %v387 = vpop.f32.mrf.mxu0
        %v388 = vadd.f32 0.0, %v387
        %389 = vmatmul.f32.gmra.mxu0 %v295
        %v390 = vpop.f32.mrf.mxu0
        %v391 = vadd.f32 0.0, %v390
        %392 = vmatmul.f32.gmra.mxu0 %v296
        %v393 = vpop.f32.mrf.mxu0
        %v394 = vadd.f32 0.0, %v393
        %395 = vmatmul.f32.gmra.mxu0 %v297
        %v396 = vpop.f32.mrf.mxu0
        %v397 = vadd.f32 0.0, %v396
        %398 = vmatmul.f32.gmra.mxu0 %v298
        %v399 = vpop.f32.mrf.mxu0
        %v400 = vadd.f32 0.0, %v399
        %401 = vmatmul.f32.gmra.mxu0 %v299
        %v402 = vpop.f32.mrf.mxu0
        %v403 = vadd.f32 0.0, %v402
        %404 = vmatmul.f32.gmra.mxu0 %v300
        %v405 = vpop.f32.mrf.mxu0
        %v406 = vadd.f32 0.0, %v405
        %407 = vmatmul.f32.gmra.mxu0 %v301
        %v408 = vpop.f32.mrf.mxu0
        %v409 = vadd.f32 0.0, %v408
        %410 = vmatmul.f32.gmra.mxu0 %v302
        %v411 = vpop.f32.mrf.mxu0
        %v412 = vadd.f32 0.0, %v411
        %413 = vmatmul.f32.gmra.mxu0 %v303
        %v414 = vpop.f32.mrf.mxu0
        %v415 = vadd.f32 0.0, %v414
        %416 = vdwg.mxu0
        %417 = vmatpush.msra.mxu0 %v415
        %418 = vmatpush.msra.mxu0 %v412
        %419 = vmatpush.msra.mxu0 %v409
        %420 = vmatpush.msra.mxu0 %v406
        %421 = vmatpush.msra.mxu0 %v403
        %422 = vmatpush.msra.mxu0 %v400
        %423 = vmatpush.msra.mxu0 %v397
        %424 = vmatpush.msra.mxu0 %v394
        %425 = vmatpush.msra.mxu0 %v391
        %426 = vmatpush.msra.mxu0 %v388
        %427 = vmatpush.msra.mxu0 %v385
        %428 = vmatpush.msra.mxu0 %v382
        %429 = vmatpush.msra.mxu0 %v379
        %430 = vmatpush.msra.mxu0 %v376
        %431 = vmatpush.msra.mxu0 %v373
        %432 = vmatpush.msra.mxu0 %v370
        %433 = vmatmul.f32.gmra.mxu0 %v336
        %v434 = vpop.f32.mrf.mxu0
        %v435 = vadd.f32 0.0, %v434
        %436 = vmatmul.f32.gmra.mxu0 %v337
        %v437 = vpop.f32.mrf.mxu0
        %v438 = vadd.f32 0.0, %v437
        %439 = vmatmul.f32.gmra.mxu0 %v338
        %v440 = vpop.f32.mrf.mxu0
        %v441 = vadd.f32 0.0, %v440
        %442 = vmatmul.f32.gmra.mxu0 %v339
        %v443 = vpop.f32.mrf.mxu0
        %v444 = vadd.f32 0.0, %v443
        %445 = vmatmul.f32.gmra.mxu0 %v340
        %v446 = vpop.f32.mrf.mxu0
        %v447 = vadd.f32 0.0, %v446
        %448 = vmatmul.f32.gmra.mxu0 %v341
        %v449 = vpop.f32.mrf.mxu0
        %v450 = vadd.f32 0.0, %v449
        %451 = vmatmul.f32.gmra.mxu0 %v342
        %v452 = vpop.f32.mrf.mxu0
        %v453 = vadd.f32 0.0, %v452
        %454 = vmatmul.f32.gmra.mxu0 %v343
        %v455 = vpop.f32.mrf.mxu0
        %v456 = vadd.f32 0.0, %v455
        %457 = vmatmul.f32.gmra.mxu0 %v344
        %v458 = vpop.f32.mrf.mxu0
        %v459 = vadd.f32 0.0, %v458
        %460 = vmatmul.f32.gmra.mxu0 %v345
        %v461 = vpop.f32.mrf.mxu0
        %v462 = vadd.f32 0.0, %v461
        %463 = vmatmul.f32.gmra.mxu0 %v346
        %v464 = vpop.f32.mrf.mxu0
        %v465 = vadd.f32 0.0, %v464
        %466 = vmatmul.f32.gmra.mxu0 %v347
        %v467 = vpop.f32.mrf.mxu0
        %v468 = vadd.f32 0.0, %v467
        %469 = vmatmul.f32.gmra.mxu0 %v348
        %v470 = vpop.f32.mrf.mxu0
        %v471 = vadd.f32 0.0, %v470
        %472 = vmatmul.f32.gmra.mxu0 %v349
        %v473 = vpop.f32.mrf.mxu0
        %v474 = vadd.f32 0.0, %v473
        %475 = vmatmul.f32.gmra.mxu0 %v350
        %v476 = vpop.f32.mrf.mxu0
        %v477 = vadd.f32 0.0, %v476
        %478 = vmatmul.f32.gmra.mxu0 %v351
        %v479 = vpop.f32.mrf.mxu0
        %v480 = vadd.f32 0.0, %v479
        %481 = vdwg.mxu0
        %v482 = vlaneseq
        %v483 = vshrl.u32 %v482, 7
        %v484 = vadd.s32 %v483, 8
        %v485 = vadd.s32 %v483, 16
        %v486 = vadd.s32 %v483, 24
        %v487 = vadd.s32 %v483, 32
        %v488 = vadd.s32 %v483, 40
        %v489 = vadd.s32 %v483, 48
        %v490 = vadd.s32 %v483, 56
        %v491 = vadd.s32 %v483, 64
        %v492 = vadd.s32 %v483, 72
        %v493 = vadd.s32 %v483, 80
        %v494 = vadd.s32 %v483, 88
        %v495 = vadd.s32 %v483, 96
        %v496 = vadd.s32 %v483, 104
        %v497 = vadd.s32 %v483, 112
        %v498 = vadd.s32 %v483, 120
        %v499 = vlaneseq
        %v500 = vand.u32 %v499, 127
        %vm501 = vcmp.eq.s32.totalorder %v483, %v500
        %vm502 = vcmp.eq.s32.totalorder %v484, %v500
        %vm503 = vcmp.eq.s32.totalorder %v485, %v500
        %vm504 = vcmp.eq.s32.totalorder %v486, %v500
        %vm505 = vcmp.eq.s32.totalorder %v487, %v500
        %vm506 = vcmp.eq.s32.totalorder %v488, %v500
        %vm507 = vcmp.eq.s32.totalorder %v489, %v500
        %vm508 = vcmp.eq.s32.totalorder %v490, %v500
        %vm509 = vcmp.eq.s32.totalorder %v491, %v500
        %vm510 = vcmp.eq.s32.totalorder %v492, %v500
        %vm511 = vcmp.eq.s32.totalorder %v493, %v500
        %vm512 = vcmp.eq.s32.totalorder %v494, %v500
        %vm513 = vcmp.eq.s32.totalorder %v495, %v500
        %vm514 = vcmp.eq.s32.totalorder %v496, %v500
        %vm515 = vcmp.eq.s32.totalorder %v497, %v500
        %vm516 = vcmp.eq.s32.totalorder %v498, %v500
        %v517 = vsel %vm501, 0.0, %v435
        %v518 = vsel %vm502, 0.0, %v438
        %v519 = vsel %vm503, 0.0, %v441
        %v520 = vsel %vm504, 0.0, %v444
        %v521 = vsel %vm505, 0.0, %v447
        %v522 = vsel %vm506, 0.0, %v450
        %v523 = vsel %vm507, 0.0, %v453
        %v524 = vsel %vm508, 0.0, %v456
        %v525 = vsel %vm509, 0.0, %v459
        %v526 = vsel %vm510, 0.0, %v462
        %v527 = vsel %vm511, 0.0, %v465
        %v528 = vsel %vm512, 0.0, %v468
        %v529 = vsel %vm513, 0.0, %v471
        %v530 = vsel %vm514, 0.0, %v474
        %v531 = vsel %vm515, 0.0, %v477
        %v532 = vsel %vm516, 0.0, %v480
        %533 = vst [vmem:[%s248] sm:$0xff] %v517
        %534 = vst [vmem:[%s248 + $0x8] sm:$0xff] %v518
        %535 = vst [vmem:[%s248 + $0x10] sm:$0xff] %v519
        %536 = vst [vmem:[%s248 + $0x18] sm:$0xff] %v520
        %537 = vst [vmem:[%s248 + $0x20] sm:$0xff] %v521
        %538 = vst [vmem:[%s248 + $0x28] sm:$0xff] %v522
        %539 = vst [vmem:[%s248 + $0x30] sm:$0xff] %v523
        %540 = vst [vmem:[%s248 + $0x38] sm:$0xff] %v524
        %541 = vst [vmem:[%s248 + $0x40] sm:$0xff] %v525
        %542 = vst [vmem:[%s248 + $0x48] sm:$0xff] %v526
        %543 = vst [vmem:[%s248 + $0x50] sm:$0xff] %v527
        %544 = vst [vmem:[%s248 + $0x58] sm:$0xff] %v528
        %545 = vst [vmem:[%s248 + $0x60] sm:$0xff] %v529
        %546 = vst [vmem:[%s248 + $0x68] sm:$0xff] %v530
        %547 = vst [vmem:[%s248 + $0x70] sm:$0xff] %v531
        %548 = vst [vmem:[%s248 + $0x78] sm:$0xff] %v532
        %v549 = vadd.f32 %v304, %v305
        %v550 = vadd.f32 %v549, %v306
        %v551 = vadd.f32 %v550, %v307
        %v552 = vadd.f32 %v551, %v308
        %v553 = vadd.f32 %v552, %v309
        %v554 = vadd.f32 %v553, %v310
        %v555 = vadd.f32 %v554, %v311
        %v556 = vadd.f32 %v555, %v312
        %v557 = vadd.f32 %v556, %v313
        %v558 = vadd.f32 %v557, %v314
        %v559 = vadd.f32 %v558, %v315
        %v560 = vadd.f32 %v559, %v316
        %v561 = vadd.f32 %v560, %v317
        %v562 = vadd.f32 %v561, %v318
        %v563 = vadd.f32 %v562, %v319
        %v564 = vrot.slane %v563, 4
        %v565 = vadd.f32 %v563, %v564
        %v566 = vrot.slane %v565, 2
        %v567 = vadd.f32 %v565, %v566
        %v568 = vrot.slane %v567, 1
        %v569 = vadd.f32 %v567, %v568
        %vm570 = vcmp.gt.f32.partialorder %v569, 0.0
        %v571 = vsel %vm570, %v569, 1.0
        %v572 = vrcp.pop %v571
        %v573 = vmul.f32 %v571, %v572
        %v574 = vsub.f32 1.0, %v573
        %v575 = vmul.f32 %v572, %v574
        %v576 = vadd.f32 %v572, %v575
        %vm577 = vweird.f32 %v571
        %vm578 = vweird.f32 %v572
        %vm579 = vmor %vm577, %vm578
        %v580 = vsel %vm579, %v572, %v576
        %v581 = vand.u32 2147483647, %v571
        %vm582 = vcmp.eq.f32.partialorder %v581, 8.507059e+37
        %v583 = vand.u32 %v571, 2147483648
        %v584 = vor.u32 1.1754944e-38, %v583
        %v585 = vsel %vm582, %v584, %v580
        %v586 = vmul.f32 1.0, %v585
        %v587 = vmul.f32 %v304, %v586
        %v588 = vmul.f32 %v305, %v586
        %v589 = vmul.f32 %v306, %v586
        %v590 = vmul.f32 %v307, %v586
        %v591 = vmul.f32 %v308, %v586
        %v592 = vmul.f32 %v309, %v586
        %v593 = vmul.f32 %v310, %v586
        %v594 = vmul.f32 %v311, %v586
        %v595 = vmul.f32 %v312, %v586
        %v596 = vmul.f32 %v313, %v586
        %v597 = vmul.f32 %v314, %v586
        %v598 = vmul.f32 %v315, %v586
        %v599 = vmul.f32 %v316, %v586
        %v600 = vmul.f32 %v317, %v586
        %v601 = vmul.f32 %v318, %v586
        %v602 = vmul.f32 %v319, %v586
        %603 = vmatpush.msra.mxu0 %v532
        %604 = vmatpush.msra.mxu0 %v531
        %605 = vmatpush.msra.mxu0 %v530
        %606 = vmatpush.msra.mxu0 %v529
        %607 = vmatpush.msra.mxu0 %v528
        %608 = vmatpush.msra.mxu0 %v527
        %609 = vmatpush.msra.mxu0 %v526
        %610 = vmatpush.msra.mxu0 %v525
        %611 = vmatpush.msra.mxu0 %v524
        %612 = vmatpush.msra.mxu0 %v523
        %613 = vmatpush.msra.mxu0 %v522
        %614 = vmatpush.msra.mxu0 %v521
        %615 = vmatpush.msra.mxu0 %v520
        %616 = vmatpush.msra.mxu0 %v519
        %617 = vmatpush.msra.mxu0 %v518
        %618 = vmatpush.msra.mxu0 %v517
        %619 = vmatmul.f32.gmra.mxu0 %v587
        %v620 = vpop.f32.mrf.mxu0
        %v621 = vadd.f32 0.0, %v620
        %622 = vmatmul.f32.gmra.mxu0 %v588
        %v623 = vpop.f32.mrf.mxu0
        %v624 = vadd.f32 0.0, %v623
        %625 = vmatmul.f32.gmra.mxu0 %v589
        %v626 = vpop.f32.mrf.mxu0
        %v627 = vadd.f32 0.0, %v626
        %628 = vmatmul.f32.gmra.mxu0 %v590
        %v629 = vpop.f32.mrf.mxu0
        %v630 = vadd.f32 0.0, %v629
        %631 = vmatmul.f32.gmra.mxu0 %v591
        %v632 = vpop.f32.mrf.mxu0
        %v633 = vadd.f32 0.0, %v632
        %634 = vmatmul.f32.gmra.mxu0 %v592
        %v635 = vpop.f32.mrf.mxu0
        %v636 = vadd.f32 0.0, %v635
        %637 = vmatmul.f32.gmra.mxu0 %v593
        %v638 = vpop.f32.mrf.mxu0
        %v639 = vadd.f32 0.0, %v638
        %640 = vmatmul.f32.gmra.mxu0 %v594
        %v641 = vpop.f32.mrf.mxu0
        %v642 = vadd.f32 0.0, %v641
        %643 = vmatmul.f32.gmra.mxu0 %v595
        %v644 = vpop.f32.mrf.mxu0
        %v645 = vadd.f32 0.0, %v644
        %646 = vmatmul.f32.gmra.mxu0 %v596
        %v647 = vpop.f32.mrf.mxu0
        %v648 = vadd.f32 0.0, %v647
        %649 = vmatmul.f32.gmra.mxu0 %v597
        %v650 = vpop.f32.mrf.mxu0
        %v651 = vadd.f32 0.0, %v650
        %652 = vmatmul.f32.gmra.mxu0 %v598
        %v653 = vpop.f32.mrf.mxu0
        %v654 = vadd.f32 0.0, %v653
        %655 = vmatmul.f32.gmra.mxu0 %v599
        %v656 = vpop.f32.mrf.mxu0
        %v657 = vadd.f32 0.0, %v656
        %658 = vmatmul.f32.gmra.mxu0 %v600
        %v659 = vpop.f32.mrf.mxu0
        %v660 = vadd.f32 0.0, %v659
        %661 = vmatmul.f32.gmra.mxu0 %v601
        %v662 = vpop.f32.mrf.mxu0
        %v663 = vadd.f32 0.0, %v662
        %664 = vmatmul.f32.gmra.mxu0 %v602
        %v665 = vpop.f32.mrf.mxu0
        %v666 = vadd.f32 0.0, %v665
        %667 = vdwg.mxu0
        %668 = vmatpush.xpose.msra.mxu0 %v602
        %669 = vmatpush.xpose.msra.mxu0 %v601
        %670 = vmatpush.xpose.msra.mxu0 %v600
        %671 = vmatpush.xpose.msra.mxu0 %v599
        %672 = vmatpush.xpose.msra.mxu0 %v598
        %673 = vmatpush.xpose.msra.mxu0 %v597
        %674 = vmatpush.xpose.msra.mxu0 %v596
        %675 = vmatpush.xpose.msra.mxu0 %v595
        %676 = vmatpush.xpose.msra.mxu0 %v594
        %677 = vmatpush.xpose.msra.mxu0 %v593
        %678 = vmatpush.xpose.msra.mxu0 %v592
        %679 = vmatpush.xpose.msra.mxu0 %v591
        %680 = vmatpush.xpose.msra.mxu0 %v590
        %681 = vmatpush.xpose.msra.mxu0 %v589
        %682 = vmatpush.xpose.msra.mxu0 %v588
        %683 = vmatpush.xpose.msra.mxu0 %v587
        %684 = vmatmul.f32.gmra.mxu0 %v621
        %v685 = vpop.f32.mrf.mxu0
        %v686 = vadd.f32 0.0, %v685
        %687 = vmatmul.f32.gmra.mxu0 %v624
        %v688 = vpop.f32.mrf.mxu0
        %v689 = vadd.f32 0.0, %v688
        %690 = vmatmul.f32.gmra.mxu0 %v627
        %v691 = vpop.f32.mrf.mxu0
        %v692 = vadd.f32 0.0, %v691
        %693 = vmatmul.f32.gmra.mxu0 %v630
        %v694 = vpop.f32.mrf.mxu0
        %v695 = vadd.f32 0.0, %v694
        %696 = vmatmul.f32.gmra.mxu0 %v633
        %v697 = vpop.f32.mrf.mxu0
        %v698 = vadd.f32 0.0, %v697
        %699 = vmatmul.f32.gmra.mxu0 %v636
        %v700 = vpop.f32.mrf.mxu0
        %v701 = vadd.f32 0.0, %v700
        %702 = vmatmul.f32.gmra.mxu0 %v639
        %v703 = vpop.f32.mrf.mxu0
        %v704 = vadd.f32 0.0, %v703
        %705 = vmatmul.f32.gmra.mxu0 %v642
        %v706 = vpop.f32.mrf.mxu0
        %v707 = vadd.f32 0.0, %v706
        %708 = vmatmul.f32.gmra.mxu0 %v645
        %v709 = vpop.f32.mrf.mxu0
        %v710 = vadd.f32 0.0, %v709
        %711 = vmatmul.f32.gmra.mxu0 %v648
        %v712 = vpop.f32.mrf.mxu0
        %v713 = vadd.f32 0.0, %v712
        %714 = vmatmul.f32.gmra.mxu0 %v651
        %v715 = vpop.f32.mrf.mxu0
        %v716 = vadd.f32 0.0, %v715
        %717 = vmatmul.f32.gmra.mxu0 %v654
        %v718 = vpop.f32.mrf.mxu0
        %v719 = vadd.f32 0.0, %v718
        %720 = vmatmul.f32.gmra.mxu0 %v657
        %v721 = vpop.f32.mrf.mxu0
        %v722 = vadd.f32 0.0, %v721
        %723 = vmatmul.f32.gmra.mxu0 %v660
        %v724 = vpop.f32.mrf.mxu0
        %v725 = vadd.f32 0.0, %v724
        %726 = vmatmul.f32.gmra.mxu0 %v663
        %v727 = vpop.f32.mrf.mxu0
        %v728 = vadd.f32 0.0, %v727
        %729 = vmatmul.f32.gmra.mxu0 %v666
        %v730 = vpop.f32.mrf.mxu0
        %v731 = vadd.f32 0.0, %v730
        %732 = vdwg.mxu0
        %v733 = vsel %vm501, 0.0, %v686
        %v734 = vsel %vm502, 0.0, %v689
        %v735 = vsel %vm503, 0.0, %v692
        %v736 = vsel %vm504, 0.0, %v695
        %v737 = vsel %vm505, 0.0, %v698
        %v738 = vsel %vm506, 0.0, %v701
        %v739 = vsel %vm507, 0.0, %v704
        %v740 = vsel %vm508, 0.0, %v707
        %v741 = vsel %vm509, 0.0, %v710
        %v742 = vsel %vm510, 0.0, %v713
        %v743 = vsel %vm511, 0.0, %v716
        %v744 = vsel %vm512, 0.0, %v719
        %v745 = vsel %vm513, 0.0, %v722
        %v746 = vsel %vm514, 0.0, %v725
        %v747 = vsel %vm515, 0.0, %v728
        %v748 = vsel %vm516, 0.0, %v731
        %749 = vst [vmem:[%s282] sm:$0xff] %v733
        %750 = vst [vmem:[%s282 + $0x8] sm:$0xff] %v734
        %751 = vst [vmem:[%s282 + $0x10] sm:$0xff] %v735
        %752 = vst [vmem:[%s282 + $0x18] sm:$0xff] %v736
        %753 = vst [vmem:[%s282 + $0x20] sm:$0xff] %v737
        %754 = vst [vmem:[%s282 + $0x28] sm:$0xff] %v738
        %755 = vst [vmem:[%s282 + $0x30] sm:$0xff] %v739
        %756 = vst [vmem:[%s282 + $0x38] sm:$0xff] %v740
        %757 = vst [vmem:[%s282 + $0x40] sm:$0xff] %v741
        %758 = vst [vmem:[%s282 + $0x48] sm:$0xff] %v742
        %759 = vst [vmem:[%s282 + $0x50] sm:$0xff] %v743
        %760 = vst [vmem:[%s282 + $0x58] sm:$0xff] %v744
        %761 = vst [vmem:[%s282 + $0x60] sm:$0xff] %v745
        %762 = vst [vmem:[%s282 + $0x68] sm:$0xff] %v746
        %763 = vst [vmem:[%s282 + $0x70] sm:$0xff] %v747
        %764 = vst [vmem:[%s282 + $0x78] sm:$0xff] %v748
        %v765 = vld [vmem:[%s272] sm:$0xff]
        %v766 = vld [vmem:[%s272 + $0x8] sm:$0xff]
        %v767 = vld [vmem:[%s272 + $0x10] sm:$0xff]
        %v768 = vld [vmem:[%s272 + $0x18] sm:$0xff]
        %v769 = vld [vmem:[%s272 + $0x20] sm:$0xff]
        %v770 = vld [vmem:[%s272 + $0x28] sm:$0xff]
        %v771 = vld [vmem:[%s272 + $0x30] sm:$0xff]
        %v772 = vld [vmem:[%s272 + $0x38] sm:$0xff]
        %v773 = vld [vmem:[%s272 + $0x40] sm:$0xff]
        %v774 = vld [vmem:[%s272 + $0x48] sm:$0xff]
        %v775 = vld [vmem:[%s272 + $0x50] sm:$0xff]
        %v776 = vld [vmem:[%s272 + $0x58] sm:$0xff]
        %v777 = vld [vmem:[%s272 + $0x60] sm:$0xff]
        %v778 = vld [vmem:[%s272 + $0x68] sm:$0xff]
        %v779 = vld [vmem:[%s272 + $0x70] sm:$0xff]
        %v780 = vld [vmem:[%s272 + $0x78] sm:$0xff]
        %781 = vmatpush.msra.mxu0 %v780
        %782 = vmatpush.msra.mxu0 %v779
        %783 = vmatpush.msra.mxu0 %v778
        %784 = vmatpush.msra.mxu0 %v777
        %785 = vmatpush.msra.mxu0 %v776
        %786 = vmatpush.msra.mxu0 %v775
        %787 = vmatpush.msra.mxu0 %v774
        %788 = vmatpush.msra.mxu0 %v773
        %789 = vmatpush.msra.mxu0 %v772
        %790 = vmatpush.msra.mxu0 %v771
        %791 = vmatpush.msra.mxu0 %v770
        %792 = vmatpush.msra.mxu0 %v769
        %793 = vmatpush.msra.mxu0 %v768
        %794 = vmatpush.msra.mxu0 %v767
        %795 = vmatpush.msra.mxu0 %v766
        %796 = vmatpush.msra.mxu0 %v765
        %797 = vmatmul.f32.gmra.mxu0 %v336
        %v798 = vpop.f32.mrf.mxu0
        %v799 = vadd.f32 0.0, %v798
        %800 = vmatmul.f32.gmra.mxu0 %v337
        %v801 = vpop.f32.mrf.mxu0
        %v802 = vadd.f32 0.0, %v801
        %803 = vmatmul.f32.gmra.mxu0 %v338
        %v804 = vpop.f32.mrf.mxu0
        %v805 = vadd.f32 0.0, %v804
        %806 = vmatmul.f32.gmra.mxu0 %v339
        %v807 = vpop.f32.mrf.mxu0
        %v808 = vadd.f32 0.0, %v807
        %809 = vmatmul.f32.gmra.mxu0 %v340
        %v810 = vpop.f32.mrf.mxu0
        %v811 = vadd.f32 0.0, %v810
        %812 = vmatmul.f32.gmra.mxu0 %v341
        %v813 = vpop.f32.mrf.mxu0
        %v814 = vadd.f32 0.0, %v813
        %815 = vmatmul.f32.gmra.mxu0 %v342
        %v816 = vpop.f32.mrf.mxu0
        %v817 = vadd.f32 0.0, %v816
        %818 = vmatmul.f32.gmra.mxu0 %v343
        %v819 = vpop.f32.mrf.mxu0
        %v820 = vadd.f32 0.0, %v819
        %821 = vmatmul.f32.gmra.mxu0 %v344
        %v822 = vpop.f32.mrf.mxu0
        %v823 = vadd.f32 0.0, %v822
        %824 = vmatmul.f32.gmra.mxu0 %v345
        %v825 = vpop.f32.mrf.mxu0
        %v826 = vadd.f32 0.0, %v825
        %827 = vmatmul.f32.gmra.mxu0 %v346
        %v828 = vpop.f32.mrf.mxu0
        %v829 = vadd.f32 0.0, %v828
        %830 = vmatmul.f32.gmra.mxu0 %v347
        %v831 = vpop.f32.mrf.mxu0
        %v832 = vadd.f32 0.0, %v831
        %833 = vmatmul.f32.gmra.mxu0 %v348
        %v834 = vpop.f32.mrf.mxu0
        %v835 = vadd.f32 0.0, %v834
        %836 = vmatmul.f32.gmra.mxu0 %v349
        %v837 = vpop.f32.mrf.mxu0
        %v838 = vadd.f32 0.0, %v837
        %839 = vmatmul.f32.gmra.mxu0 %v350
        %v840 = vpop.f32.mrf.mxu0
        %v841 = vadd.f32 0.0, %v840
        %842 = vmatmul.f32.gmra.mxu0 %v351
        %v843 = vpop.f32.mrf.mxu0
        %v844 = vadd.f32 0.0, %v843
        %845 = vdwg.mxu0
        %vm846 = vcmask 261120
        %847 = vst.msk [vmem:[%s287] sm:$0xff] %vm846, %v799
        %848 = vst.msk [vmem:[%s287 + $0x8] sm:$0xff] %vm846, %v802
        %849 = vst.msk [vmem:[%s287 + $0x10] sm:$0xff] %vm846, %v805
        %850 = vst.msk [vmem:[%s287 + $0x18] sm:$0xff] %vm846, %v808
        %851 = vst.msk [vmem:[%s287 + $0x20] sm:$0xff] %vm846, %v811
        %852 = vst.msk [vmem:[%s287 + $0x28] sm:$0xff] %vm846, %v814
        %853 = vst.msk [vmem:[%s287 + $0x30] sm:$0xff] %vm846, %v817
        %854 = vst.msk [vmem:[%s287 + $0x38] sm:$0xff] %vm846, %v820
        %855 = vst.msk [vmem:[%s287 + $0x40] sm:$0xff] %vm846, %v823
        %856 = vst.msk [vmem:[%s287 + $0x48] sm:$0xff] %vm846, %v826
        %857 = vst.msk [vmem:[%s287 + $0x50] sm:$0xff] %vm846, %v829
        %858 = vst.msk [vmem:[%s287 + $0x58] sm:$0xff] %vm846, %v832
        %859 = vst.msk [vmem:[%s287 + $0x60] sm:$0xff] %vm846, %v835
        %860 = vst.msk [vmem:[%s287 + $0x68] sm:$0xff] %vm846, %v838
        %861 = vst.msk [vmem:[%s287 + $0x70] sm:$0xff] %vm846, %v841
        %862 = vst.msk [vmem:[%s287 + $0x78] sm:$0xff] %vm846, %v844
        %s863 = sand.u32 %s106, 1
        %s864 = scalar_lea.sflag [#allocation3], %s863
        %s865 = sand.u32 %s106, 1
        %s866 = smul.addr %s865, 128
        %s867 = scalar_lea.vmem [#allocation2], %s866
        %p868 = scmp.lt.s32.totalorder %s20, 1
        %s869 = scalar_select %p868, %s20, 1
        %s870 = smul.addr %s869, 16
        %s871 = smul.addr %s870, 8
        %s872 = scalar_lea.vmem %s4, %s871
        %p873 = scmp.lt.s32.totalorder %s20, 1
        %s874 = scalar_select %p873, %s20, 1
        %s875 = smul.addr %s874, 16
        %s876 = smul.addr %s875, 8
        %s877 = scalar_lea.vmem %s5, %s876
        // Predicated region
        $region33: #{net_forward.7} parent=31 // pred_check
          %p878 = pneg %p116
        $region34: #{net_forward.7} parent=31 // pred_check_branch
          %880 = sbr.rel (%p878) target = $region36
        $region35: #{net_forward.7} parent=31 // pred_region
          %882 = vsyncadd %s864, 0
          %s883 = smul.addr %s20, 16
          %s884 = smul.addr %s883, 8
          %s885 = scalar_lea.hbm %s3, %s884
          %s886 = sshll.u32 %s867, 4
          %s887 = int_to_ptr.vmem [resolvable:$true] %s886
          %s888 = sshll.u32 %s885, 4
          %s889 = int_to_ptr.hbm [resolvable:$true] %s888
          %894 = dma.vmem_to_hbm [thread:$0]  %s887, 2048, %s889, %s864, 128, 128, 8
        $region36: #{net_forward.7} parent=31 // pred_fallthru
          _
        // Predicated region
        $region37: #{net_forward.7} parent=31 // pred_check
          %p895 = pneg %p142
        $region38: #{net_forward.7} parent=31 // pred_check_branch
          %897 = sbr.rel (%p895) target = $region40
        $region39: #{net_forward.7} parent=31 // pred_region
          _
        $region40: #{net_forward.7} parent=31 // pred_fallthru
          _
        // Predicated region
        $region41: #{net_forward.7} parent=31 // pred_check
          %p898 = pneg %p168
        $region42: #{net_forward.7} parent=31 // pred_check_branch
          %900 = sbr.rel (%p898) target = $region44
        $region43: #{net_forward.7} parent=31 // pred_region
          _
        $region44: #{net_forward.7} parent=31 // pred_fallthru
          _
      $region32: #{net_forward.7} parent=5 // pred_fallthru
        _
      %p901 = scmp.le.s32.totalorder 2, %s15
      // Predicated region
      $region45: #{net_forward.7} parent=5 // pred_check
        %p902 = pneg %p901
      $region46: #{net_forward.7} parent=5 // pred_check_branch
        %904 = sbr.rel (%p902) target = $region48
      $region47: #{net_forward.7} parent=5 // pred_region
        %s905 = ssub.s32 %s15, 2
        // Predicated region
        $region49: #{net_forward.7} parent=47 // pred_check
          %p906 = pneg %p122
        $region50: #{net_forward.7} parent=47 // pred_check_branch
          %908 = sbr.rel (%p906) target = $region52
        $region51: #{net_forward.7} parent=47 // pred_region
          %s909 = sand.u32 %s107, 1
          %s910 = scalar_lea.sflag [#allocation3], %s909
          %s911 = sand.u32 %s107, 1
          %s912 = smul.addr %s911, 128
          %s913 = scalar_lea.vmem [#allocation2], %s912
          %915 = dma.done %s910, 2048
        $region52: #{net_forward.7} parent=47 // pred_fallthru
          _
        // Predicated region
        $region53: #{net_forward.7} parent=47 // pred_check
          %p916 = pneg %p148
        $region54: #{net_forward.7} parent=47 // pred_check_branch
          %918 = sbr.rel (%p916) target = $region56
        $region55: #{net_forward.7} parent=47 // pred_region
          %p919 = scmp.lt.s32.totalorder %s21, 1
          %s920 = scalar_select %p919, %s21, 1
          %s921 = smul.addr %s920, 16
          %s922 = smul.addr %s921, 8
          %s923 = scalar_lea.vmem %s4, %s922
        $region56: #{net_forward.7} parent=47 // pred_fallthru
          _
        // Predicated region
        $region57: #{net_forward.7} parent=47 // pred_check
          %p924 = pneg %p174
        $region58: #{net_forward.7} parent=47 // pred_check_branch
          %926 = sbr.rel (%p924) target = $region60
        $region59: #{net_forward.7} parent=47 // pred_region
          %p927 = scmp.lt.s32.totalorder %s21, 1
          %s928 = scalar_select %p927, %s21, 1
          %s929 = smul.addr %s928, 16
          %s930 = smul.addr %s929, 8
          %s931 = scalar_lea.vmem %s5, %s930
        $region60: #{net_forward.7} parent=47 // pred_fallthru
          _
      $region48: #{net_forward.7} parent=5 // pred_fallthru
        _
    $region6: #{net_forward.7} parent=1 // loop_footer
      %s19 = sadd.s32 1, %s15
    $region7: #{net_forward.7} parent=1 // loop_footer_branch
      %14 = sbr.rel target = $region3
    $region8: #{net_forward.7} parent=1 // loop_exit
      _
    %932 = vsyncpa [#allocation3], 1
    %s933 = scalar_lea.sflag [#allocation3], 1
    %934 = vsyncpa %s933, 1

</llo_original>
